<compile_context>
chip_gen: v6e
topology: v6e:2x2x1
jax: 0.10.0
libtpu: 0.0.40
codegen_flags: <defaults>
</compile_context>

<pallas_src>
import functools

import jax
import jax.numpy as jnp
from jax import lax
from jax.experimental import pallas as pl
from jax.experimental.pallas import tpu as pltpu

LANES = 128


def _residual_block_kernel(xp_hbm, w1_ref, t1_ref, w2_ref, t2_ref,
                           out_ref, xs_ref, xpad_ref, ypad_ref, dma_sem):
    """One (batch element, H-strip) tile per grid step.

    xp_hbm  : (N, H+4, W+2, Cp)  pre-padded input, raw HBM ref (pl.ANY);
              strips are DMA'd manually because consecutive strips overlap by
              the 4-row conv halo.
    w*_ref  : (9*Cp, Cp)  im2col-reshaped conv weights with eval-mode BN scale
              folded in, stored in the MXU compute dtype (bf16 / f32).
    t*_ref  : (1, Cp) f32  folded shift = beta + (conv_bias - mean) * scale.
    out_ref : (TILE_H, W, Cp)  lane-dense output block.
    xs_ref  : (TILE_H+4, W+2, Cp)  input-dtype strip (residual + conv1 source).
    xpad_ref: (TILE_H+4, W+2, Cp)  compute-dtype copy of xs (conv1 im2col src).
    ypad_ref: (TILE_H+2, W+2, Cp)  compute-dtype intermediate (conv2 im2col src).
    """
    n = pl.program_id(0)
    s = pl.program_id(1)

    tile_h, W, Cp = out_ref.shape
    hs = tile_h + 4                        # strip rows incl. 2-row halo per side
    h_total = pl.num_programs(1) * tile_h  # full image height
    mm = w1_ref.dtype                      # MXU input dtype (bf16 fast / f32)
    f32 = jnp.float32

    # ---- fetch the strip (+halo) from HBM ------------------------------------
    cp = pltpu.make_async_copy(
        xp_hbm.at[n, pl.ds(s * tile_h, hs), :, :], xs_ref, dma_sem.at[0])
    cp.start()
    cp.wait()

    # Halo rows/cols arrive pre-zeroed from the wrapper pad -> no in-kernel ring
    # zeroing for the conv1 source.  One full-tensor cast to the compute dtype.
    xpad_ref[...] = xs_ref[...].astype(mm)

    dn = (((2,), (0,)), ((), ()))  # contract im2col feature dim with weight rows

    def conv3x3(src_ref, rows, wmat_ref):
        # SAME 3x3 conv as a single im2col matmul:
        #   patch (rows, W, 9*Cp)  x  weight (9*Cp, Cp)  -> (rows, W, Cp) f32.
        taps = [src_ref[ky:ky + rows, kx:kx + W, :]
                for ky in range(3) for kx in range(3)]
        patch = jnp.concatenate(taps, axis=-1)
        return lax.dot_general(patch, wmat_ref[...], dn,
                               preferred_element_type=f32)

    # ---- conv1 + folded(bias, BN) + ReLU over the strip plus 1-row halo ------
    y = jnp.maximum(conv3x3(xpad_ref, tile_h + 2, w1_ref) + t1_ref[0, :], 0.0)

    # Rows of the intermediate that fall outside the image are conv2's zero pad.
    row_img = s * tile_h - 1 + lax.broadcasted_iota(jnp.int32, y.shape, 0)
    y = jnp.where((row_img >= 0) & (row_img < h_total), y, 0.0)

    # ---- stage y (with zero column halo) for conv2 ---------------------------
    zcol = jnp.zeros((tile_h + 2, 1, Cp), mm)
    ypad_ref[:, 0:1, :] = zcol
    ypad_ref[:, W + 1:W + 2, :] = zcol
    ypad_ref[:, 1:W + 1, :] = y.astype(mm)

    # ---- conv2 + folded(bias, BN), residual add, final ReLU ------------------
    z = conv3x3(ypad_ref, tile_h, w2_ref) + t2_ref[0, :]
    x_res = xs_ref[2:2 + tile_h, 1:1 + W, :].astype(f32)
    out_ref[...] = jnp.maximum(x_res + z, 0.0).astype(out_ref.dtype)


def residual_block_nhwc(x_nhwc, folded_params, tile_h=8):
    """x_nhwc: (N, H, W, C) f32.  folded_params = fold_params(raw)."""
    N, H, W, C = x_nhwc.shape
    w1m, t1, w2m, t2 = folded_params
    Cp = t1.shape[-1]
    assert H % tile_h == 0 and tile_h % 8 == 0, \
        "tile_h must be a multiple of 8 dividing H"
    S = H // tile_h
    compute_dtype = w1m.dtype

    # One wrapper-side pad builds the SAME-conv halo and the lane padding:
    # 2 zero rows top/bottom, 1 zero col left/right, channels -> Cp (x128 lanes).
    xp = jnp.pad(x_nhwc, ((0, 0), (2, 2), (1, 1), (0, Cp - C)))

    out_padded = pl.pallas_call(
        _residual_block_kernel,
        out_shape=jax.ShapeDtypeStruct((N, H, W, Cp), x_nhwc.dtype),
        grid_spec=pltpu.PrefetchScalarGridSpec(
            num_scalar_prefetch=0,
            grid=(N, S),
            in_specs=[
                pl.BlockSpec(memory_space=pl.ANY),                 # x (HBM, manual DMA)
                pl.BlockSpec((9 * Cp, Cp), lambda n, s: (0, 0)),   # w1 (im2col, BN-folded)
                pl.BlockSpec((1, Cp), lambda n, s: (0, 0)),        # t1
                pl.BlockSpec((9 * Cp, Cp), lambda n, s: (0, 0)),   # w2
                pl.BlockSpec((1, Cp), lambda n, s: (0, 0)),        # t2
            ],
            out_specs=pl.BlockSpec((None, tile_h, W, Cp),
                                   lambda n, s: (n, s, 0, 0)),
            scratch_shapes=[
                pltpu.VMEM((tile_h + 4, W + 2, Cp), x_nhwc.dtype),    # xs (residual)
                pltpu.VMEM((tile_h + 4, W + 2, Cp), compute_dtype),   # xpad (conv1 src)
                pltpu.VMEM((tile_h + 2, W + 2, Cp), compute_dtype),   # ypad (conv2 src)
                pltpu.SemaphoreType.DMA((1,)),
            ],
        ),
        compiler_params=pltpu.CompilerParams(
            dimension_semantics=("parallel", "arbitrary"),
            vmem_limit_bytes=32 * 1024 * 1024),
    )(xp, w1m, t1, w2m, t2)

    return out_padded[..., :C]


@functools.partial(jax.jit, static_argnames=("tile_h",))
def residual_block_nchw(x_nchw, folded_params, tile_h=8):
    """PyTorch-style NCHW entry point.

    Callers that can produce/consume NHWC should call residual_block_nhwc
    directly and skip these two full-tensor HBM transposes.
    """
    x_nhwc = jnp.transpose(x_nchw, (0, 2, 3, 1))
    y_nhwc = residual_block_nhwc(x_nhwc, folded_params, tile_h=tile_h)
    return jnp.transpose(y_nhwc, (0, 3, 1, 2))


# ------------------------- parameter construction -------------------------

def make_raw_params(key, channels):
    """Synthetic (conv weight/bias + BN gamma/beta/running stats) per conv."""
    C = channels
    ks = jax.random.split(key, 12)

    def conv_bn(kw, kb, kg, kbe, km, kv):
        fan_in = C * 9
        w = jax.random.normal(kw, (3, 3, C, C), jnp.float32) / jnp.sqrt(
            jnp.float32(fan_in))                                  # HWIO
        b = 0.1 * jax.random.normal(kb, (C,), jnp.float32)
        gamma = 1.0 + 0.1 * jax.random.normal(kg, (C,), jnp.float32)
        beta = 0.1 * jax.random.normal(kbe, (C,), jnp.float32)
        mean = 0.1 * jax.random.normal(km, (C,), jnp.float32)
        var = 1.0 + 0.1 * jax.random.uniform(kv, (C,), jnp.float32)
        return (w, b, gamma, beta, mean, var)

    return (conv_bn(*ks[0:6]), conv_bn(*ks[6:12]))


def fold_params(raw_params, compute_dtype=jnp.bfloat16, eps=1e-5, lane_pad=LANES):
    """Fold eval-mode BN + conv bias and pre-shape weights for the kernel.

    w' = reshape(pad_C(w * scale), (9*Cp, Cp)) in compute_dtype  (im2col layout)
    t' = pad_C(beta + (b - mean) * scale)      as (1, Cp) f32
    Padded channel rows/cols/entries are zero so padded lanes stay exactly zero
    through conv1 -> ReLU -> conv2 -> residual add (relu(0 + 0) = 0).
    """
    def fold_one(p):
        w, b, gamma, beta, mean, var = p          # w: (3,3,C,C) HWIO
        C = w.shape[-1]
        Cp = ((C + lane_pad - 1) // lane_pad) * lane_pad
        scale = gamma / jnp.sqrt(var + eps)
        w_f = w * scale[None, None, None, :]
        t = beta + (b - mean) * scale
        w_p = jnp.pad(w_f, ((0, 0), (0, 0), (0, Cp - C), (0, Cp - C)))
        t_p = jnp.pad(t, ((0, Cp - C),))
        return (w_p.reshape(9 * Cp, Cp).astype(compute_dtype),
                t_p.astype(jnp.float32)[None, :])

    w1m, t1 = fold_one(raw_params[0])
    w2m, t2 = fold_one(raw_params[1])
    return (w1m, t1, w2m, t2)


# ------------------------------ reference ---------------------------------

def reference_nchw(x_nchw, raw_params, eps=1e-5):
    """Pure-JAX (XLA) f32 reference matching the PyTorch module (eval-mode BN)."""
    x = jnp.transpose(x_nchw, (0, 2, 3, 1))
    (w1, b1, g1, be1, m1, v1), (w2, b2, g2, be2, m2, v2) = raw_params

    def conv(a, w):
        return lax.conv_general_dilated(
            a, w, window_strides=(1, 1), padding="SAME",
            dimension_numbers=("NHWC", "HWIO", "NHWC"))

    def bn(a, g, be, m, v):
        return (a - m) / jnp.sqrt(v + eps) * g + be

    y = jnp.maximum(bn(conv(x, w1) + b1, g1, be1, m1, v1), 0.0)
    z = bn(conv(y, w2) + b2, g2, be2, m2, v2)
    out = jnp.maximum(x + z, 0.0)
    return jnp.transpose(out, (0, 3, 1, 2))


if __name__ == "__main__":
    N, C, H, W = 2, 4, 16, 16  # PyTorch NCHW convention
    key = jax.random.PRNGKey(0)
    kx, kp = jax.random.split(key)

    x_nchw = jax.random.normal(kx, (N, C, H, W), jnp.float32)
    raw = make_raw_params(kp, C)
    ref = reference_nchw(x_nchw, raw)

    # f32 compute path, two H-strips: exact semantics + strip/halo correctness.
    out_f32 = residual_block_nchw(x_nchw, fold_params(raw, jnp.float32), tile_h=8)
    out_f32 = jax.block_until_ready(out_f32)
    assert out_f32.shape == (N, C, H, W)
    assert jnp.allclose(out_f32, ref, rtol=1e-4, atol=1e-4), "f32 mismatch vs reference"

    # bf16 MXU fast path (production default), single full-height strip.
    out_bf16 = residual_block_nchw(x_nchw, fold_params(raw, jnp.bfloat16), tile_h=16)
    out_bf16 = jax.block_until_ready(out_bf16)
    assert jnp.allclose(out_bf16, ref, rtol=5e-2, atol=5e-2), "bf16 mismatch vs reference"

    print("KERNEL_OK")
</pallas_src>

<mosaic_0001>
module attributes {stable_mosaic.version = 11 : i64} {
  func.func @_residual_block_kernel(%arg0: i32, %arg1: i32, %arg2: memref<2x20x18x128xf32, #tpu.memory_space<any>>, %arg3: memref<1152x128xf32, #tpu.memory_space<vmem>>, %arg4: memref<1x128xf32, #tpu.memory_space<vmem>>, %arg5: memref<1152x128xf32, #tpu.memory_space<vmem>>, %arg6: memref<1x128xf32, #tpu.memory_space<vmem>>, %arg7: memref<1x8x16x128xf32, #tpu.memory_space<vmem>>, %arg8: memref<12x18x128xf32, #tpu.memory_space<vmem>>, %arg9: memref<12x18x128xf32, #tpu.memory_space<vmem>>, %arg10: memref<10x18x128xf32, #tpu.memory_space<vmem>>, %arg11: memref<1x!tpu.dma_semaphore, #tpu.memory_space<semaphore_mem>>) attributes {dimension_semantics = [#tpu.dimension_semantics<parallel>, #tpu.dimension_semantics<arbitrary>], iteration_bounds = array<i64: 2, 2>, scalar_prefetch = 0 : i64, scratch_operands = 4 : i64, tpu.core_type = #tpu.core_type<tc>, window_params = [{}, {pipeline_mode = #tpu.pipeline_mode<synchronous>, transform_indices = @transform_1, window_bounds = array<i64: 1152, 128>}, {pipeline_mode = #tpu.pipeline_mode<synchronous>, transform_indices = @transform_2, window_bounds = array<i64: 1, 128>}, {pipeline_mode = #tpu.pipeline_mode<synchronous>, transform_indices = @transform_3, window_bounds = array<i64: 1152, 128>}, {pipeline_mode = #tpu.pipeline_mode<synchronous>, transform_indices = @transform_4, window_bounds = array<i64: 1, 128>}, {transform_indices = @transform_5, window_bounds = array<i64: 1, 8, 16, 128>}]} {
    %c8_i32 = arith.constant 8 : i32
    %0 = arith.muli %arg1, %c8_i32 : i32
    %c0_i32 = arith.constant 0 : i32
    %c0_i32_0 = arith.constant 0 : i32
    %c0_i32_1 = arith.constant 0 : i32
    %1 = tpu.memref_slice %arg2[%arg0, %0, %c0_i32_0, %c0_i32_1] : memref<2x20x18x128xf32, #tpu.memory_space<any>> -> memref<1x12x18x128xf32, #tpu.memory_space<any>>
    %2 = tpu.memref_squeeze %1 : memref<1x12x18x128xf32, #tpu.memory_space<any>> -> memref<12x18x128xf32, #tpu.memory_space<any>>
    %3 = tpu.memref_slice %arg11[%c0_i32] : memref<1x!tpu.dma_semaphore, #tpu.memory_space<semaphore_mem>> -> memref<1x!tpu.dma_semaphore, #tpu.memory_space<semaphore_mem>>
    %4 = tpu.memref_squeeze %3 : memref<1x!tpu.dma_semaphore, #tpu.memory_space<semaphore_mem>> -> memref<!tpu.dma_semaphore, #tpu.memory_space<semaphore_mem>>
    tpu.enqueue_dma source(%2 : memref<12x18x128xf32, #tpu.memory_space<any>>) target(%arg8 : memref<12x18x128xf32, #tpu.memory_space<vmem>>) target_semaphore(%4 : memref<!tpu.dma_semaphore, #tpu.memory_space<semaphore_mem>>)
    %c0_i32_2 = arith.constant 0 : i32
    %c0_i32_3 = arith.constant 0 : i32
    %c0_i32_4 = arith.constant 0 : i32
    %5 = tpu.memref_slice %arg2[%arg0, %0, %c0_i32_3, %c0_i32_4] : memref<2x20x18x128xf32, #tpu.memory_space<any>> -> memref<1x12x18x128xf32, #tpu.memory_space<any>>
    %6 = tpu.memref_squeeze %5 : memref<1x12x18x128xf32, #tpu.memory_space<any>> -> memref<12x18x128xf32, #tpu.memory_space<any>>
    %7 = tpu.memref_slice %arg11[%c0_i32_2] : memref<1x!tpu.dma_semaphore, #tpu.memory_space<semaphore_mem>> -> memref<1x!tpu.dma_semaphore, #tpu.memory_space<semaphore_mem>>
    %8 = tpu.memref_squeeze %7 : memref<1x!tpu.dma_semaphore, #tpu.memory_space<semaphore_mem>> -> memref<!tpu.dma_semaphore, #tpu.memory_space<semaphore_mem>>
    tpu.wait_dma2 semaphore(%8 : memref<!tpu.dma_semaphore, #tpu.memory_space<semaphore_mem>>) src(%6 : memref<12x18x128xf32, #tpu.memory_space<any>>) dst(%arg8 : memref<12x18x128xf32, #tpu.memory_space<vmem>>)
    %c0 = arith.constant 0 : index
    %c0_5 = arith.constant 0 : index
    %c0_6 = arith.constant 0 : index
    %9 = vector.load %arg8[%c0, %c0_5, %c0_6] : memref<12x18x128xf32, #tpu.memory_space<vmem>>, vector<12x18x128xf32>
    %c0_7 = arith.constant 0 : index
    %c0_8 = arith.constant 0 : index
    %c0_9 = arith.constant 0 : index
    %10 = vector.load %arg9[%c0_7, %c0_8, %c0_9] : memref<12x18x128xf32, #tpu.memory_space<vmem>>, vector<12x18x128xf32>
    tpu.vector_store %arg9[%c0_7, %c0_8, %c0_9], %9 {strides = array<i32>} : memref<12x18x128xf32, #tpu.memory_space<vmem>>, vector<12x18x128xf32>,
    %c0_10 = arith.constant 0 : index
    %c0_11 = arith.constant 0 : index
    %c0_12 = arith.constant 0 : index
    %11 = vector.load %arg9[%c0_10, %c0_11, %c0_12] : memref<12x18x128xf32, #tpu.memory_space<vmem>>, vector<10x16x128xf32>
    %c0_13 = arith.constant 0 : index
    %c1 = arith.constant 1 : index
    %c0_14 = arith.constant 0 : index
    %12 = vector.load %arg9[%c0_13, %c1, %c0_14] : memref<12x18x128xf32, #tpu.memory_space<vmem>>, vector<10x16x128xf32>
    %c0_15 = arith.constant 0 : index
    %c2 = arith.constant 2 : index
    %c0_16 = arith.constant 0 : index
    %13 = vector.load %arg9[%c0_15, %c2, %c0_16] : memref<12x18x128xf32, #tpu.memory_space<vmem>>, vector<10x16x128xf32>
    %c1_17 = arith.constant 1 : index
    %c0_18 = arith.constant 0 : index
    %c0_19 = arith.constant 0 : index
    %14 = vector.load %arg9[%c1_17, %c0_18, %c0_19] : memref<12x18x128xf32, #tpu.memory_space<vmem>>, vector<10x16x128xf32>
    %c1_20 = arith.constant 1 : index
    %c1_21 = arith.constant 1 : index
    %c0_22 = arith.constant 0 : index
    %15 = vector.load %arg9[%c1_20, %c1_21, %c0_22] : memref<12x18x128xf32, #tpu.memory_space<vmem>>, vector<10x16x128xf32>
    %c1_23 = arith.constant 1 : index
    %c2_24 = arith.constant 2 : index
    %c0_25 = arith.constant 0 : index
    %16 = vector.load %arg9[%c1_23, %c2_24, %c0_25] : memref<12x18x128xf32, #tpu.memory_space<vmem>>, vector<10x16x128xf32>
    %c2_26 = arith.constant 2 : index
    %c0_27 = arith.constant 0 : index
    %c0_28 = arith.constant 0 : index
    %17 = vector.load %arg9[%c2_26, %c0_27, %c0_28] : memref<12x18x128xf32, #tpu.memory_space<vmem>>, vector<10x16x128xf32>
    %c2_29 = arith.constant 2 : index
    %c1_30 = arith.constant 1 : index
    %c0_31 = arith.constant 0 : index
    %18 = vector.load %arg9[%c2_29, %c1_30, %c0_31] : memref<12x18x128xf32, #tpu.memory_space<vmem>>, vector<10x16x128xf32>
    %c2_32 = arith.constant 2 : index
    %c2_33 = arith.constant 2 : index
    %c0_34 = arith.constant 0 : index
    %19 = vector.load %arg9[%c2_32, %c2_33, %c0_34] : memref<12x18x128xf32, #tpu.memory_space<vmem>>, vector<10x16x128xf32>
    %20 = tpu.concatenate %11, %12, %13, %14, %15, %16, %17, %18, %19 in 2 : vector<10x16x128xf32>, vector<10x16x128xf32>, vector<10x16x128xf32>, vector<10x16x128xf32>, vector<10x16x128xf32>, vector<10x16x128xf32>, vector<10x16x128xf32>, vector<10x16x128xf32>, vector<10x16x128xf32> -> vector<10x16x1152xf32>
    %c0_35 = arith.constant 0 : index
    %c0_36 = arith.constant 0 : index
    %21 = vector.load %arg3[%c0_35, %c0_36] : memref<1152x128xf32, #tpu.memory_space<vmem>>, vector<1152x128xf32>
    %cst = arith.constant dense<0.000000e+00> : vector<10x16x128xf32>
    %22 = tpu.matmul %20, %21, %cst {dimension_numbers = #tpu.dot_dimension_numbers<[2], [0], [0, 1], [1], [0, 0, 0, 1, 1, 1], [], []>} : vector<10x16x1152xf32>, vector<1152x128xf32>, vector<10x16x128xf32> -> vector<10x16x128xf32>
    %c0_37 = arith.constant 0 : index
    %c0_38 = arith.constant 0 : index
    %23 = vector.load %arg4[%c0_37, %c0_38] : memref<1x128xf32, #tpu.memory_space<vmem>>, vector<1x128xf32>
    %24 = vector.shape_cast %23 : vector<1x128xf32> to vector<128xf32>
    %25 = vector.shape_cast %24 : vector<128xf32> to vector<1x1x128xf32>
    %26 = vector.broadcast %25 : vector<1x1x128xf32> to vector<10x16x128xf32>
    %27 = arith.addf %22, %26 : vector<10x16x128xf32>
    %cst_39 = arith.constant 0.000000e+00 : f32
    %28 = vector.broadcast %cst_39 : f32 to vector<10x16x128xf32>
    %29 = arith.maximumf %27, %28 : vector<10x16x128xf32>
    %c8_i32_40 = arith.constant 8 : i32
    %30 = arith.muli %arg1, %c8_i32_40 : i32
    %c1_i32 = arith.constant 1 : i32
    %31 = arith.subi %30, %c1_i32 : i32
    %32 = tpu.iota {dimensions = array<i32: 0>} : vector<10x16x128xi32>
    %33 = vector.broadcast %31 : i32 to vector<10x16x128xi32>
    %34 = arith.addi %33, %32 : vector<10x16x128xi32>
    %c0_i32_41 = arith.constant 0 : i32
    %35 = vector.broadcast %c0_i32_41 : i32 to vector<10x16x128xi32>
    %36 = arith.cmpi sge, %34, %35 : vector<10x16x128xi32>
    %c16_i32 = arith.constant 16 : i32
    %37 = vector.broadcast %c16_i32 : i32 to vector<10x16x128xi32>
    %38 = arith.cmpi slt, %34, %37 : vector<10x16x128xi32>
    %39 = arith.andi %36, %38 : vector<10x16x128xi1>
    %cst_42 = arith.constant 0.000000e+00 : f32
    %40 = vector.broadcast %cst_42 : f32 to vector<10x16x128xf32>
    %41 = arith.select %39, %29, %40 : vector<10x16x128xi1>, vector<10x16x128xf32>
    %cst_43 = arith.constant 0.000000e+00 : f32
    %42 = vector.broadcast %cst_43 : f32 to vector<10x1x128xf32>
    %c0_44 = arith.constant 0 : index
    %c0_45 = arith.constant 0 : index
    %c0_46 = arith.constant 0 : index
    %43 = vector.load %arg10[%c0_44, %c0_45, %c0_46] : memref<10x18x128xf32, #tpu.memory_space<vmem>>, vector<10x1x128xf32>
    tpu.vector_store %arg10[%c0_44, %c0_45, %c0_46], %42 {strides = array<i32>} : memref<10x18x128xf32, #tpu.memory_space<vmem>>, vector<10x1x128xf32>,
    %c0_47 = arith.constant 0 : index
    %c17 = arith.constant 17 : index
    %c0_48 = arith.constant 0 : index
    %44 = vector.load %arg10[%c0_47, %c17, %c0_48] : memref<10x18x128xf32, #tpu.memory_space<vmem>>, vector<10x1x128xf32>
    tpu.vector_store %arg10[%c0_47, %c17, %c0_48], %42 {strides = array<i32>} : memref<10x18x128xf32, #tpu.memory_space<vmem>>, vector<10x1x128xf32>,
    %c0_49 = arith.constant 0 : index
    %c1_50 = arith.constant 1 : index
    %c0_51 = arith.constant 0 : index
    %45 = vector.load %arg10[%c0_49, %c1_50, %c0_51] : memref<10x18x128xf32, #tpu.memory_space<vmem>>, vector<10x16x128xf32>
    tpu.vector_store %arg10[%c0_49, %c1_50, %c0_51], %41 {strides = array<i32>} : memref<10x18x128xf32, #tpu.memory_space<vmem>>, vector<10x16x128xf32>,
    %c0_52 = arith.constant 0 : index
    %c0_53 = arith.constant 0 : index
    %c0_54 = arith.constant 0 : index
    %46 = vector.load %arg10[%c0_52, %c0_53, %c0_54] : memref<10x18x128xf32, #tpu.memory_space<vmem>>, vector<8x16x128xf32>
    %c0_55 = arith.constant 0 : index
    %c1_56 = arith.constant 1 : index
    %c0_57 = arith.constant 0 : index
    %47 = vector.load %arg10[%c0_55, %c1_56, %c0_57] : memref<10x18x128xf32, #tpu.memory_space<vmem>>, vector<8x16x128xf32>
    %c0_58 = arith.constant 0 : index
    %c2_59 = arith.constant 2 : index
    %c0_60 = arith.constant 0 : index
    %48 = vector.load %arg10[%c0_58, %c2_59, %c0_60] : memref<10x18x128xf32, #tpu.memory_space<vmem>>, vector<8x16x128xf32>
    %c1_61 = arith.constant 1 : index
    %c0_62 = arith.constant 0 : index
    %c0_63 = arith.constant 0 : index
    %49 = vector.load %arg10[%c1_61, %c0_62, %c0_63] : memref<10x18x128xf32, #tpu.memory_space<vmem>>, vector<8x16x128xf32>
    %c1_64 = arith.constant 1 : index
    %c1_65 = arith.constant 1 : index
    %c0_66 = arith.constant 0 : index
    %50 = vector.load %arg10[%c1_64, %c1_65, %c0_66] : memref<10x18x128xf32, #tpu.memory_space<vmem>>, vector<8x16x128xf32>
    %c1_67 = arith.constant 1 : index
    %c2_68 = arith.constant 2 : index
    %c0_69 = arith.constant 0 : index
    %51 = vector.load %arg10[%c1_67, %c2_68, %c0_69] : memref<10x18x128xf32, #tpu.memory_space<vmem>>, vector<8x16x128xf32>
    %c2_70 = arith.constant 2 : index
    %c0_71 = arith.constant 0 : index
    %c0_72 = arith.constant 0 : index
    %52 = vector.load %arg10[%c2_70, %c0_71, %c0_72] : memref<10x18x128xf32, #tpu.memory_space<vmem>>, vector<8x16x128xf32>
    %c2_73 = arith.constant 2 : index
    %c1_74 = arith.constant 1 : index
    %c0_75 = arith.constant 0 : index
    %53 = vector.load %arg10[%c2_73, %c1_74, %c0_75] : memref<10x18x128xf32, #tpu.memory_space<vmem>>, vector<8x16x128xf32>
    %c2_76 = arith.constant 2 : index
    %c2_77 = arith.constant 2 : index
    %c0_78 = arith.constant 0 : index
    %54 = vector.load %arg10[%c2_76, %c2_77, %c0_78] : memref<10x18x128xf32, #tpu.memory_space<vmem>>, vector<8x16x128xf32>
    %55 = tpu.concatenate %46, %47, %48, %49, %50, %51, %52, %53, %54 in 2 : vector<8x16x128xf32>, vector<8x16x128xf32>, vector<8x16x128xf32>, vector<8x16x128xf32>, vector<8x16x128xf32>, vector<8x16x128xf32>, vector<8x16x128xf32>, vector<8x16x128xf32>, vector<8x16x128xf32> -> vector<8x16x1152xf32>
    %c0_79 = arith.constant 0 : index
    %c0_80 = arith.constant 0 : index
    %56 = vector.load %arg5[%c0_79, %c0_80] : memref<1152x128xf32, #tpu.memory_space<vmem>>, vector<1152x128xf32>
    %cst_81 = arith.constant dense<0.000000e+00> : vector<8x16x128xf32>
    %57 = tpu.matmul %55, %56, %cst_81 {dimension_numbers = #tpu.dot_dimension_numbers<[2], [0], [0, 1], [1], [0, 0, 0, 1, 1, 1], [], []>} : vector<8x16x1152xf32>, vector<1152x128xf32>, vector<8x16x128xf32> -> vector<8x16x128xf32>
    %c0_82 = arith.constant 0 : index
    %c0_83 = arith.constant 0 : index
    %58 = vector.load %arg6[%c0_82, %c0_83] : memref<1x128xf32, #tpu.memory_space<vmem>>, vector<1x128xf32>
    %59 = vector.shape_cast %58 : vector<1x128xf32> to vector<128xf32>
    %60 = vector.shape_cast %59 : vector<128xf32> to vector<1x1x128xf32>
    %61 = vector.broadcast %60 : vector<1x1x128xf32> to vector<8x16x128xf32>
    %62 = arith.addf %57, %61 : vector<8x16x128xf32>
    %c2_84 = arith.constant 2 : index
    %c1_85 = arith.constant 1 : index
    %c0_86 = arith.constant 0 : index
    %63 = vector.load %arg8[%c2_84, %c1_85, %c0_86] : memref<12x18x128xf32, #tpu.memory_space<vmem>>, vector<8x16x128xf32>
    %64 = arith.addf %63, %62 : vector<8x16x128xf32>
    %cst_87 = arith.constant 0.000000e+00 : f32
    %65 = vector.broadcast %cst_87 : f32 to vector<8x16x128xf32>
    %66 = arith.maximumf %64, %65 : vector<8x16x128xf32>
    %c0_88 = arith.constant 0 : index
    %c0_89 = arith.constant 0 : index
    %c0_90 = arith.constant 0 : index
    %c0_91 = arith.constant 0 : index
    %67 = vector.load %arg7[%c0_88, %c0_89, %c0_90, %c0_91] : memref<1x8x16x128xf32, #tpu.memory_space<vmem>>, vector<1x8x16x128xf32>
    %68 = vector.shape_cast %67 : vector<1x8x16x128xf32> to vector<8x16x128xf32>
    %69 = vector.shape_cast %66 : vector<8x16x128xf32> to vector<1x8x16x128xf32>
    tpu.vector_store %arg7[%c0_88, %c0_89, %c0_90, %c0_91], %69 {strides = array<i32>} : memref<1x8x16x128xf32, #tpu.memory_space<vmem>>, vector<1x8x16x128xf32>,
    return
  }
  func.func @transform_1(%arg0: i32, %arg1: i32) -> (i32, i32) {
    %c0_i32 = arith.constant 0 : i32
    %c0_i32_0 = arith.constant 0 : i32
    %c0_i32_1 = arith.constant 0 : i32
    return %c0_i32, %c0_i32_0 : i32, i32
  }
  func.func @transform_2(%arg0: i32, %arg1: i32) -> (i32, i32) {
    %c0_i32 = arith.constant 0 : i32
    %c0_i32_0 = arith.constant 0 : i32
    %c0_i32_1 = arith.constant 0 : i32
    return %c0_i32, %c0_i32_0 : i32, i32
  }
  func.func @transform_3(%arg0: i32, %arg1: i32) -> (i32, i32) {
    %c0_i32 = arith.constant 0 : i32
    %c0_i32_0 = arith.constant 0 : i32
    %c0_i32_1 = arith.constant 0 : i32
    return %c0_i32, %c0_i32_0 : i32, i32
  }
  func.func @transform_4(%arg0: i32, %arg1: i32) -> (i32, i32) {
    %c0_i32 = arith.constant 0 : i32
    %c0_i32_0 = arith.constant 0 : i32
    %c0_i32_1 = arith.constant 0 : i32
    return %c0_i32, %c0_i32_0 : i32, i32
  }
  func.func @transform_5(%arg0: i32, %arg1: i32) -> (i32, i32, i32, i32) {
    %c0_i32 = arith.constant 0 : i32
    %c0_i32_0 = arith.constant 0 : i32
    %c0_i32_1 = arith.constant 0 : i32
    return %arg0, %arg1, %c0_i32, %c0_i32_0 : i32, i32, i32, i32
  }
}

</mosaic_0001>

<llo_original>
// kernel: residual_block_nchw.1
$region0: #{residual_block_nchw.1}
  #allocation0 [shape = 'u32[]', space=smem, size = 0x4, offset = 0x4, fixed_abs, tag = 'smem constant byte address 0x4 - core index']
  #allocation1 [shape = 'u32[144,128]{1,0:T(1,128)}', space=vmem, size = 0x12000, scoped, tag = 'internal scratch']
  #allocation2 [shape = 'f32[12,18,128]{2,1,0:T(8,128)}', space=vmem, size = 0x24000, scoped, tag = 'scratch operand']
  #allocation3 [shape = 'f32[12,18,128]{2,1,0:T(8,128)}', space=vmem, size = 0x24000, scoped, tag = 'scratch operand']
  #allocation4 [shape = 'f32[10,18,128]{2,1,0:T(8,128)}', space=vmem, size = 0x1e000, scoped, tag = 'scratch operand']
  #allocation5 [shape = 's32[1]{0}', space=sflag, size = 0x4, scoped, tag = 'scratch operand']
  #allocation8 [shape = 's32[]', space=sflag, size = 0x4, offset = 0, fixed_abs, tag = 'sflag constant byte address 0x0 - dummy sync flag']
  %s0 = inlined_call_operand.vmem [shape: f32[2,20,18,128], index: 0, kind: input, shape index: {}]
  %s1 = inlined_call_operand.vmem [shape: f32[1152,128], index: 1, kind: input, shape index: {}]
  %s2 = inlined_call_operand.vmem [shape: f32[1,128], index: 2, kind: input, shape index: {}]
  %s3 = inlined_call_operand.hbm [shape: f32[1152,128], index: 3, kind: input, shape index: {}]
  %s4 = inlined_call_operand.vmem [shape: f32[1,128], index: 4, kind: input, shape index: {}]
  %s5 = inlined_call_operand.vmem [shape: f32[2,16,16,128], index: 5, kind: output, shape index: {}]
  %s6 = sld [smem:[#allocation0]]
  $region90: #{residual_block_nchw.1} parent=0
    _
  %s8 = ssub.s32 1, %s6
  %s9 = scalar_select 0, %s8, %s6
  $region1: #{residual_block_nchw.1} parent=0
    #allocation6 [shape = 'u8[589824]{0}', space=vmem, size = 0x90000, scoped, tag = 'input window, operand 3, single buffered']
    #allocation7 [shape = 's32[2]{0}', space=sflag, size = 0x8, scoped, tag = 'scoped memory for residual_block_nchw.1']
    %10 = vsyncpa [#allocation7], 0
    loop: start=0, step=1, limit=6
    $region2: #{residual_block_nchw.1} parent=1 // loop_pre_header
      _
    $region3: #{residual_block_nchw.1} parent=1 // loop_header
      %s12 = sphi 0, %s16
      %p13 = scmp.ge.s32.totalorder %s12, 6
      %s19 = sphi 0, %s31
      %s20 = sphi 0, %s27
      %s21 = sphi 0, %s19
      %s22 = sphi 0, %s20
      %s23 = sphi 0, %s21
      %s24 = sphi 0, %s22
      %s32 = sphi 0, %s32
      %s34 = sphi 0, %s32
      %s35 = sphi 0, %s34
      %s49 = sphi 0, %s35
      %s53 = sphi 0, %s53
      %s55 = sphi 0, %s53
      %s56 = sphi 0, %s55
      %s70 = sphi 0, %s56
      %s74 = sphi 0, %s74
      %s76 = sphi 0, %s74
      %s77 = sphi 0, %s76
      %s91 = sphi 0, %s77
      %s95 = sphi 0, %s95
      %s97 = sphi 0, %s95
      %s98 = sphi 0, %s97
      %s112 = sphi 0, %s98
      %s120 = sphi 0, %s122
      %s123 = sphi 0, %s120
      %s124 = sphi 0, %s123
      %s140 = sphi 0, %s124
    $region4: #{residual_block_nchw.1} parent=1 // loop_header_branch
      %15 = sbr.rel (%p13) target = $region8
    $region5: #{residual_block_nchw.1} parent=1 // loop_body
      %s17 = ssub.s32 %s12, 1
      %s18 = ssub.s32 %s12, 2
      %s25 = sadd.s32 1, %s20
      %p26 = scmp.ge.s32.totalorder %s25, 2
      %s27 = scalar_select %p26, 0, %s25
      %s28 = sadd.s32 1, %s19
      %s29 = scalar_select %p26, %s28, %s19
      %p30 = scmp.ge.s32.totalorder %s29, 2
      %s31 = scalar_select %p30, 0, %s29
      %s33 = sadd.s32 %s32, 1
      %p36 = scmp.eq.s32.totalorder %s12, 3
      %p37 = scmp.ne.s32.totalorder %s32, %s34
      %p38 = scmp.eq.s32.totalorder %s12, 0
      %p39 = por %p37, %p38
      %p40 = scmp.ne.s32.totalorder %s32, %s34
      %p41 = scmp.eq.s32.totalorder %s17, 3
      %p42 = por %p40, %p41
      %p43 = scmp.ne.s32.totalorder %s34, %s35
      %p44 = scmp.eq.s32.totalorder %s17, 0
      %p45 = por %p43, %p44
      %p46 = scmp.ne.s32.totalorder %s34, %s35
      %p47 = scmp.eq.s32.totalorder %s18, 3
      %p48 = por %p46, %p47
      %p50 = scmp.ne.s32.totalorder %s35, %s49
      %p51 = scmp.eq.s32.totalorder %s18, 0
      %p52 = por %p50, %p51
      %s54 = sadd.s32 %s53, 1
      %p57 = scmp.eq.s32.totalorder %s12, 3
      %p58 = scmp.ne.s32.totalorder %s53, %s55
      %p59 = scmp.eq.s32.totalorder %s12, 0
      %p60 = por %p58, %p59
      %p61 = scmp.ne.s32.totalorder %s53, %s55
      %p62 = scmp.eq.s32.totalorder %s17, 3
      %p63 = por %p61, %p62
      %p64 = scmp.ne.s32.totalorder %s55, %s56
      %p65 = scmp.eq.s32.totalorder %s17, 0
      %p66 = por %p64, %p65
      %p67 = scmp.ne.s32.totalorder %s55, %s56
      %p68 = scmp.eq.s32.totalorder %s18, 3
      %p69 = por %p67, %p68
      %p71 = scmp.ne.s32.totalorder %s56, %s70
      %p72 = scmp.eq.s32.totalorder %s18, 0
      %p73 = por %p71, %p72
      %s75 = sadd.s32 %s74, 1
      %p78 = scmp.eq.s32.totalorder %s12, 3
      %p79 = scmp.ne.s32.totalorder %s74, %s76
      %p80 = scmp.eq.s32.totalorder %s12, 0
      %p81 = por %p79, %p80
      %p82 = scmp.ne.s32.totalorder %s74, %s76
      %p83 = scmp.eq.s32.totalorder %s17, 3
      %p84 = por %p82, %p83
      %p85 = scmp.ne.s32.totalorder %s76, %s77
      %p86 = scmp.eq.s32.totalorder %s17, 0
      %p87 = por %p85, %p86
      %p88 = scmp.ne.s32.totalorder %s76, %s77
      %p89 = scmp.eq.s32.totalorder %s18, 3
      %p90 = por %p88, %p89
      %p92 = scmp.ne.s32.totalorder %s77, %s91
      %p93 = scmp.eq.s32.totalorder %s18, 0
      %p94 = por %p92, %p93
      %s96 = sadd.s32 %s95, 1
      %p99 = scmp.eq.s32.totalorder %s12, 3
      %p100 = scmp.ne.s32.totalorder %s95, %s97
      %p101 = scmp.eq.s32.totalorder %s12, 0
      %p102 = por %p100, %p101
      %p103 = scmp.ne.s32.totalorder %s95, %s97
      %p104 = scmp.eq.s32.totalorder %s17, 3
      %p105 = por %p103, %p104
      %p106 = scmp.ne.s32.totalorder %s97, %s98
      %p107 = scmp.eq.s32.totalorder %s17, 0
      %p108 = por %p106, %p107
      %p109 = scmp.ne.s32.totalorder %s97, %s98
      %p110 = scmp.eq.s32.totalorder %s18, 3
      %p111 = por %p109, %p110
      %p113 = scmp.ne.s32.totalorder %s98, %s112
      %p114 = scmp.eq.s32.totalorder %s18, 0
      %p115 = por %p113, %p114
      %s116 = ssub.s32 %s19, %s31
      %s117 = ssub.s32 %s20, %s27
      %s118 = sor.u32 %s116, %s117
      %p119 = scmp.eq.s32.totalorder %s118, 0
      %s121 = sadd.s32 %s120, 1
      %s122 = scalar_select %p119, %s120, %s121
      %p125 = pneg %p119
      %p126 = scmp.eq.s32.totalorder %s12, 3
      %p127 = por %p125, %p126
      %p128 = scmp.ne.s32.totalorder %s120, %s123
      %p129 = scmp.eq.s32.totalorder %s12, 0
      %p130 = por %p128, %p129
      %p131 = scmp.ne.s32.totalorder %s120, %s123
      %p132 = scmp.eq.s32.totalorder %s17, 3
      %p133 = por %p131, %p132
      %p134 = scmp.ne.s32.totalorder %s123, %s124
      %p135 = scmp.eq.s32.totalorder %s17, 0
      %p136 = por %p134, %p135
      %p137 = scmp.ne.s32.totalorder %s123, %s124
      %p138 = scmp.eq.s32.totalorder %s18, 3
      %p139 = por %p137, %p138
      %p141 = scmp.ne.s32.totalorder %s124, %s140
      %p142 = scmp.eq.s32.totalorder %s18, 0
      %p143 = por %p141, %p142
      %p144 = scmp.le.s32.totalorder 1, %s12
      %p145 = scmp.lt.s32.totalorder %s12, 5
      %p146 = pnand %p144, %p145
      %p147 = pneg %p146
      // Predicated region
      $region9: #{residual_block_nchw.1} parent=5 // pred_check
        _
      $region10: #{residual_block_nchw.1} parent=5 // pred_check_branch
        %149 = sbr.rel (%p146) target = $region12
      $region11: #{residual_block_nchw.1} parent=5 // pred_region
        %s150 = ssub.s32 %s12, 1
        // Predicated region
        $region13: #{residual_block_nchw.1} parent=11 // pred_check
          %p151 = pneg %p45
        $region14: #{residual_block_nchw.1} parent=11 // pred_check_branch
          %153 = sbr.rel (%p151) target = $region16
        $region15: #{residual_block_nchw.1} parent=11 // pred_region
          _
        $region16: #{residual_block_nchw.1} parent=11 // pred_fallthru
          _
        // Predicated region
        $region17: #{residual_block_nchw.1} parent=11 // pred_check
          %p154 = pneg %p66
        $region18: #{residual_block_nchw.1} parent=11 // pred_check_branch
          %156 = sbr.rel (%p154) target = $region20
        $region19: #{residual_block_nchw.1} parent=11 // pred_region
          _
        $region20: #{residual_block_nchw.1} parent=11 // pred_fallthru
          _
        // Predicated region
        $region21: #{residual_block_nchw.1} parent=11 // pred_check
          %p157 = pneg %p87
        $region22: #{residual_block_nchw.1} parent=11 // pred_check_branch
          %159 = sbr.rel (%p157) target = $region24
        $region23: #{residual_block_nchw.1} parent=11 // pred_region
          %s161 = ssub.s32 18432, 18432
          %162 = vsyncadd [#allocation7], %s161
          %s163 = sshll.u32 [#allocation6], 4
          %s164 = int_to_ptr.vmem [resolvable:$true] %s163
          %169 = dma.hbm_to_vmem [thread:$0]  %s3, 18432, %s164, [#allocation7], 128, 128, 8
        $region24: #{residual_block_nchw.1} parent=11 // pred_fallthru
          _
        // Predicated region
        $region25: #{residual_block_nchw.1} parent=11 // pred_check
          %p170 = pneg %p108
        $region26: #{residual_block_nchw.1} parent=11 // pred_check_branch
          %172 = sbr.rel (%p170) target = $region28
        $region27: #{residual_block_nchw.1} parent=11 // pred_region
          _
        $region28: #{residual_block_nchw.1} parent=11 // pred_fallthru
          _
      $region12: #{residual_block_nchw.1} parent=5 // pred_fallthru
        _
      %p173 = scmp.lt.s32.totalorder %s12, 4
      // Predicated region
      $region29: #{residual_block_nchw.1} parent=5 // pred_check
        %p174 = pneg %p173
      $region30: #{residual_block_nchw.1} parent=5 // pred_check_branch
        %176 = sbr.rel (%p174) target = $region32
      $region31: #{residual_block_nchw.1} parent=5 // pred_region
        _
      $region32: #{residual_block_nchw.1} parent=5 // pred_fallthru
        _
      %p177 = scmp.le.s32.totalorder 1, %s12
      %p178 = scmp.lt.s32.totalorder %s12, 5
      %p179 = pnand %p177, %p178
      %p180 = pneg %p179
      // Predicated region
      $region33: #{residual_block_nchw.1} parent=5 // pred_check
        _
      $region34: #{residual_block_nchw.1} parent=5 // pred_check_branch
        %182 = sbr.rel (%p179) target = $region36
      $region35: #{residual_block_nchw.1} parent=5 // pred_region
        %s183 = ssub.s32 %s12, 1
        // Predicated region
        $region37: #{residual_block_nchw.1} parent=35 // pred_check
          %p184 = pneg %p87
        $region38: #{residual_block_nchw.1} parent=35 // pred_check_branch
          %186 = sbr.rel (%p184) target = $region40
        $region39: #{residual_block_nchw.1} parent=35 // pred_region
          %187 = dma.done [#allocation7], 18432
        $region40: #{residual_block_nchw.1} parent=35 // pred_fallthru
          _
        %p188 = pneg %p45
        %p189 = pneg %p42
        %p190 = pneg %p66
        %p191 = pneg %p63
        %p192 = pneg %p87
        %p193 = pneg %p84
        %p194 = pneg %p108
        %p195 = pneg %p105
        %p196 = pneg %p136
        %p197 = pneg %p133
        %s198 = smul.u32 8, %s22
        %p199 = scmp.lt.s32.totalorder %s21, 1
        %s200 = scalar_select %p199, %s21, 1
        %p201 = scmp.lt.s32.totalorder %s198, 15
        %s202 = scalar_select %p201, %s198, 15
        %s203 = smul.addr %s202, 2
        %s204 = smul.addr %s200, 32
        %s205 = sadd.s32 %s203, %s204
        %s206 = smul.addr %s205, 8
        %s207 = scalar_lea.vmem %s5, %s206
        %s208 = smul.u32 8, %s22
        %p209 = scmp.lt.s32.totalorder %s21, 1
        %s210 = scalar_select %p209, %s21, 1
        %p211 = scmp.lt.s32.totalorder %s208, 15
        %s212 = scalar_select %p211, %s208, 15
        %s213 = smul.addr %s212, 2
        %s214 = smul.addr %s210, 32
        %s215 = sadd.s32 %s213, %s214
        %s216 = smul.addr %s215, 8
        %s217 = scalar_lea.vmem %s5, %s216
        %s218 = smul.u32 8, %s22
        %s219 = smul.u32 %s22, 8
        %s220 = smul.u32 %s219, 24
        %s221 = smul.u32 %s21, 480
        %s222 = sadd.s32 %s220, %s221
        %s223 = scalar_lea.vmem %s0, %s222
        %p225 = scmp.lt.u32.totalorder 18, 8
        %p226 = pneg %p225
        // Predicated region
        $region41: #{residual_block_nchw.1} parent=35 // pred_check
          _
        $region42: #{residual_block_nchw.1} parent=35 // pred_check_branch
          %228 = sbr.rel (%p225) target = $region44
        $region43: #{residual_block_nchw.1} parent=35 // pred_region
          %s266 = sand.u32 18, 7
          %p267 = scmp.eq.s32.totalorder %s266, 0
          %p268 = pneg %p267
          // Predicated region
          $region56: #{residual_block_nchw.1} parent=43 // pred_check
            _
          $region57: #{residual_block_nchw.1} parent=43 // pred_check_branch
            %270 = sbr.rel (%p267) target = $region59
          $region58: #{residual_block_nchw.1} parent=43 // pred_region
            %s271 = sand.u32 18, 7
            %s272 = ssub.s32 18, %s271
            %s273 = scalar_lea.vmem %s223, %s272
            %s274 = ssub.s32 18, %s271
            %s275 = scalar_lea.vmem [#allocation2], %s274
            loop: start=0, step=1, limit=1
            $region60: #{residual_block_nchw.1} parent=58 // loop_pre_header
              _
            $region61: #{residual_block_nchw.1} parent=58 // loop_header
              %s277 = sphi 0, %s281
              %p278 = scmp.ge.s32.totalorder %s277, 1
              %s282 = sphi %s223, %s223
              %s283 = sphi [#allocation2], [#allocation2]
            $region62: #{residual_block_nchw.1} parent=58 // loop_header_branch
              %280 = sbr.rel (%p278) target = $region66
            $region63: #{residual_block_nchw.1} parent=58 // loop_body
              %v284 = vld [vmem:[%s282] sm:$0xff]
              %285 = vst [vmem:[%s283] sm:$0xff] %v284
              %v286 = vld [vmem:[%s282 + $0x8] sm:$0xff]
              %287 = vst [vmem:[%s283 + $0x8] sm:$0xff] %v286
              %v288 = vld [vmem:[%s282 + $0x18] sm:$0xff]
              %289 = vst [vmem:[%s283 + $0x18] sm:$0xff] %v288
              %v290 = vld [vmem:[%s282 + $0x20] sm:$0xff]
              %291 = vst [vmem:[%s283 + $0x20] sm:$0xff] %v290
              %v292 = vld [vmem:[%s282 + $0x30] sm:$0xff]
              %293 = vst [vmem:[%s283 + $0x30] sm:$0xff] %v292
              %v294 = vld [vmem:[%s282 + $0x38] sm:$0xff]
              %295 = vst [vmem:[%s283 + $0x38] sm:$0xff] %v294
              %v296 = vld [vmem:[%s282 + $0x48] sm:$0xff]
              %297 = vst [vmem:[%s283 + $0x48] sm:$0xff] %v296
              %v298 = vld [vmem:[%s282 + $0x50] sm:$0xff]
              %299 = vst [vmem:[%s283 + $0x50] sm:$0xff] %v298
              %v300 = vld [vmem:[%s282 + $0x60] sm:$0xff]
              %301 = vst [vmem:[%s283 + $0x60] sm:$0xff] %v300
              %v302 = vld [vmem:[%s282 + $0x68] sm:$0xff]
              %303 = vst [vmem:[%s283 + $0x68] sm:$0xff] %v302
              %v304 = vld [vmem:[%s282 + $0x78] sm:$0xff]
              %305 = vst [vmem:[%s283 + $0x78] sm:$0xff] %v304
              %v306 = vld [vmem:[%s282 + $0x80] sm:$0xff]
              %307 = vst [vmem:[%s283 + $0x80] sm:$0xff] %v306
              %v308 = vld [vmem:[%s282 + $0x90] sm:$0xff]
              %309 = vst [vmem:[%s283 + $0x90] sm:$0xff] %v308
              %v310 = vld [vmem:[%s282 + $0x98] sm:$0xff]
              %311 = vst [vmem:[%s283 + $0x98] sm:$0xff] %v310
              %v312 = vld [vmem:[%s282 + $0xa8] sm:$0xff]
              %313 = vst [vmem:[%s283 + $0xa8] sm:$0xff] %v312
              %v314 = vld [vmem:[%s282 + $0xb0] sm:$0xff]
              %315 = vst [vmem:[%s283 + $0xb0] sm:$0xff] %v314
              %v316 = vld [vmem:[%s282 + $0xc0] sm:$0xff]
              %317 = vst [vmem:[%s283 + $0xc0] sm:$0xff] %v316
              %v318 = vld [vmem:[%s282 + $0xc8] sm:$0xff]
              %319 = vst [vmem:[%s283 + $0xc8] sm:$0xff] %v318
              %v320 = vld [vmem:[%s282 + $0xd8] sm:$0xff]
              %321 = vst [vmem:[%s283 + $0xd8] sm:$0xff] %v320
              %v322 = vld [vmem:[%s282 + $0xe0] sm:$0xff]
              %323 = vst [vmem:[%s283 + $0xe0] sm:$0xff] %v322
              %v324 = vld [vmem:[%s282 + $0xf0] sm:$0xff]
              %325 = vst [vmem:[%s283 + $0xf0] sm:$0xff] %v324
              %v326 = vld [vmem:[%s282 + $0xf8] sm:$0xff]
              %327 = vst [vmem:[%s283 + $0xf8] sm:$0xff] %v326
              %v328 = vld [vmem:[%s282 + $0x108] sm:$0xff]
              %329 = vst [vmem:[%s283 + $0x108] sm:$0xff] %v328
              %v330 = vld [vmem:[%s282 + $0x110] sm:$0xff]
              %331 = vst [vmem:[%s283 + $0x110] sm:$0xff] %v330
            $region64: #{residual_block_nchw.1} parent=58 // loop_footer
              %s281 = sadd.s32 1, %s277
            $region65: #{residual_block_nchw.1} parent=58 // loop_footer_branch
              %276 = sbr.rel target = $region61
            $region66: #{residual_block_nchw.1} parent=58 // loop_exit
              _
            %s332 = sshll.u32 1, %s271
            %s333 = ssub.s32 %s332, 1
            loop: start=0, step=1, limit=1
            $region67: #{residual_block_nchw.1} parent=58 // loop_pre_header
              _
            $region68: #{residual_block_nchw.1} parent=58 // loop_header
              %s335 = sphi 0, %s339
              %p336 = scmp.ge.s32.totalorder %s335, 1
              %s340 = sphi %s273, %s273
              %s341 = sphi %s275, %s275
            $region69: #{residual_block_nchw.1} parent=58 // loop_header_branch
              %338 = sbr.rel (%p336) target = $region73
            $region70: #{residual_block_nchw.1} parent=58 // loop_body
              %v342 = vld [vmem:[%s340] sm:%s333]
              %343 = vst [vmem:[%s341] sm:%s333] %v342
              %v344 = vld [vmem:[%s340 + $0x18] sm:%s333]
              %345 = vst [vmem:[%s341 + $0x18] sm:%s333] %v344
              %v346 = vld [vmem:[%s340 + $0x30] sm:%s333]
              %347 = vst [vmem:[%s341 + $0x30] sm:%s333] %v346
              %v348 = vld [vmem:[%s340 + $0x48] sm:%s333]
              %349 = vst [vmem:[%s341 + $0x48] sm:%s333] %v348
              %v350 = vld [vmem:[%s340 + $0x60] sm:%s333]
              %351 = vst [vmem:[%s341 + $0x60] sm:%s333] %v350
              %v352 = vld [vmem:[%s340 + $0x78] sm:%s333]
              %353 = vst [vmem:[%s341 + $0x78] sm:%s333] %v352
              %v354 = vld [vmem:[%s340 + $0x90] sm:%s333]
              %355 = vst [vmem:[%s341 + $0x90] sm:%s333] %v354
              %v356 = vld [vmem:[%s340 + $0xa8] sm:%s333]
              %357 = vst [vmem:[%s341 + $0xa8] sm:%s333] %v356
              %v358 = vld [vmem:[%s340 + $0xc0] sm:%s333]
              %359 = vst [vmem:[%s341 + $0xc0] sm:%s333] %v358
              %v360 = vld [vmem:[%s340 + $0xd8] sm:%s333]
              %361 = vst [vmem:[%s341 + $0xd8] sm:%s333] %v360
              %v362 = vld [vmem:[%s340 + $0xf0] sm:%s333]
              %363 = vst [vmem:[%s341 + $0xf0] sm:%s333] %v362
              %v364 = vld [vmem:[%s340 + $0x108] sm:%s333]
              %365 = vst [vmem:[%s341 + $0x108] sm:%s333] %v364
            $region71: #{residual_block_nchw.1} parent=58 // loop_footer
              %s339 = sadd.s32 1, %s335
            $region72: #{residual_block_nchw.1} parent=58 // loop_footer_branch
              %334 = sbr.rel target = $region68
            $region73: #{residual_block_nchw.1} parent=58 // loop_exit
              _
          $region59: #{residual_block_nchw.1} parent=43 // pred_fallthru
            _
        $region44: #{residual_block_nchw.1} parent=35 // pred_fallthru
          _
        // Predicated region
        $region45: #{residual_block_nchw.1} parent=35 // pred_check
          %p229 = pneg %p225
        $region46: #{residual_block_nchw.1} parent=35 // pred_check_branch
          %231 = sbr.rel (%p229) target = $region48
        $region47: #{residual_block_nchw.1} parent=35 // pred_region
          %s232 = sshll.u32 1, 18
          %s233 = ssub.s32 %s232, 1
          loop: start=0, step=1, limit=1
          $region49: #{residual_block_nchw.1} parent=47 // loop_pre_header
            _
          $region50: #{residual_block_nchw.1} parent=47 // loop_header
            %s235 = sphi 0, %s239
            %p236 = scmp.ge.s32.totalorder %s235, 1
            %s240 = sphi %s223, %s223
            %s241 = sphi [#allocation2], [#allocation2]
          $region51: #{residual_block_nchw.1} parent=47 // loop_header_branch
            %238 = sbr.rel (%p236) target = $region55
          $region52: #{residual_block_nchw.1} parent=47 // loop_body
            %v242 = vld [vmem:[%s240] sm:%s233]
            %243 = vst [vmem:[%s241] sm:%s233] %v242
            %v244 = vld [vmem:[%s240 + $0x18] sm:%s233]
            %245 = vst [vmem:[%s241 + $0x18] sm:%s233] %v244
            %v246 = vld [vmem:[%s240 + $0x30] sm:%s233]
            %247 = vst [vmem:[%s241 + $0x30] sm:%s233] %v246
            %v248 = vld [vmem:[%s240 + $0x48] sm:%s233]
            %249 = vst [vmem:[%s241 + $0x48] sm:%s233] %v248
            %v250 = vld [vmem:[%s240 + $0x60] sm:%s233]
            %251 = vst [vmem:[%s241 + $0x60] sm:%s233] %v250
            %v252 = vld [vmem:[%s240 + $0x78] sm:%s233]
            %253 = vst [vmem:[%s241 + $0x78] sm:%s233] %v252
            %v254 = vld [vmem:[%s240 + $0x90] sm:%s233]
            %255 = vst [vmem:[%s241 + $0x90] sm:%s233] %v254
            %v256 = vld [vmem:[%s240 + $0xa8] sm:%s233]
            %257 = vst [vmem:[%s241 + $0xa8] sm:%s233] %v256
            %v258 = vld [vmem:[%s240 + $0xc0] sm:%s233]
            %259 = vst [vmem:[%s241 + $0xc0] sm:%s233] %v258
            %v260 = vld [vmem:[%s240 + $0xd8] sm:%s233]
            %261 = vst [vmem:[%s241 + $0xd8] sm:%s233] %v260
            %v262 = vld [vmem:[%s240 + $0xf0] sm:%s233]
            %263 = vst [vmem:[%s241 + $0xf0] sm:%s233] %v262
            %v264 = vld [vmem:[%s240 + $0x108] sm:%s233]
            %265 = vst [vmem:[%s241 + $0x108] sm:%s233] %v264
          $region53: #{residual_block_nchw.1} parent=47 // loop_footer
            %s239 = sadd.s32 1, %s235
          $region54: #{residual_block_nchw.1} parent=47 // loop_footer_branch
            %234 = sbr.rel target = $region50
          $region55: #{residual_block_nchw.1} parent=47 // loop_exit
            _
        $region48: #{residual_block_nchw.1} parent=35 // pred_fallthru
          _
        // Predicated region
        $region74: #{residual_block_nchw.1} parent=35 // pred_check
          _
        $region75: #{residual_block_nchw.1} parent=35 // pred_check_branch
          %368 = sbr.rel (0) target = $region77
        $region76: #{residual_block_nchw.1} parent=35 // pred_region
          %369 = vsyncadd [#allocation5], 3456
        $region77: #{residual_block_nchw.1} parent=35 // pred_fallthru
          _
        %s370 = smul.u32 12, 18
        %s371 = smul.u32 %s370, 1
        %s372 = sshll.u32 %s371, 4
        %373 = dma.done [#allocation5], %s372
        %v374 = vld [vmem:[#allocation2] sm:$0xff]
        %v375 = vld [vmem:[#allocation2 + $0x8] sm:$0xff]
        %v376 = vld [vmem:[#allocation2 + $0x10] sm:$0x3]
        %v377 = vld [vmem:[#allocation2 + $0x18] sm:$0xff]
        %v378 = vld [vmem:[#allocation2 + $0x20] sm:$0xff]
        %v379 = vld [vmem:[#allocation2 + $0x28] sm:$0x3]
        %v380 = vld [vmem:[#allocation2 + $0x30] sm:$0xff]
        %v381 = vld [vmem:[#allocation2 + $0x38] sm:$0xff]
        %v382 = vld [vmem:[#allocation2 + $0x40] sm:$0x3]
        %v383 = vld [vmem:[#allocation2 + $0x48] sm:$0xff]
        %v384 = vld [vmem:[#allocation2 + $0x50] sm:$0xff]
        %v385 = vld [vmem:[#allocation2 + $0x58] sm:$0x3]
        %v386 = vld [vmem:[#allocation2 + $0x60] sm:$0xff]
        %v387 = vld [vmem:[#allocation2 + $0x68] sm:$0xff]
        %v388 = vld [vmem:[#allocation2 + $0x70] sm:$0x3]
        %v389 = vld [vmem:[#allocation2 + $0x78] sm:$0xff]
        %v390 = vld [vmem:[#allocation2 + $0x80] sm:$0xff]
        %v391 = vld [vmem:[#allocation2 + $0x88] sm:$0x3]
        %v392 = vld [vmem:[#allocation2 + $0x90] sm:$0xff]
        %v393 = vld [vmem:[#allocation2 + $0x98] sm:$0xff]
        %v394 = vld [vmem:[#allocation2 + $0xa0] sm:$0x3]
        %v395 = vld [vmem:[#allocation2 + $0xa8] sm:$0xff]
        %v396 = vld [vmem:[#allocation2 + $0xb0] sm:$0xff]
        %v397 = vld [vmem:[#allocation2 + $0xb8] sm:$0x3]
        %v398 = vld [vmem:[#allocation2 + $0xc0] sm:$0xff]
        %v399 = vld [vmem:[#allocation2 + $0xc8] sm:$0xff]
        %v400 = vld [vmem:[#allocation2 + $0xd0] sm:$0x3]
        %v401 = vld [vmem:[#allocation2 + $0xd8] sm:$0xff]
        %v402 = vld [vmem:[#allocation2 + $0xe0] sm:$0xff]
        %v403 = vld [vmem:[#allocation2 + $0xe8] sm:$0x3]
        %v404 = vld [vmem:[#allocation2 + $0xf0] sm:$0xff]
        %v405 = vld [vmem:[#allocation2 + $0xf8] sm:$0xff]
        %v406 = vld [vmem:[#allocation2 + $0x100] sm:$0x3]
        %v407 = vld [vmem:[#allocation2 + $0x108] sm:$0xff]
        %v408 = vld [vmem:[#allocation2 + $0x110] sm:$0xff]
        %v409 = vld [vmem:[#allocation2 + $0x118] sm:$0x3]
        %410 = vst [vmem:[#allocation3] sm:$0xff] %v374
        %411 = vst [vmem:[#allocation3 + $0x8] sm:$0xff] %v375
        %412 = vst [vmem:[#allocation3 + $0x10] sm:$0x3] %v376
        %413 = vst [vmem:[#allocation3 + $0x18] sm:$0xff] %v377
        %414 = vst [vmem:[#allocation3 + $0x20] sm:$0xff] %v378
        %415 = vst [vmem:[#allocation3 + $0x28] sm:$0x3] %v379
        %416 = vst [vmem:[#allocation3 + $0x30] sm:$0xff] %v380
        %417 = vst [vmem:[#allocation3 + $0x38] sm:$0xff] %v381
        %418 = vst [vmem:[#allocation3 + $0x40] sm:$0x3] %v382
        %419 = vst [vmem:[#allocation3 + $0x48] sm:$0xff] %v383
        %420 = vst [vmem:[#allocation3 + $0x50] sm:$0xff] %v384
        %421 = vst [vmem:[#allocation3 + $0x58] sm:$0x3] %v385
        %422 = vst [vmem:[#allocation3 + $0x60] sm:$0xff] %v386
        %423 = vst [vmem:[#allocation3 + $0x68] sm:$0xff] %v387
        %424 = vst [vmem:[#allocation3 + $0x70] sm:$0x3] %v388
        %425 = vst [vmem:[#allocation3 + $0x78] sm:$0xff] %v389
        %426 = vst [vmem:[#allocation3 + $0x80] sm:$0xff] %v390
        %427 = vst [vmem:[#allocation3 + $0x88] sm:$0x3] %v391
        %428 = vst [vmem:[#allocation3 + $0x90] sm:$0xff] %v392
        %429 = vst [vmem:[#allocation3 + $0x98] sm:$0xff] %v393
        %430 = vst [vmem:[#allocation3 + $0xa0] sm:$0x3] %v394
        %431 = vst [vmem:[#allocation3 + $0xa8] sm:$0xff] %v395
        %432 = vst [vmem:[#allocation3 + $0xb0] sm:$0xff] %v396
        %433 = vst [vmem:[#allocation3 + $0xb8] sm:$0x3] %v397
        %434 = vst [vmem:[#allocation3 + $0xc0] sm:$0xff] %v398
        %435 = vst [vmem:[#allocation3 + $0xc8] sm:$0xff] %v399
        %436 = vst [vmem:[#allocation3 + $0xd0] sm:$0x3] %v400
        %437 = vst [vmem:[#allocation3 + $0xd8] sm:$0xff] %v401
        %438 = vst [vmem:[#allocation3 + $0xe0] sm:$0xff] %v402
        %439 = vst [vmem:[#allocation3 + $0xe8] sm:$0x3] %v403
        %440 = vst [vmem:[#allocation3 + $0xf0] sm:$0xff] %v404
        %441 = vst [vmem:[#allocation3 + $0xf8] sm:$0xff] %v405
        %442 = vst [vmem:[#allocation3 + $0x100] sm:$0x3] %v406
        %443 = vst [vmem:[#allocation3 + $0x108] sm:$0xff] %v407
        %444 = vst [vmem:[#allocation3 + $0x110] sm:$0xff] %v408
        %445 = vst [vmem:[#allocation3 + $0x118] sm:$0x3] %v409
        %v446 = vld [vmem:[#allocation3] sm:$0xff]
        %v447 = vld [vmem:[#allocation3 + $0x8] sm:$0xff]
        %v448 = vld [vmem:[#allocation3 + $0x18] sm:$0xff]
        %v449 = vld [vmem:[#allocation3 + $0x20] sm:$0xff]
        %v450 = vld [vmem:[#allocation3 + $0x30] sm:$0xff]
        %v451 = vld [vmem:[#allocation3 + $0x38] sm:$0xff]
        %v452 = vld [vmem:[#allocation3 + $0x48] sm:$0xff]
        %v453 = vld [vmem:[#allocation3 + $0x50] sm:$0xff]
        %v454 = vld [vmem:[#allocation3 + $0x60] sm:$0xff]
        %v455 = vld [vmem:[#allocation3 + $0x68] sm:$0xff]
        %v456 = vld [vmem:[#allocation3 + $0x78] sm:$0xff]
        %v457 = vld [vmem:[#allocation3 + $0x80] sm:$0xff]
        %v458 = vld [vmem:[#allocation3 + $0x90] sm:$0xff]
        %v459 = vld [vmem:[#allocation3 + $0x98] sm:$0xff]
        %v460 = vld [vmem:[#allocation3 + $0xa8] sm:$0xff]
        %v461 = vld [vmem:[#allocation3 + $0xb0] sm:$0xff]
        %v462 = vld [vmem:[#allocation3 + $0xc0] sm:$0xff]
        %v463 = vld [vmem:[#allocation3 + $0xc8] sm:$0xff]
        %v464 = vld [vmem:[#allocation3 + $0xd8] sm:$0xff]
        %v465 = vld [vmem:[#allocation3 + $0xe0] sm:$0xff]
        %v466 = vld [vmem:[#allocation3 + $0x1] sm:$0xff]
        %v467 = vld [vmem:[#allocation3 + $0x9] sm:$0xff]
        %v468 = vld [vmem:[#allocation3 + $0x19] sm:$0xff]
        %v469 = vld [vmem:[#allocation3 + $0x21] sm:$0xff]
        %v470 = vld [vmem:[#allocation3 + $0x31] sm:$0xff]
        %v471 = vld [vmem:[#allocation3 + $0x39] sm:$0xff]
        %v472 = vld [vmem:[#allocation3 + $0x49] sm:$0xff]
        %v473 = vld [vmem:[#allocation3 + $0x51] sm:$0xff]
        %v474 = vld [vmem:[#allocation3 + $0x61] sm:$0xff]
        %v475 = vld [vmem:[#allocation3 + $0x69] sm:$0xff]
        %v476 = vld [vmem:[#allocation3 + $0x79] sm:$0xff]
        %v477 = vld [vmem:[#allocation3 + $0x81] sm:$0xff]
        %v478 = vld [vmem:[#allocation3 + $0x91] sm:$0xff]
        %v479 = vld [vmem:[#allocation3 + $0x99] sm:$0xff]
        %v480 = vld [vmem:[#allocation3 + $0xa9] sm:$0xff]
        %v481 = vld [vmem:[#allocation3 + $0xb1] sm:$0xff]
        %v482 = vld [vmem:[#allocation3 + $0xc1] sm:$0xff]
        %v483 = vld [vmem:[#allocation3 + $0xc9] sm:$0xff]
        %v484 = vld [vmem:[#allocation3 + $0xd9] sm:$0xff]
        %v485 = vld [vmem:[#allocation3 + $0xe1] sm:$0xff]
        %v486 = vld [vmem:[#allocation3 + $0x2] sm:$0xff]
        %v487 = vld [vmem:[#allocation3 + $0xa] sm:$0xff]
        %v488 = vld [vmem:[#allocation3 + $0x1a] sm:$0xff]
        %v489 = vld [vmem:[#allocation3 + $0x22] sm:$0xff]
        %v490 = vld [vmem:[#allocation3 + $0x32] sm:$0xff]
        %v491 = vld [vmem:[#allocation3 + $0x3a] sm:$0xff]
        %v492 = vld [vmem:[#allocation3 + $0x4a] sm:$0xff]
        %v493 = vld [vmem:[#allocation3 + $0x52] sm:$0xff]
        %v494 = vld [vmem:[#allocation3 + $0x62] sm:$0xff]
        %v495 = vld [vmem:[#allocation3 + $0x6a] sm:$0xff]
        %v496 = vld [vmem:[#allocation3 + $0x7a] sm:$0xff]
        %v497 = vld [vmem:[#allocation3 + $0x82] sm:$0xff]
        %v498 = vld [vmem:[#allocation3 + $0x92] sm:$0xff]
        %v499 = vld [vmem:[#allocation3 + $0x9a] sm:$0xff]
        %v500 = vld [vmem:[#allocation3 + $0xaa] sm:$0xff]
        %v501 = vld [vmem:[#allocation3 + $0xb2] sm:$0xff]
        %v502 = vld [vmem:[#allocation3 + $0xc2] sm:$0xff]
        %v503 = vld [vmem:[#allocation3 + $0xca] sm:$0xff]
        %v504 = vld [vmem:[#allocation3 + $0xda] sm:$0xff]
        %v505 = vld [vmem:[#allocation3 + $0xe2] sm:$0xff]
        %s506 = scalar_lea.vmem [#allocation3], 24
        %v507 = vld [vmem:[%s506] sm:$0xff]
        %v508 = vld [vmem:[%s506 + $0x8] sm:$0xff]
        %v509 = vld [vmem:[%s506 + $0x18] sm:$0xff]
        %v510 = vld [vmem:[%s506 + $0x20] sm:$0xff]
        %v511 = vld [vmem:[%s506 + $0x30] sm:$0xff]
        %v512 = vld [vmem:[%s506 + $0x38] sm:$0xff]
        %v513 = vld [vmem:[%s506 + $0x48] sm:$0xff]
        %v514 = vld [vmem:[%s506 + $0x50] sm:$0xff]
        %v515 = vld [vmem:[%s506 + $0x60] sm:$0xff]
        %v516 = vld [vmem:[%s506 + $0x68] sm:$0xff]
        %v517 = vld [vmem:[%s506 + $0x78] sm:$0xff]
        %v518 = vld [vmem:[%s506 + $0x80] sm:$0xff]
        %v519 = vld [vmem:[%s506 + $0x90] sm:$0xff]
        %v520 = vld [vmem:[%s506 + $0x98] sm:$0xff]
        %v521 = vld [vmem:[%s506 + $0xa8] sm:$0xff]
        %v522 = vld [vmem:[%s506 + $0xb0] sm:$0xff]
        %v523 = vld [vmem:[%s506 + $0xc0] sm:$0xff]
        %v524 = vld [vmem:[%s506 + $0xc8] sm:$0xff]
        %v525 = vld [vmem:[%s506 + $0xd8] sm:$0xff]
        %v526 = vld [vmem:[%s506 + $0xe0] sm:$0xff]
        %v527 = vld [vmem:[%s506 + $0x1] sm:$0xff]
        %v528 = vld [vmem:[%s506 + $0x9] sm:$0xff]
        %v529 = vld [vmem:[%s506 + $0x19] sm:$0xff]
        %v530 = vld [vmem:[%s506 + $0x21] sm:$0xff]
        %v531 = vld [vmem:[%s506 + $0x31] sm:$0xff]
        %v532 = vld [vmem:[%s506 + $0x39] sm:$0xff]
        %v533 = vld [vmem:[%s506 + $0x49] sm:$0xff]
        %v534 = vld [vmem:[%s506 + $0x51] sm:$0xff]
        %v535 = vld [vmem:[%s506 + $0x61] sm:$0xff]
        %v536 = vld [vmem:[%s506 + $0x69] sm:$0xff]
        %v537 = vld [vmem:[%s506 + $0x79] sm:$0xff]
        %v538 = vld [vmem:[%s506 + $0x81] sm:$0xff]
        %v539 = vld [vmem:[%s506 + $0x91] sm:$0xff]
        %v540 = vld [vmem:[%s506 + $0x99] sm:$0xff]
        %v541 = vld [vmem:[%s506 + $0xa9] sm:$0xff]
        %v542 = vld [vmem:[%s506 + $0xb1] sm:$0xff]
        %v543 = vld [vmem:[%s506 + $0xc1] sm:$0xff]
        %v544 = vld [vmem:[%s506 + $0xc9] sm:$0xff]
        %v545 = vld [vmem:[%s506 + $0xd9] sm:$0xff]
        %v546 = vld [vmem:[%s506 + $0xe1] sm:$0xff]
        %v547 = vld [vmem:[%s506 + $0x2] sm:$0xff]
        %v548 = vld [vmem:[%s506 + $0xa] sm:$0xff]
        %v549 = vld [vmem:[%s506 + $0x1a] sm:$0xff]
        %v550 = vld [vmem:[%s506 + $0x22] sm:$0xff]
        %v551 = vld [vmem:[%s506 + $0x32] sm:$0xff]
        %v552 = vld [vmem:[%s506 + $0x3a] sm:$0xff]
        %v553 = vld [vmem:[%s506 + $0x4a] sm:$0xff]
        %v554 = vld [vmem:[%s506 + $0x52] sm:$0xff]
        %v555 = vld [vmem:[%s506 + $0x62] sm:$0xff]
        %v556 = vld [vmem:[%s506 + $0x6a] sm:$0xff]
        %v557 = vld [vmem:[%s506 + $0x7a] sm:$0xff]
        %v558 = vld [vmem:[%s506 + $0x82] sm:$0xff]
        %v559 = vld [vmem:[%s506 + $0x92] sm:$0xff]
        %v560 = vld [vmem:[%s506 + $0x9a] sm:$0xff]
        %v561 = vld [vmem:[%s506 + $0xaa] sm:$0xff]
        %v562 = vld [vmem:[%s506 + $0xb2] sm:$0xff]
        %v563 = vld [vmem:[%s506 + $0xc2] sm:$0xff]
        %v564 = vld [vmem:[%s506 + $0xca] sm:$0xff]
        %v565 = vld [vmem:[%s506 + $0xda] sm:$0xff]
        %v566 = vld [vmem:[%s506 + $0xe2] sm:$0xff]
        %s567 = scalar_lea.vmem [#allocation3], 48
        %v568 = vld [vmem:[%s567] sm:$0xff]
        %v569 = vld [vmem:[%s567 + $0x8] sm:$0xff]
        %v570 = vld [vmem:[%s567 + $0x18] sm:$0xff]
        %v571 = vld [vmem:[%s567 + $0x20] sm:$0xff]
        %v572 = vld [vmem:[%s567 + $0x30] sm:$0xff]
        %v573 = vld [vmem:[%s567 + $0x38] sm:$0xff]
        %v574 = vld [vmem:[%s567 + $0x48] sm:$0xff]
        %v575 = vld [vmem:[%s567 + $0x50] sm:$0xff]
        %v576 = vld [vmem:[%s567 + $0x60] sm:$0xff]
        %v577 = vld [vmem:[%s567 + $0x68] sm:$0xff]
        %v578 = vld [vmem:[%s567 + $0x78] sm:$0xff]
        %v579 = vld [vmem:[%s567 + $0x80] sm:$0xff]
        %v580 = vld [vmem:[%s567 + $0x90] sm:$0xff]
        %v581 = vld [vmem:[%s567 + $0x98] sm:$0xff]
        %v582 = vld [vmem:[%s567 + $0xa8] sm:$0xff]
        %v583 = vld [vmem:[%s567 + $0xb0] sm:$0xff]
        %v584 = vld [vmem:[%s567 + $0xc0] sm:$0xff]
        %v585 = vld [vmem:[%s567 + $0xc8] sm:$0xff]
        %v586 = vld [vmem:[%s567 + $0xd8] sm:$0xff]
        %v587 = vld [vmem:[%s567 + $0xe0] sm:$0xff]
        %v588 = vld [vmem:[%s567 + $0x1] sm:$0xff]
        %v589 = vld [vmem:[%s567 + $0x9] sm:$0xff]
        %v590 = vld [vmem:[%s567 + $0x19] sm:$0xff]
        %v591 = vld [vmem:[%s567 + $0x21] sm:$0xff]
        %v592 = vld [vmem:[%s567 + $0x31] sm:$0xff]
        %v593 = vld [vmem:[%s567 + $0x39] sm:$0xff]
        %v594 = vld [vmem:[%s567 + $0x49] sm:$0xff]
        %v595 = vld [vmem:[%s567 + $0x51] sm:$0xff]
        %v596 = vld [vmem:[%s567 + $0x61] sm:$0xff]
        %v597 = vld [vmem:[%s567 + $0x69] sm:$0xff]
        %v598 = vld [vmem:[%s567 + $0x79] sm:$0xff]
        %v599 = vld [vmem:[%s567 + $0x81] sm:$0xff]
        %v600 = vld [vmem:[%s567 + $0x91] sm:$0xff]
        %v601 = vld [vmem:[%s567 + $0x99] sm:$0xff]
        %v602 = vld [vmem:[%s567 + $0xa9] sm:$0xff]
        %v603 = vld [vmem:[%s567 + $0xb1] sm:$0xff]
        %v604 = vld [vmem:[%s567 + $0xc1] sm:$0xff]
        %v605 = vld [vmem:[%s567 + $0xc9] sm:$0xff]
        %v606 = vld [vmem:[%s567 + $0xd9] sm:$0xff]
        %v607 = vld [vmem:[%s567 + $0xe1] sm:$0xff]
        %v608 = vld [vmem:[%s567 + $0x2] sm:$0xff]
        %v609 = vld [vmem:[%s567 + $0xa] sm:$0xff]
        %v610 = vld [vmem:[%s567 + $0x1a] sm:$0xff]
        %v611 = vld [vmem:[%s567 + $0x22] sm:$0xff]
        %v612 = vld [vmem:[%s567 + $0x32] sm:$0xff]
        %v613 = vld [vmem:[%s567 + $0x3a] sm:$0xff]
        %v614 = vld [vmem:[%s567 + $0x4a] sm:$0xff]
        %v615 = vld [vmem:[%s567 + $0x52] sm:$0xff]
        %v616 = vld [vmem:[%s567 + $0x62] sm:$0xff]
        %v617 = vld [vmem:[%s567 + $0x6a] sm:$0xff]
        %v618 = vld [vmem:[%s567 + $0x7a] sm:$0xff]
        %v619 = vld [vmem:[%s567 + $0x82] sm:$0xff]
        %v620 = vld [vmem:[%s567 + $0x92] sm:$0xff]
        %v621 = vld [vmem:[%s567 + $0x9a] sm:$0xff]
        %v622 = vld [vmem:[%s567 + $0xaa] sm:$0xff]
        %v623 = vld [vmem:[%s567 + $0xb2] sm:$0xff]
        %v624 = vld [vmem:[%s567 + $0xc2] sm:$0xff]
        %v625 = vld [vmem:[%s567 + $0xca] sm:$0xff]
        %v626 = vld [vmem:[%s567 + $0xda] sm:$0xff]
        %v627 = vld [vmem:[%s567 + $0xe2] sm:$0xff]
        %v628 = vld [vmem:[%s1] sm:$0xff]
        %v629 = vld [vmem:[%s1 + $0x8] sm:$0xff]
        %v630 = vld [vmem:[%s1 + $0x10] sm:$0xff]
        %v631 = vld [vmem:[%s1 + $0x18] sm:$0xff]
        %v632 = vld [vmem:[%s1 + $0x20] sm:$0xff]
        %v633 = vld [vmem:[%s1 + $0x28] sm:$0xff]
        %v634 = vld [vmem:[%s1 + $0x30] sm:$0xff]
        %v635 = vld [vmem:[%s1 + $0x38] sm:$0xff]
        %v636 = vld [vmem:[%s1 + $0x40] sm:$0xff]
        %v637 = vld [vmem:[%s1 + $0x48] sm:$0xff]
        %v638 = vld [vmem:[%s1 + $0x50] sm:$0xff]
        %v639 = vld [vmem:[%s1 + $0x58] sm:$0xff]
        %v640 = vld [vmem:[%s1 + $0x60] sm:$0xff]
        %v641 = vld [vmem:[%s1 + $0x68] sm:$0xff]
        %v642 = vld [vmem:[%s1 + $0x70] sm:$0xff]
        %v643 = vld [vmem:[%s1 + $0x78] sm:$0xff]
        %v644 = vld [vmem:[%s1 + $0x80] sm:$0xff]
        %v645 = vld [vmem:[%s1 + $0x88] sm:$0xff]
        %v646 = vld [vmem:[%s1 + $0x90] sm:$0xff]
        %v647 = vld [vmem:[%s1 + $0x98] sm:$0xff]
        %v648 = vld [vmem:[%s1 + $0xa0] sm:$0xff]
        %v649 = vld [vmem:[%s1 + $0xa8] sm:$0xff]
        %v650 = vld [vmem:[%s1 + $0xb0] sm:$0xff]
        %v651 = vld [vmem:[%s1 + $0xb8] sm:$0xff]
        %v652 = vld [vmem:[%s1 + $0xc0] sm:$0xff]
        %v653 = vld [vmem:[%s1 + $0xc8] sm:$0xff]
        %v654 = vld [vmem:[%s1 + $0xd0] sm:$0xff]
        %v655 = vld [vmem:[%s1 + $0xd8] sm:$0xff]
        %v656 = vld [vmem:[%s1 + $0xe0] sm:$0xff]
        %v657 = vld [vmem:[%s1 + $0xe8] sm:$0xff]
        %v658 = vld [vmem:[%s1 + $0xf0] sm:$0xff]
        %v659 = vld [vmem:[%s1 + $0xf8] sm:$0xff]
        %v660 = vld [vmem:[%s1 + $0x100] sm:$0xff]
        %v661 = vld [vmem:[%s1 + $0x108] sm:$0xff]
        %v662 = vld [vmem:[%s1 + $0x110] sm:$0xff]
        %v663 = vld [vmem:[%s1 + $0x118] sm:$0xff]
        %v664 = vld [vmem:[%s1 + $0x120] sm:$0xff]
        %v665 = vld [vmem:[%s1 + $0x128] sm:$0xff]
        %v666 = vld [vmem:[%s1 + $0x130] sm:$0xff]
        %v667 = vld [vmem:[%s1 + $0x138] sm:$0xff]
        %v668 = vld [vmem:[%s1 + $0x140] sm:$0xff]
        %v669 = vld [vmem:[%s1 + $0x148] sm:$0xff]
        %v670 = vld [vmem:[%s1 + $0x150] sm:$0xff]
        %v671 = vld [vmem:[%s1 + $0x158] sm:$0xff]
        %v672 = vld [vmem:[%s1 + $0x160] sm:$0xff]
        %v673 = vld [vmem:[%s1 + $0x168] sm:$0xff]
        %v674 = vld [vmem:[%s1 + $0x170] sm:$0xff]
        %v675 = vld [vmem:[%s1 + $0x178] sm:$0xff]
        %v676 = vld [vmem:[%s1 + $0x180] sm:$0xff]
        %v677 = vld [vmem:[%s1 + $0x188] sm:$0xff]
        %v678 = vld [vmem:[%s1 + $0x190] sm:$0xff]
        %v679 = vld [vmem:[%s1 + $0x198] sm:$0xff]
        %v680 = vld [vmem:[%s1 + $0x1a0] sm:$0xff]
        %v681 = vld [vmem:[%s1 + $0x1a8] sm:$0xff]
        %v682 = vld [vmem:[%s1 + $0x1b0] sm:$0xff]
        %v683 = vld [vmem:[%s1 + $0x1b8] sm:$0xff]
        %v684 = vld [vmem:[%s1 + $0x1c0] sm:$0xff]
        %v685 = vld [vmem:[%s1 + $0x1c8] sm:$0xff]
        %v686 = vld [vmem:[%s1 + $0x1d0] sm:$0xff]
        %v687 = vld [vmem:[%s1 + $0x1d8] sm:$0xff]
        %v688 = vld [vmem:[%s1 + $0x1e0] sm:$0xff]
        %v689 = vld [vmem:[%s1 + $0x1e8] sm:$0xff]
        %v690 = vld [vmem:[%s1 + $0x1f0] sm:$0xff]
        %v691 = vld [vmem:[%s1 + $0x1f8] sm:$0xff]
        %v692 = vld [vmem:[%s1 + $0x200] sm:$0xff]
        %v693 = vld [vmem:[%s1 + $0x208] sm:$0xff]
        %v694 = vld [vmem:[%s1 + $0x210] sm:$0xff]
        %v695 = vld [vmem:[%s1 + $0x218] sm:$0xff]
        %v696 = vld [vmem:[%s1 + $0x220] sm:$0xff]
        %v697 = vld [vmem:[%s1 + $0x228] sm:$0xff]
        %v698 = vld [vmem:[%s1 + $0x230] sm:$0xff]
        %v699 = vld [vmem:[%s1 + $0x238] sm:$0xff]
        %v700 = vld [vmem:[%s1 + $0x240] sm:$0xff]
        %v701 = vld [vmem:[%s1 + $0x248] sm:$0xff]
        %v702 = vld [vmem:[%s1 + $0x250] sm:$0xff]
        %v703 = vld [vmem:[%s1 + $0x258] sm:$0xff]
        %v704 = vld [vmem:[%s1 + $0x260] sm:$0xff]
        %v705 = vld [vmem:[%s1 + $0x268] sm:$0xff]
        %v706 = vld [vmem:[%s1 + $0x270] sm:$0xff]
        %v707 = vld [vmem:[%s1 + $0x278] sm:$0xff]
        %v708 = vld [vmem:[%s1 + $0x280] sm:$0xff]
        %v709 = vld [vmem:[%s1 + $0x288] sm:$0xff]
        %v710 = vld [vmem:[%s1 + $0x290] sm:$0xff]
        %v711 = vld [vmem:[%s1 + $0x298] sm:$0xff]
        %v712 = vld [vmem:[%s1 + $0x2a0] sm:$0xff]
        %v713 = vld [vmem:[%s1 + $0x2a8] sm:$0xff]
        %v714 = vld [vmem:[%s1 + $0x2b0] sm:$0xff]
        %v715 = vld [vmem:[%s1 + $0x2b8] sm:$0xff]
        %v716 = vld [vmem:[%s1 + $0x2c0] sm:$0xff]
        %v717 = vld [vmem:[%s1 + $0x2c8] sm:$0xff]
        %v718 = vld [vmem:[%s1 + $0x2d0] sm:$0xff]
        %v719 = vld [vmem:[%s1 + $0x2d8] sm:$0xff]
        %v720 = vld [vmem:[%s1 + $0x2e0] sm:$0xff]
        %v721 = vld [vmem:[%s1 + $0x2e8] sm:$0xff]
        %v722 = vld [vmem:[%s1 + $0x2f0] sm:$0xff]
        %v723 = vld [vmem:[%s1 + $0x2f8] sm:$0xff]
        %v724 = vld [vmem:[%s1 + $0x300] sm:$0xff]
        %v725 = vld [vmem:[%s1 + $0x308] sm:$0xff]
        %v726 = vld [vmem:[%s1 + $0x310] sm:$0xff]
        %v727 = vld [vmem:[%s1 + $0x318] sm:$0xff]
        %v728 = vld [vmem:[%s1 + $0x320] sm:$0xff]
        %v729 = vld [vmem:[%s1 + $0x328] sm:$0xff]
        %v730 = vld [vmem:[%s1 + $0x330] sm:$0xff]
        %v731 = vld [vmem:[%s1 + $0x338] sm:$0xff]
        %v732 = vld [vmem:[%s1 + $0x340] sm:$0xff]
        %v733 = vld [vmem:[%s1 + $0x348] sm:$0xff]
        %v734 = vld [vmem:[%s1 + $0x350] sm:$0xff]
        %v735 = vld [vmem:[%s1 + $0x358] sm:$0xff]
        %v736 = vld [vmem:[%s1 + $0x360] sm:$0xff]
        %v737 = vld [vmem:[%s1 + $0x368] sm:$0xff]
        %v738 = vld [vmem:[%s1 + $0x370] sm:$0xff]
        %v739 = vld [vmem:[%s1 + $0x378] sm:$0xff]
        %v740 = vld [vmem:[%s1 + $0x380] sm:$0xff]
        %v741 = vld [vmem:[%s1 + $0x388] sm:$0xff]
        %v742 = vld [vmem:[%s1 + $0x390] sm:$0xff]
        %v743 = vld [vmem:[%s1 + $0x398] sm:$0xff]
        %v744 = vld [vmem:[%s1 + $0x3a0] sm:$0xff]
        %v745 = vld [vmem:[%s1 + $0x3a8] sm:$0xff]
        %v746 = vld [vmem:[%s1 + $0x3b0] sm:$0xff]
        %v747 = vld [vmem:[%s1 + $0x3b8] sm:$0xff]
        %v748 = vld [vmem:[%s1 + $0x3c0] sm:$0xff]
        %v749 = vld [vmem:[%s1 + $0x3c8] sm:$0xff]
        %v750 = vld [vmem:[%s1 + $0x3d0] sm:$0xff]
        %v751 = vld [vmem:[%s1 + $0x3d8] sm:$0xff]
        %v752 = vld [vmem:[%s1 + $0x3e0] sm:$0xff]
        %v753 = vld [vmem:[%s1 + $0x3e8] sm:$0xff]
        %v754 = vld [vmem:[%s1 + $0x3f0] sm:$0xff]
        %v755 = vld [vmem:[%s1 + $0x3f8] sm:$0xff]
        %v756 = vld [vmem:[%s1 + $0x400] sm:$0xff]
        %v757 = vld [vmem:[%s1 + $0x408] sm:$0xff]
        %v758 = vld [vmem:[%s1 + $0x410] sm:$0xff]
        %v759 = vld [vmem:[%s1 + $0x418] sm:$0xff]
        %v760 = vld [vmem:[%s1 + $0x420] sm:$0xff]
        %v761 = vld [vmem:[%s1 + $0x428] sm:$0xff]
        %v762 = vld [vmem:[%s1 + $0x430] sm:$0xff]
        %v763 = vld [vmem:[%s1 + $0x438] sm:$0xff]
        %v764 = vld [vmem:[%s1 + $0x440] sm:$0xff]
        %v765 = vld [vmem:[%s1 + $0x448] sm:$0xff]
        %v766 = vld [vmem:[%s1 + $0x450] sm:$0xff]
        %v767 = vld [vmem:[%s1 + $0x458] sm:$0xff]
        %v768 = vld [vmem:[%s1 + $0x460] sm:$0xff]
        %v769 = vld [vmem:[%s1 + $0x468] sm:$0xff]
        %v770 = vld [vmem:[%s1 + $0x470] sm:$0xff]
        %v771 = vld [vmem:[%s1 + $0x478] sm:$0xff]
        %v772 = vld [vmem:[%s2] sm:$0x1]
        %v774 = vlaneseq
        %v775 = vshrl.u32 %v774, 7
        %v776 = vsub.s32 0, %v775
        %v777 = vrot.slane %v772, %v776
        %779 = vmatprep.subr.mxu0 0.0
        %780 = vmatpush1.msra.mxu0 %v643
        %781 = vmatprep.subr.mxu0 0.0
        %782 = vmatpush1.msra.mxu0 %v642
        %783 = vmatprep.subr.mxu0 0.0
        %784 = vmatpush1.msra.mxu0 %v641
        %785 = vmatprep.subr.mxu0 0.0
        %786 = vmatpush1.msra.mxu0 %v640
        %787 = vmatprep.subr.mxu0 0.0
        %788 = vmatpush1.msra.mxu0 %v639
        %789 = vmatprep.subr.mxu0 0.0
        %790 = vmatpush1.msra.mxu0 %v638
        %791 = vmatprep.subr.mxu0 0.0
        %792 = vmatpush1.msra.mxu0 %v637
        %793 = vmatprep.subr.mxu0 0.0
        %794 = vmatpush1.msra.mxu0 %v636
        %795 = vmatprep.subr.mxu0 0.0
        %796 = vmatpush1.msra.mxu0 %v635
        %797 = vmatprep.subr.mxu0 0.0
        %798 = vmatpush1.msra.mxu0 %v634
        %799 = vmatprep.subr.mxu0 0.0
        %800 = vmatpush1.msra.mxu0 %v633
        %801 = vmatprep.subr.mxu0 0.0
        %802 = vmatpush1.msra.mxu0 %v632
        %803 = vmatprep.subr.mxu0 0.0
        %804 = vmatpush1.msra.mxu0 %v631
        %805 = vmatprep.subr.mxu0 0.0
        %806 = vmatpush1.msra.mxu0 %v630
        %807 = vmatprep.subr.mxu0 0.0
        %808 = vmatpush1.msra.mxu0 %v629
        %809 = vmatprep.subr.mxu0 0.0
        %810 = vmatpush1.msra.mxu0 %v628
        %811 = vmatprep.subr.mxu0 0.0
        %812 = vmatpush2.msra.mxu0 %v659
        %813 = vmatprep.subr.mxu0 0.0
        %814 = vmatpush2.msra.mxu0 %v658
        %815 = vmatprep.subr.mxu0 0.0
        %816 = vmatpush2.msra.mxu0 %v657
        %817 = vmatprep.subr.mxu0 0.0
        %818 = vmatpush2.msra.mxu0 %v656
        %819 = vmatprep.subr.mxu0 0.0
        %820 = vmatpush2.msra.mxu0 %v655
        %821 = vmatprep.subr.mxu0 0.0
        %822 = vmatpush2.msra.mxu0 %v654
        %823 = vmatprep.subr.mxu0 0.0
        %824 = vmatpush2.msra.mxu0 %v653
        %825 = vmatprep.subr.mxu0 0.0
        %826 = vmatpush2.msra.mxu0 %v652
        %827 = vmatprep.subr.mxu0 0.0
        %828 = vmatpush2.msra.mxu0 %v651
        %829 = vmatprep.subr.mxu0 0.0
        %830 = vmatpush2.msra.mxu0 %v650
        %831 = vmatprep.subr.mxu0 0.0
        %832 = vmatpush2.msra.mxu0 %v649
        %833 = vmatprep.subr.mxu0 0.0
        %834 = vmatpush2.msra.mxu0 %v648
        %835 = vmatprep.subr.mxu0 0.0
        %836 = vmatpush2.msra.mxu0 %v647
        %837 = vmatprep.subr.mxu0 0.0
        %838 = vmatpush2.msra.mxu0 %v646
        %839 = vmatprep.subr.mxu0 0.0
        %840 = vmatpush2.msra.mxu0 %v645
        %841 = vmatprep.subr.mxu0 0.0
        %842 = vmatpush2.msra.mxu0 %v644
        %843 = vmatprep.mubr.f32.mxu0 %v466
        %844 = vmatmul.mubr.f32.gmra.mxu0 %v446
        %v845 = vpop.f32.mrf.mxu0
        %v846 = vadd.f32 %v777, %v845
        %v847 = vpop.f32.mrf.mxu0
        %848 = vmatprep.mubr.f32.mxu0 %v467
        %849 = vmatmul.mubr.f32.gmra.mxu0 %v447
        %v850 = vpop.f32.mrf.mxu0
        %v851 = vadd.f32 %v777, %v850
        %v852 = vpop.f32.mrf.mxu0
        %853 = vmatprep.mubr.f32.mxu0 %v468
        %854 = vmatmul.mubr.f32.gmra.mxu0 %v448
        %v855 = vpop.f32.mrf.mxu0
        %v856 = vadd.f32 %v777, %v855
        %v857 = vpop.f32.mrf.mxu0
        %858 = vmatprep.mubr.f32.mxu0 %v469
        %859 = vmatmul.mubr.f32.gmra.mxu0 %v449
        %v860 = vpop.f32.mrf.mxu0
        %v861 = vadd.f32 %v777, %v860
        %v862 = vpop.f32.mrf.mxu0
        %863 = vmatprep.mubr.f32.mxu0 %v470
        %864 = vmatmul.mubr.f32.gmra.mxu0 %v450
        %v865 = vpop.f32.mrf.mxu0
        %v866 = vadd.f32 %v777, %v865
        %v867 = vpop.f32.mrf.mxu0
        %868 = vmatprep.mubr.f32.mxu0 %v471
        %869 = vmatmul.mubr.f32.gmra.mxu0 %v451
        %v870 = vpop.f32.mrf.mxu0
        %v871 = vadd.f32 %v777, %v870
        %v872 = vpop.f32.mrf.mxu0
        %873 = vmatprep.mubr.f32.mxu0 %v472
        %874 = vmatmul.mubr.f32.gmra.mxu0 %v452
        %v875 = vpop.f32.mrf.mxu0
        %v876 = vadd.f32 %v777, %v875
        %v877 = vpop.f32.mrf.mxu0
        %878 = vmatprep.mubr.f32.mxu0 %v473
        %879 = vmatmul.mubr.f32.gmra.mxu0 %v453
        %v880 = vpop.f32.mrf.mxu0
        %v881 = vadd.f32 %v777, %v880
        %v882 = vpop.f32.mrf.mxu0
        %883 = vmatprep.mubr.f32.mxu0 %v474
        %884 = vmatmul.mubr.f32.gmra.mxu0 %v454
        %v885 = vpop.f32.mrf.mxu0
        %v886 = vadd.f32 %v777, %v885
        %v887 = vpop.f32.mrf.mxu0
        %888 = vmatprep.mubr.f32.mxu0 %v475
        %889 = vmatmul.mubr.f32.gmra.mxu0 %v455
        %v890 = vpop.f32.mrf.mxu0
        %v891 = vadd.f32 %v777, %v890
        %v892 = vpop.f32.mrf.mxu0
        %893 = vmatprep.mubr.f32.mxu0 %v476
        %894 = vmatmul.mubr.f32.gmra.mxu0 %v456
        %v895 = vpop.f32.mrf.mxu0
        %v896 = vadd.f32 %v777, %v895
        %v897 = vpop.f32.mrf.mxu0
        %898 = vmatprep.mubr.f32.mxu0 %v477
        %899 = vmatmul.mubr.f32.gmra.mxu0 %v457
        %v900 = vpop.f32.mrf.mxu0
        %v901 = vadd.f32 %v777, %v900
        %v902 = vpop.f32.mrf.mxu0
        %903 = vmatprep.mubr.f32.mxu0 %v478
        %904 = vmatmul.mubr.f32.gmra.mxu0 %v458
        %v905 = vpop.f32.mrf.mxu0
        %v906 = vadd.f32 %v777, %v905
        %v907 = vpop.f32.mrf.mxu0
        %908 = vmatprep.mubr.f32.mxu0 %v479
        %909 = vmatmul.mubr.f32.gmra.mxu0 %v459
        %v910 = vpop.f32.mrf.mxu0
        %v911 = vadd.f32 %v777, %v910
        %v912 = vpop.f32.mrf.mxu0
        %913 = vmatprep.mubr.f32.mxu0 %v480
        %914 = vmatmul.mubr.f32.gmra.mxu0 %v460
        %v915 = vpop.f32.mrf.mxu0
        %v916 = vadd.f32 %v777, %v915
        %v917 = vpop.f32.mrf.mxu0
        %918 = vmatprep.mubr.f32.mxu0 %v481
        %919 = vmatmul.mubr.f32.gmra.mxu0 %v461
        %v920 = vpop.f32.mrf.mxu0
        %v921 = vadd.f32 %v777, %v920
        %v922 = vpop.f32.mrf.mxu0
        %923 = vmatprep.mubr.f32.mxu0 %v482
        %924 = vmatmul.mubr.f32.gmra.mxu0 %v462
        %v925 = vpop.f32.mrf.mxu0
        %v926 = vadd.f32 %v777, %v925
        %v927 = vpop.f32.mrf.mxu0
        %928 = vmatprep.mubr.f32.mxu0 %v483
        %929 = vmatmul.mubr.f32.gmra.mxu0 %v463
        %v930 = vpop.f32.mrf.mxu0
        %v931 = vadd.f32 %v777, %v930
        %v932 = vpop.f32.mrf.mxu0
        %933 = vmatprep.mubr.f32.mxu0 %v484
        %934 = vmatmul.mubr.f32.gmra.mxu0 %v464
        %v935 = vpop.f32.mrf.mxu0
        %v936 = vadd.f32 %v777, %v935
        %v937 = vpop.f32.mrf.mxu0
        %938 = vmatprep.mubr.f32.mxu0 %v485
        %939 = vmatmul.mubr.f32.gmra.mxu0 %v465
        %v940 = vpop.f32.mrf.mxu0
        %v941 = vadd.f32 %v777, %v940
        %v942 = vpop.f32.mrf.mxu0
        %943 = vdwg.mxu0
        %944 = vmatprep.subr.mxu0 0.0
        %945 = vmatpush1.msra.mxu0 %v675
        %946 = vmatprep.subr.mxu0 0.0
        %947 = vmatpush1.msra.mxu0 %v674
        %948 = vmatprep.subr.mxu0 0.0
        %949 = vmatpush1.msra.mxu0 %v673
        %950 = vmatprep.subr.mxu0 0.0
        %951 = vmatpush1.msra.mxu0 %v672
        %952 = vmatprep.subr.mxu0 0.0
        %953 = vmatpush1.msra.mxu0 %v671
        %954 = vmatprep.subr.mxu0 0.0
        %955 = vmatpush1.msra.mxu0 %v670
        %956 = vmatprep.subr.mxu0 0.0
        %957 = vmatpush1.msra.mxu0 %v669
        %958 = vmatprep.subr.mxu0 0.0
        %959 = vmatpush1.msra.mxu0 %v668
        %960 = vmatprep.subr.mxu0 0.0
        %961 = vmatpush1.msra.mxu0 %v667
        %962 = vmatprep.subr.mxu0 0.0
        %963 = vmatpush1.msra.mxu0 %v666
        %964 = vmatprep.subr.mxu0 0.0
        %965 = vmatpush1.msra.mxu0 %v665
        %966 = vmatprep.subr.mxu0 0.0
        %967 = vmatpush1.msra.mxu0 %v664
        %968 = vmatprep.subr.mxu0 0.0
        %969 = vmatpush1.msra.mxu0 %v663
        %970 = vmatprep.subr.mxu0 0.0
        %971 = vmatpush1.msra.mxu0 %v662
        %972 = vmatprep.subr.mxu0 0.0
        %973 = vmatpush1.msra.mxu0 %v661
        %974 = vmatprep.subr.mxu0 0.0
        %975 = vmatpush1.msra.mxu0 %v660
        %976 = vmatprep.subr.mxu0 0.0
        %977 = vmatpush2.msra.mxu0 %v691
        %978 = vmatprep.subr.mxu0 0.0
        %979 = vmatpush2.msra.mxu0 %v690
        %980 = vmatprep.subr.mxu0 0.0
        %981 = vmatpush2.msra.mxu0 %v689
        %982 = vmatprep.subr.mxu0 0.0
        %983 = vmatpush2.msra.mxu0 %v688
        %984 = vmatprep.subr.mxu0 0.0
        %985 = vmatpush2.msra.mxu0 %v687
        %986 = vmatprep.subr.mxu0 0.0
        %987 = vmatpush2.msra.mxu0 %v686
        %988 = vmatprep.subr.mxu0 0.0
        %989 = vmatpush2.msra.mxu0 %v685
        %990 = vmatprep.subr.mxu0 0.0
        %991 = vmatpush2.msra.mxu0 %v684
        %992 = vmatprep.subr.mxu0 0.0
        %993 = vmatpush2.msra.mxu0 %v683
        %994 = vmatprep.subr.mxu0 0.0
        %995 = vmatpush2.msra.mxu0 %v682
        %996 = vmatprep.subr.mxu0 0.0
        %997 = vmatpush2.msra.mxu0 %v681
        %998 = vmatprep.subr.mxu0 0.0
        %999 = vmatpush2.msra.mxu0 %v680
        %1000 = vmatprep.subr.mxu0 0.0
        %1001 = vmatpush2.msra.mxu0 %v679
        %1002 = vmatprep.subr.mxu0 0.0
        %1003 = vmatpush2.msra.mxu0 %v678
        %1004 = vmatprep.subr.mxu0 0.0
        %1005 = vmatpush2.msra.mxu0 %v677
        %1006 = vmatprep.subr.mxu0 0.0
        %1007 = vmatpush2.msra.mxu0 %v676
        %1008 = vmatprep.mubr.f32.mxu0 %v507
        %1009 = vmatmul.mubr.f32.gmra.mxu0 %v486
        %v1010 = vpop.f32.mrf.mxu0
        %v1011 = vadd.f32 %v846, %v1010
        %v1012 = vpop.f32.mrf.mxu0
        %1013 = vmatprep.mubr.f32.mxu0 %v508
        %1014 = vmatmul.mubr.f32.gmra.mxu0 %v487
        %v1015 = vpop.f32.mrf.mxu0
        %v1016 = vadd.f32 %v851, %v1015
        %v1017 = vpop.f32.mrf.mxu0
        %1018 = vmatprep.mubr.f32.mxu0 %v509
        %1019 = vmatmul.mubr.f32.gmra.mxu0 %v488
        %v1020 = vpop.f32.mrf.mxu0
        %v1021 = vadd.f32 %v856, %v1020
        %v1022 = vpop.f32.mrf.mxu0
        %1023 = vmatprep.mubr.f32.mxu0 %v510
        %1024 = vmatmul.mubr.f32.gmra.mxu0 %v489
        %v1025 = vpop.f32.mrf.mxu0
        %v1026 = vadd.f32 %v861, %v1025
        %v1027 = vpop.f32.mrf.mxu0
        %1028 = vmatprep.mubr.f32.mxu0 %v511
        %1029 = vmatmul.mubr.f32.gmra.mxu0 %v490
        %v1030 = vpop.f32.mrf.mxu0
        %v1031 = vadd.f32 %v866, %v1030
        %v1032 = vpop.f32.mrf.mxu0
        %1033 = vmatprep.mubr.f32.mxu0 %v512
        %1034 = vmatmul.mubr.f32.gmra.mxu0 %v491
        %v1035 = vpop.f32.mrf.mxu0
        %v1036 = vadd.f32 %v871, %v1035
        %v1037 = vpop.f32.mrf.mxu0
        %1038 = vmatprep.mubr.f32.mxu0 %v513
        %1039 = vmatmul.mubr.f32.gmra.mxu0 %v492
        %v1040 = vpop.f32.mrf.mxu0
        %v1041 = vadd.f32 %v876, %v1040
        %v1042 = vpop.f32.mrf.mxu0
        %1043 = vmatprep.mubr.f32.mxu0 %v514
        %1044 = vmatmul.mubr.f32.gmra.mxu0 %v493
        %v1045 = vpop.f32.mrf.mxu0
        %v1046 = vadd.f32 %v881, %v1045
        %v1047 = vpop.f32.mrf.mxu0
        %1048 = vmatprep.mubr.f32.mxu0 %v515
        %1049 = vmatmul.mubr.f32.gmra.mxu0 %v494
        %v1050 = vpop.f32.mrf.mxu0
        %v1051 = vadd.f32 %v886, %v1050
        %v1052 = vpop.f32.mrf.mxu0
        %1053 = vmatprep.mubr.f32.mxu0 %v516
        %1054 = vmatmul.mubr.f32.gmra.mxu0 %v495
        %v1055 = vpop.f32.mrf.mxu0
        %v1056 = vadd.f32 %v891, %v1055
        %v1057 = vpop.f32.mrf.mxu0
        %1058 = vmatprep.mubr.f32.mxu0 %v517
        %1059 = vmatmul.mubr.f32.gmra.mxu0 %v496
        %v1060 = vpop.f32.mrf.mxu0
        %v1061 = vadd.f32 %v896, %v1060
        %v1062 = vpop.f32.mrf.mxu0
        %1063 = vmatprep.mubr.f32.mxu0 %v518
        %1064 = vmatmul.mubr.f32.gmra.mxu0 %v497
        %v1065 = vpop.f32.mrf.mxu0
        %v1066 = vadd.f32 %v901, %v1065
        %v1067 = vpop.f32.mrf.mxu0
        %1068 = vmatprep.mubr.f32.mxu0 %v519
        %1069 = vmatmul.mubr.f32.gmra.mxu0 %v498
        %v1070 = vpop.f32.mrf.mxu0
        %v1071 = vadd.f32 %v906, %v1070
        %v1072 = vpop.f32.mrf.mxu0
        %1073 = vmatprep.mubr.f32.mxu0 %v520
        %1074 = vmatmul.mubr.f32.gmra.mxu0 %v499
        %v1075 = vpop.f32.mrf.mxu0
        %v1076 = vadd.f32 %v911, %v1075
        %v1077 = vpop.f32.mrf.mxu0
        %1078 = vmatprep.mubr.f32.mxu0 %v521
        %1079 = vmatmul.mubr.f32.gmra.mxu0 %v500
        %v1080 = vpop.f32.mrf.mxu0
        %v1081 = vadd.f32 %v916, %v1080
        %v1082 = vpop.f32.mrf.mxu0
        %1083 = vmatprep.mubr.f32.mxu0 %v522
        %1084 = vmatmul.mubr.f32.gmra.mxu0 %v501
        %v1085 = vpop.f32.mrf.mxu0
        %v1086 = vadd.f32 %v921, %v1085
        %v1087 = vpop.f32.mrf.mxu0
        %1088 = vmatprep.mubr.f32.mxu0 %v523
        %1089 = vmatmul.mubr.f32.gmra.mxu0 %v502
        %v1090 = vpop.f32.mrf.mxu0
        %v1091 = vadd.f32 %v926, %v1090
        %v1092 = vpop.f32.mrf.mxu0
        %1093 = vmatprep.mubr.f32.mxu0 %v524
        %1094 = vmatmul.mubr.f32.gmra.mxu0 %v503
        %v1095 = vpop.f32.mrf.mxu0
        %v1096 = vadd.f32 %v931, %v1095
        %v1097 = vpop.f32.mrf.mxu0
        %1098 = vmatprep.mubr.f32.mxu0 %v525
        %1099 = vmatmul.mubr.f32.gmra.mxu0 %v504
        %v1100 = vpop.f32.mrf.mxu0
        %v1101 = vadd.f32 %v936, %v1100
        %v1102 = vpop.f32.mrf.mxu0
        %1103 = vmatprep.mubr.f32.mxu0 %v526
        %1104 = vmatmul.mubr.f32.gmra.mxu0 %v505
        %v1105 = vpop.f32.mrf.mxu0
        %v1106 = vadd.f32 %v941, %v1105
        %v1107 = vpop.f32.mrf.mxu0
        %1108 = vdwg.mxu0
        %1109 = vmatprep.subr.mxu0 0.0
        %1110 = vmatpush1.msra.mxu0 %v707
        %1111 = vmatprep.subr.mxu0 0.0
        %1112 = vmatpush1.msra.mxu0 %v706
        %1113 = vmatprep.subr.mxu0 0.0
        %1114 = vmatpush1.msra.mxu0 %v705
        %1115 = vmatprep.subr.mxu0 0.0
        %1116 = vmatpush1.msra.mxu0 %v704
        %1117 = vmatprep.subr.mxu0 0.0
        %1118 = vmatpush1.msra.mxu0 %v703
        %1119 = vmatprep.subr.mxu0 0.0
        %1120 = vmatpush1.msra.mxu0 %v702
        %1121 = vmatprep.subr.mxu0 0.0
        %1122 = vmatpush1.msra.mxu0 %v701
        %1123 = vmatprep.subr.mxu0 0.0
        %1124 = vmatpush1.msra.mxu0 %v700
        %1125 = vmatprep.subr.mxu0 0.0
        %1126 = vmatpush1.msra.mxu0 %v699
        %1127 = vmatprep.subr.mxu0 0.0
        %1128 = vmatpush1.msra.mxu0 %v698
        %1129 = vmatprep.subr.mxu0 0.0
        %1130 = vmatpush1.msra.mxu0 %v697
        %1131 = vmatprep.subr.mxu0 0.0
        %1132 = vmatpush1.msra.mxu0 %v696
        %1133 = vmatprep.subr.mxu0 0.0
        %1134 = vmatpush1.msra.mxu0 %v695
        %1135 = vmatprep.subr.mxu0 0.0
        %1136 = vmatpush1.msra.mxu0 %v694
        %1137 = vmatprep.subr.mxu0 0.0
        %1138 = vmatpush1.msra.mxu0 %v693
        %1139 = vmatprep.subr.mxu0 0.0
        %1140 = vmatpush1.msra.mxu0 %v692
        %1141 = vmatprep.subr.mxu0 0.0
        %1142 = vmatpush2.msra.mxu0 %v723
        %1143 = vmatprep.subr.mxu0 0.0
        %1144 = vmatpush2.msra.mxu0 %v722
        %1145 = vmatprep.subr.mxu0 0.0
        %1146 = vmatpush2.msra.mxu0 %v721
        %1147 = vmatprep.subr.mxu0 0.0
        %1148 = vmatpush2.msra.mxu0 %v720
        %1149 = vmatprep.subr.mxu0 0.0
        %1150 = vmatpush2.msra.mxu0 %v719
        %1151 = vmatprep.subr.mxu0 0.0
        %1152 = vmatpush2.msra.mxu0 %v718
        %1153 = vmatprep.subr.mxu0 0.0
        %1154 = vmatpush2.msra.mxu0 %v717
        %1155 = vmatprep.subr.mxu0 0.0
        %1156 = vmatpush2.msra.mxu0 %v716
        %1157 = vmatprep.subr.mxu0 0.0
        %1158 = vmatpush2.msra.mxu0 %v715
        %1159 = vmatprep.subr.mxu0 0.0
        %1160 = vmatpush2.msra.mxu0 %v714
        %1161 = vmatprep.subr.mxu0 0.0
        %1162 = vmatpush2.msra.mxu0 %v713
        %1163 = vmatprep.subr.mxu0 0.0
        %1164 = vmatpush2.msra.mxu0 %v712
        %1165 = vmatprep.subr.mxu0 0.0
        %1166 = vmatpush2.msra.mxu0 %v711
        %1167 = vmatprep.subr.mxu0 0.0
        %1168 = vmatpush2.msra.mxu0 %v710
        %1169 = vmatprep.subr.mxu0 0.0
        %1170 = vmatpush2.msra.mxu0 %v709
        %1171 = vmatprep.subr.mxu0 0.0
        %1172 = vmatpush2.msra.mxu0 %v708
        %1173 = vmatprep.mubr.f32.mxu0 %v547
        %1174 = vmatmul.mubr.f32.gmra.mxu0 %v527
        %v1175 = vpop.f32.mrf.mxu0
        %v1176 = vadd.f32 %v1011, %v1175
        %v1177 = vpop.f32.mrf.mxu0
        %1178 = vmatprep.mubr.f32.mxu0 %v548
        %1179 = vmatmul.mubr.f32.gmra.mxu0 %v528
        %v1180 = vpop.f32.mrf.mxu0
        %v1181 = vadd.f32 %v1016, %v1180
        %v1182 = vpop.f32.mrf.mxu0
        %1183 = vmatprep.mubr.f32.mxu0 %v549
        %1184 = vmatmul.mubr.f32.gmra.mxu0 %v529
        %v1185 = vpop.f32.mrf.mxu0
        %v1186 = vadd.f32 %v1021, %v1185
        %v1187 = vpop.f32.mrf.mxu0
        %1188 = vmatprep.mubr.f32.mxu0 %v550
        %1189 = vmatmul.mubr.f32.gmra.mxu0 %v530
        %v1190 = vpop.f32.mrf.mxu0
        %v1191 = vadd.f32 %v1026, %v1190
        %v1192 = vpop.f32.mrf.mxu0
        %1193 = vmatprep.mubr.f32.mxu0 %v551
        %1194 = vmatmul.mubr.f32.gmra.mxu0 %v531
        %v1195 = vpop.f32.mrf.mxu0
        %v1196 = vadd.f32 %v1031, %v1195
        %v1197 = vpop.f32.mrf.mxu0
        %1198 = vmatprep.mubr.f32.mxu0 %v552
        %1199 = vmatmul.mubr.f32.gmra.mxu0 %v532
        %v1200 = vpop.f32.mrf.mxu0
        %v1201 = vadd.f32 %v1036, %v1200
        %v1202 = vpop.f32.mrf.mxu0
        %1203 = vmatprep.mubr.f32.mxu0 %v553
        %1204 = vmatmul.mubr.f32.gmra.mxu0 %v533
        %v1205 = vpop.f32.mrf.mxu0
        %v1206 = vadd.f32 %v1041, %v1205
        %v1207 = vpop.f32.mrf.mxu0
        %1208 = vmatprep.mubr.f32.mxu0 %v554
        %1209 = vmatmul.mubr.f32.gmra.mxu0 %v534
        %v1210 = vpop.f32.mrf.mxu0
        %v1211 = vadd.f32 %v1046, %v1210
        %v1212 = vpop.f32.mrf.mxu0
        %1213 = vmatprep.mubr.f32.mxu0 %v555
        %1214 = vmatmul.mubr.f32.gmra.mxu0 %v535
        %v1215 = vpop.f32.mrf.mxu0
        %v1216 = vadd.f32 %v1051, %v1215
        %v1217 = vpop.f32.mrf.mxu0
        %1218 = vmatprep.mubr.f32.mxu0 %v556
        %1219 = vmatmul.mubr.f32.gmra.mxu0 %v536
        %v1220 = vpop.f32.mrf.mxu0
        %v1221 = vadd.f32 %v1056, %v1220
        %v1222 = vpop.f32.mrf.mxu0
        %1223 = vmatprep.mubr.f32.mxu0 %v557
        %1224 = vmatmul.mubr.f32.gmra.mxu0 %v537
        %v1225 = vpop.f32.mrf.mxu0
        %v1226 = vadd.f32 %v1061, %v1225
        %v1227 = vpop.f32.mrf.mxu0
        %1228 = vmatprep.mubr.f32.mxu0 %v558
        %1229 = vmatmul.mubr.f32.gmra.mxu0 %v538
        %v1230 = vpop.f32.mrf.mxu0
        %v1231 = vadd.f32 %v1066, %v1230
        %v1232 = vpop.f32.mrf.mxu0
        %1233 = vmatprep.mubr.f32.mxu0 %v559
        %1234 = vmatmul.mubr.f32.gmra.mxu0 %v539
        %v1235 = vpop.f32.mrf.mxu0
        %v1236 = vadd.f32 %v1071, %v1235
        %v1237 = vpop.f32.mrf.mxu0
        %1238 = vmatprep.mubr.f32.mxu0 %v560
        %1239 = vmatmul.mubr.f32.gmra.mxu0 %v540
        %v1240 = vpop.f32.mrf.mxu0
        %v1241 = vadd.f32 %v1076, %v1240
        %v1242 = vpop.f32.mrf.mxu0
        %1243 = vmatprep.mubr.f32.mxu0 %v561
        %1244 = vmatmul.mubr.f32.gmra.mxu0 %v541
        %v1245 = vpop.f32.mrf.mxu0
        %v1246 = vadd.f32 %v1081, %v1245
        %v1247 = vpop.f32.mrf.mxu0
        %1248 = vmatprep.mubr.f32.mxu0 %v562
        %1249 = vmatmul.mubr.f32.gmra.mxu0 %v542
        %v1250 = vpop.f32.mrf.mxu0
        %v1251 = vadd.f32 %v1086, %v1250
        %v1252 = vpop.f32.mrf.mxu0
        %1253 = vmatprep.mubr.f32.mxu0 %v563
        %1254 = vmatmul.mubr.f32.gmra.mxu0 %v543
        %v1255 = vpop.f32.mrf.mxu0
        %v1256 = vadd.f32 %v1091, %v1255
        %v1257 = vpop.f32.mrf.mxu0
        %1258 = vmatprep.mubr.f32.mxu0 %v564
        %1259 = vmatmul.mubr.f32.gmra.mxu0 %v544
        %v1260 = vpop.f32.mrf.mxu0
        %v1261 = vadd.f32 %v1096, %v1260
        %v1262 = vpop.f32.mrf.mxu0
        %1263 = vmatprep.mubr.f32.mxu0 %v565
        %1264 = vmatmul.mubr.f32.gmra.mxu0 %v545
        %v1265 = vpop.f32.mrf.mxu0
        %v1266 = vadd.f32 %v1101, %v1265
        %v1267 = vpop.f32.mrf.mxu0
        %1268 = vmatprep.mubr.f32.mxu0 %v566
        %1269 = vmatmul.mubr.f32.gmra.mxu0 %v546
        %v1270 = vpop.f32.mrf.mxu0
        %v1271 = vadd.f32 %v1106, %v1270
        %v1272 = vpop.f32.mrf.mxu0
        %1273 = vdwg.mxu0
        %1274 = vmatprep.subr.mxu0 0.0
        %1275 = vmatpush1.msra.mxu0 %v739
        %1276 = vmatprep.subr.mxu0 0.0
        %1277 = vmatpush1.msra.mxu0 %v738
        %1278 = vmatprep.subr.mxu0 0.0
        %1279 = vmatpush1.msra.mxu0 %v737
        %1280 = vmatprep.subr.mxu0 0.0
        %1281 = vmatpush1.msra.mxu0 %v736
        %1282 = vmatprep.subr.mxu0 0.0
        %1283 = vmatpush1.msra.mxu0 %v735
        %1284 = vmatprep.subr.mxu0 0.0
        %1285 = vmatpush1.msra.mxu0 %v734
        %1286 = vmatprep.subr.mxu0 0.0
        %1287 = vmatpush1.msra.mxu0 %v733
        %1288 = vmatprep.subr.mxu0 0.0
        %1289 = vmatpush1.msra.mxu0 %v732
        %1290 = vmatprep.subr.mxu0 0.0
        %1291 = vmatpush1.msra.mxu0 %v731
        %1292 = vmatprep.subr.mxu0 0.0
        %1293 = vmatpush1.msra.mxu0 %v730
        %1294 = vmatprep.subr.mxu0 0.0
        %1295 = vmatpush1.msra.mxu0 %v729
        %1296 = vmatprep.subr.mxu0 0.0
        %1297 = vmatpush1.msra.mxu0 %v728
        %1298 = vmatprep.subr.mxu0 0.0
        %1299 = vmatpush1.msra.mxu0 %v727
        %1300 = vmatprep.subr.mxu0 0.0
        %1301 = vmatpush1.msra.mxu0 %v726
        %1302 = vmatprep.subr.mxu0 0.0
        %1303 = vmatpush1.msra.mxu0 %v725
        %1304 = vmatprep.subr.mxu0 0.0
        %1305 = vmatpush1.msra.mxu0 %v724
        %1306 = vmatprep.subr.mxu0 0.0
        %1307 = vmatpush2.msra.mxu0 %v755
        %1308 = vmatprep.subr.mxu0 0.0
        %1309 = vmatpush2.msra.mxu0 %v754
        %1310 = vmatprep.subr.mxu0 0.0
        %1311 = vmatpush2.msra.mxu0 %v753
        %1312 = vmatprep.subr.mxu0 0.0
        %1313 = vmatpush2.msra.mxu0 %v752
        %1314 = vmatprep.subr.mxu0 0.0
        %1315 = vmatpush2.msra.mxu0 %v751
        %1316 = vmatprep.subr.mxu0 0.0
        %1317 = vmatpush2.msra.mxu0 %v750
        %1318 = vmatprep.subr.mxu0 0.0
        %1319 = vmatpush2.msra.mxu0 %v749
        %1320 = vmatprep.subr.mxu0 0.0
        %1321 = vmatpush2.msra.mxu0 %v748
        %1322 = vmatprep.subr.mxu0 0.0
        %1323 = vmatpush2.msra.mxu0 %v747
        %1324 = vmatprep.subr.mxu0 0.0
        %1325 = vmatpush2.msra.mxu0 %v746
        %1326 = vmatprep.subr.mxu0 0.0
        %1327 = vmatpush2.msra.mxu0 %v745
        %1328 = vmatprep.subr.mxu0 0.0
        %1329 = vmatpush2.msra.mxu0 %v744
        %1330 = vmatprep.subr.mxu0 0.0
        %1331 = vmatpush2.msra.mxu0 %v743
        %1332 = vmatprep.subr.mxu0 0.0
        %1333 = vmatpush2.msra.mxu0 %v742
        %1334 = vmatprep.subr.mxu0 0.0
        %1335 = vmatpush2.msra.mxu0 %v741
        %1336 = vmatprep.subr.mxu0 0.0
        %1337 = vmatpush2.msra.mxu0 %v740
        %1338 = vmatprep.mubr.f32.mxu0 %v588
        %1339 = vmatmul.mubr.f32.gmra.mxu0 %v568
        %v1340 = vpop.f32.mrf.mxu0
        %v1341 = vadd.f32 %v1176, %v1340
        %v1342 = vpop.f32.mrf.mxu0
        %1343 = vmatprep.mubr.f32.mxu0 %v589
        %1344 = vmatmul.mubr.f32.gmra.mxu0 %v569
        %v1345 = vpop.f32.mrf.mxu0
        %v1346 = vadd.f32 %v1181, %v1345
        %v1347 = vpop.f32.mrf.mxu0
        %1348 = vmatprep.mubr.f32.mxu0 %v590
        %1349 = vmatmul.mubr.f32.gmra.mxu0 %v570
        %v1350 = vpop.f32.mrf.mxu0
        %v1351 = vadd.f32 %v1186, %v1350
        %v1352 = vpop.f32.mrf.mxu0
        %1353 = vmatprep.mubr.f32.mxu0 %v591
        %1354 = vmatmul.mubr.f32.gmra.mxu0 %v571
        %v1355 = vpop.f32.mrf.mxu0
        %v1356 = vadd.f32 %v1191, %v1355
        %v1357 = vpop.f32.mrf.mxu0
        %1358 = vmatprep.mubr.f32.mxu0 %v592
        %1359 = vmatmul.mubr.f32.gmra.mxu0 %v572
        %v1360 = vpop.f32.mrf.mxu0
        %v1361 = vadd.f32 %v1196, %v1360
        %v1362 = vpop.f32.mrf.mxu0
        %1363 = vmatprep.mubr.f32.mxu0 %v593
        %1364 = vmatmul.mubr.f32.gmra.mxu0 %v573
        %v1365 = vpop.f32.mrf.mxu0
        %v1366 = vadd.f32 %v1201, %v1365
        %v1367 = vpop.f32.mrf.mxu0
        %1368 = vmatprep.mubr.f32.mxu0 %v594
        %1369 = vmatmul.mubr.f32.gmra.mxu0 %v574
        %v1370 = vpop.f32.mrf.mxu0
        %v1371 = vadd.f32 %v1206, %v1370
        %v1372 = vpop.f32.mrf.mxu0
        %1373 = vmatprep.mubr.f32.mxu0 %v595
        %1374 = vmatmul.mubr.f32.gmra.mxu0 %v575
        %v1375 = vpop.f32.mrf.mxu0
        %v1376 = vadd.f32 %v1211, %v1375
        %v1377 = vpop.f32.mrf.mxu0
        %1378 = vmatprep.mubr.f32.mxu0 %v596
        %1379 = vmatmul.mubr.f32.gmra.mxu0 %v576
        %v1380 = vpop.f32.mrf.mxu0
        %v1381 = vadd.f32 %v1216, %v1380
        %v1382 = vpop.f32.mrf.mxu0
        %1383 = vmatprep.mubr.f32.mxu0 %v597
        %1384 = vmatmul.mubr.f32.gmra.mxu0 %v577
        %v1385 = vpop.f32.mrf.mxu0
        %v1386 = vadd.f32 %v1221, %v1385
        %v1387 = vpop.f32.mrf.mxu0
        %1388 = vmatprep.mubr.f32.mxu0 %v598
        %1389 = vmatmul.mubr.f32.gmra.mxu0 %v578
        %v1390 = vpop.f32.mrf.mxu0
        %v1391 = vadd.f32 %v1226, %v1390
        %v1392 = vpop.f32.mrf.mxu0
        %1393 = vmatprep.mubr.f32.mxu0 %v599
        %1394 = vmatmul.mubr.f32.gmra.mxu0 %v579
        %v1395 = vpop.f32.mrf.mxu0
        %v1396 = vadd.f32 %v1231, %v1395
        %v1397 = vpop.f32.mrf.mxu0
        %1398 = vmatprep.mubr.f32.mxu0 %v600
        %1399 = vmatmul.mubr.f32.gmra.mxu0 %v580
        %v1400 = vpop.f32.mrf.mxu0
        %v1401 = vadd.f32 %v1236, %v1400
        %v1402 = vpop.f32.mrf.mxu0
        %1403 = vmatprep.mubr.f32.mxu0 %v601
        %1404 = vmatmul.mubr.f32.gmra.mxu0 %v581
        %v1405 = vpop.f32.mrf.mxu0
        %v1406 = vadd.f32 %v1241, %v1405
        %v1407 = vpop.f32.mrf.mxu0
        %1408 = vmatprep.mubr.f32.mxu0 %v602
        %1409 = vmatmul.mubr.f32.gmra.mxu0 %v582
        %v1410 = vpop.f32.mrf.mxu0
        %v1411 = vadd.f32 %v1246, %v1410
        %v1412 = vpop.f32.mrf.mxu0
        %1413 = vmatprep.mubr.f32.mxu0 %v603
        %1414 = vmatmul.mubr.f32.gmra.mxu0 %v583
        %v1415 = vpop.f32.mrf.mxu0
        %v1416 = vadd.f32 %v1251, %v1415
        %v1417 = vpop.f32.mrf.mxu0
        %1418 = vmatprep.mubr.f32.mxu0 %v604
        %1419 = vmatmul.mubr.f32.gmra.mxu0 %v584
        %v1420 = vpop.f32.mrf.mxu0
        %v1421 = vadd.f32 %v1256, %v1420
        %v1422 = vpop.f32.mrf.mxu0
        %1423 = vmatprep.mubr.f32.mxu0 %v605
        %1424 = vmatmul.mubr.f32.gmra.mxu0 %v585
        %v1425 = vpop.f32.mrf.mxu0
        %v1426 = vadd.f32 %v1261, %v1425
        %v1427 = vpop.f32.mrf.mxu0
        %1428 = vmatprep.mubr.f32.mxu0 %v606
        %1429 = vmatmul.mubr.f32.gmra.mxu0 %v586
        %v1430 = vpop.f32.mrf.mxu0
        %v1431 = vadd.f32 %v1266, %v1430
        %v1432 = vpop.f32.mrf.mxu0
        %1433 = vmatprep.mubr.f32.mxu0 %v607
        %1434 = vmatmul.mubr.f32.gmra.mxu0 %v587
        %v1435 = vpop.f32.mrf.mxu0
        %v1436 = vadd.f32 %v1271, %v1435
        %v1437 = vpop.f32.mrf.mxu0
        %1438 = vdwg.mxu0
        %1439 = vmatprep.subr.mxu0 0.0
        %1440 = vmatpush1.msra.mxu0 %v771
        %1441 = vmatprep.subr.mxu0 0.0
        %1442 = vmatpush1.msra.mxu0 %v770
        %1443 = vmatprep.subr.mxu0 0.0
        %1444 = vmatpush1.msra.mxu0 %v769
        %1445 = vmatprep.subr.mxu0 0.0
        %1446 = vmatpush1.msra.mxu0 %v768
        %1447 = vmatprep.subr.mxu0 0.0
        %1448 = vmatpush1.msra.mxu0 %v767
        %1449 = vmatprep.subr.mxu0 0.0
        %1450 = vmatpush1.msra.mxu0 %v766
        %1451 = vmatprep.subr.mxu0 0.0
        %1452 = vmatpush1.msra.mxu0 %v765
        %1453 = vmatprep.subr.mxu0 0.0
        %1454 = vmatpush1.msra.mxu0 %v764
        %1455 = vmatprep.subr.mxu0 0.0
        %1456 = vmatpush1.msra.mxu0 %v763
        %1457 = vmatprep.subr.mxu0 0.0
        %1458 = vmatpush1.msra.mxu0 %v762
        %1459 = vmatprep.subr.mxu0 0.0
        %1460 = vmatpush1.msra.mxu0 %v761
        %1461 = vmatprep.subr.mxu0 0.0
        %1462 = vmatpush1.msra.mxu0 %v760
        %1463 = vmatprep.subr.mxu0 0.0
        %1464 = vmatpush1.msra.mxu0 %v759
        %1465 = vmatprep.subr.mxu0 0.0
        %1466 = vmatpush1.msra.mxu0 %v758
        %1467 = vmatprep.subr.mxu0 0.0
        %1468 = vmatpush1.msra.mxu0 %v757
        %1469 = vmatprep.subr.mxu0 0.0
        %1470 = vmatpush1.msra.mxu0 %v756
        %1471 = vmatprep.subr.mxu0 0.0
        %1472 = vmatpush2.msra.mxu0 0.0
        %1473 = vmatprep.subr.mxu0 0.0
        %1474 = vmatpush2.msra.mxu0 0.0
        %1475 = vmatprep.subr.mxu0 0.0
        %1476 = vmatpush2.msra.mxu0 0.0
        %1477 = vmatprep.subr.mxu0 0.0
        %1478 = vmatpush2.msra.mxu0 0.0
        %1479 = vmatprep.subr.mxu0 0.0
        %1480 = vmatpush2.msra.mxu0 0.0
        %1481 = vmatprep.subr.mxu0 0.0
        %1482 = vmatpush2.msra.mxu0 0.0
        %1483 = vmatprep.subr.mxu0 0.0
        %1484 = vmatpush2.msra.mxu0 0.0
        %1485 = vmatprep.subr.mxu0 0.0
        %1486 = vmatpush2.msra.mxu0 0.0
        %1487 = vmatprep.subr.mxu0 0.0
        %1488 = vmatpush2.msra.mxu0 0.0
        %1489 = vmatprep.subr.mxu0 0.0
        %1490 = vmatpush2.msra.mxu0 0.0
        %1491 = vmatprep.subr.mxu0 0.0
        %1492 = vmatpush2.msra.mxu0 0.0
        %1493 = vmatprep.subr.mxu0 0.0
        %1494 = vmatpush2.msra.mxu0 0.0
        %1495 = vmatprep.subr.mxu0 0.0
        %1496 = vmatpush2.msra.mxu0 0.0
        %1497 = vmatprep.subr.mxu0 0.0
        %1498 = vmatpush2.msra.mxu0 0.0
        %1499 = vmatprep.subr.mxu0 0.0
        %1500 = vmatpush2.msra.mxu0 0.0
        %1501 = vmatprep.subr.mxu0 0.0
        %1502 = vmatpush2.msra.mxu0 0.0
        %1503 = vmatprep.mubr.f32.mxu0 0.0
        %1504 = vmatmul.mubr.f32.gmra.mxu0 %v608
        %v1505 = vpop.f32.mrf.mxu0
        %v1506 = vadd.f32 %v1341, %v1505
        %v1507 = vpop.f32.mrf.mxu0
        %1508 = vmatprep.mubr.f32.mxu0 0.0
        %1509 = vmatmul.mubr.f32.gmra.mxu0 %v609
        %v1510 = vpop.f32.mrf.mxu0
        %v1511 = vadd.f32 %v1346, %v1510
        %v1512 = vpop.f32.mrf.mxu0
        %1513 = vmatprep.mubr.f32.mxu0 0.0
        %1514 = vmatmul.mubr.f32.gmra.mxu0 %v610
        %v1515 = vpop.f32.mrf.mxu0
        %v1516 = vadd.f32 %v1351, %v1515
        %v1517 = vpop.f32.mrf.mxu0
        %1518 = vmatprep.mubr.f32.mxu0 0.0
        %1519 = vmatmul.mubr.f32.gmra.mxu0 %v611
        %v1520 = vpop.f32.mrf.mxu0
        %v1521 = vadd.f32 %v1356, %v1520
        %v1522 = vpop.f32.mrf.mxu0
        %1523 = vmatprep.mubr.f32.mxu0 0.0
        %1524 = vmatmul.mubr.f32.gmra.mxu0 %v612
        %v1525 = vpop.f32.mrf.mxu0
        %v1526 = vadd.f32 %v1361, %v1525
        %v1527 = vpop.f32.mrf.mxu0
        %1528 = vmatprep.mubr.f32.mxu0 0.0
        %1529 = vmatmul.mubr.f32.gmra.mxu0 %v613
        %v1530 = vpop.f32.mrf.mxu0
        %v1531 = vadd.f32 %v1366, %v1530
        %v1532 = vpop.f32.mrf.mxu0
        %1533 = vmatprep.mubr.f32.mxu0 0.0
        %1534 = vmatmul.mubr.f32.gmra.mxu0 %v614
        %v1535 = vpop.f32.mrf.mxu0
        %v1536 = vadd.f32 %v1371, %v1535
        %v1537 = vpop.f32.mrf.mxu0
        %1538 = vmatprep.mubr.f32.mxu0 0.0
        %1539 = vmatmul.mubr.f32.gmra.mxu0 %v615
        %v1540 = vpop.f32.mrf.mxu0
        %v1541 = vadd.f32 %v1376, %v1540
        %v1542 = vpop.f32.mrf.mxu0
        %1543 = vmatprep.mubr.f32.mxu0 0.0
        %1544 = vmatmul.mubr.f32.gmra.mxu0 %v616
        %v1545 = vpop.f32.mrf.mxu0
        %v1546 = vadd.f32 %v1381, %v1545
        %v1547 = vpop.f32.mrf.mxu0
        %1548 = vmatprep.mubr.f32.mxu0 0.0
        %1549 = vmatmul.mubr.f32.gmra.mxu0 %v617
        %v1550 = vpop.f32.mrf.mxu0
        %v1551 = vadd.f32 %v1386, %v1550
        %v1552 = vpop.f32.mrf.mxu0
        %1553 = vmatprep.mubr.f32.mxu0 0.0
        %1554 = vmatmul.mubr.f32.gmra.mxu0 %v618
        %v1555 = vpop.f32.mrf.mxu0
        %v1556 = vadd.f32 %v1391, %v1555
        %v1557 = vpop.f32.mrf.mxu0
        %1558 = vmatprep.mubr.f32.mxu0 0.0
        %1559 = vmatmul.mubr.f32.gmra.mxu0 %v619
        %v1560 = vpop.f32.mrf.mxu0
        %v1561 = vadd.f32 %v1396, %v1560
        %v1562 = vpop.f32.mrf.mxu0
        %1563 = vmatprep.mubr.f32.mxu0 0.0
        %1564 = vmatmul.mubr.f32.gmra.mxu0 %v620
        %v1565 = vpop.f32.mrf.mxu0
        %v1566 = vadd.f32 %v1401, %v1565
        %v1567 = vpop.f32.mrf.mxu0
        %1568 = vmatprep.mubr.f32.mxu0 0.0
        %1569 = vmatmul.mubr.f32.gmra.mxu0 %v621
        %v1570 = vpop.f32.mrf.mxu0
        %v1571 = vadd.f32 %v1406, %v1570
        %v1572 = vpop.f32.mrf.mxu0
        %1573 = vmatprep.mubr.f32.mxu0 0.0
        %1574 = vmatmul.mubr.f32.gmra.mxu0 %v622
        %v1575 = vpop.f32.mrf.mxu0
        %v1576 = vadd.f32 %v1411, %v1575
        %v1577 = vpop.f32.mrf.mxu0
        %1578 = vmatprep.mubr.f32.mxu0 0.0
        %1579 = vmatmul.mubr.f32.gmra.mxu0 %v623
        %v1580 = vpop.f32.mrf.mxu0
        %v1581 = vadd.f32 %v1416, %v1580
        %v1582 = vpop.f32.mrf.mxu0
        %1583 = vmatprep.mubr.f32.mxu0 0.0
        %1584 = vmatmul.mubr.f32.gmra.mxu0 %v624
        %v1585 = vpop.f32.mrf.mxu0
        %v1586 = vadd.f32 %v1421, %v1585
        %v1587 = vpop.f32.mrf.mxu0
        %1588 = vmatprep.mubr.f32.mxu0 0.0
        %1589 = vmatmul.mubr.f32.gmra.mxu0 %v625
        %v1590 = vpop.f32.mrf.mxu0
        %v1591 = vadd.f32 %v1426, %v1590
        %v1592 = vpop.f32.mrf.mxu0
        %1593 = vmatprep.mubr.f32.mxu0 0.0
        %1594 = vmatmul.mubr.f32.gmra.mxu0 %v626
        %v1595 = vpop.f32.mrf.mxu0
        %v1596 = vadd.f32 %v1431, %v1595
        %v1597 = vpop.f32.mrf.mxu0
        %1598 = vmatprep.mubr.f32.mxu0 0.0
        %1599 = vmatmul.mubr.f32.gmra.mxu0 %v627
        %v1600 = vpop.f32.mrf.mxu0
        %v1601 = vadd.f32 %v1436, %v1600
        %v1602 = vpop.f32.mrf.mxu0
        %1603 = vdwg.mxu0
        %v1604 = vmax.f32 %v1506, 0.0
        %v1605 = vmax.f32 %v1511, 0.0
        %v1606 = vmax.f32 %v1516, 0.0
        %v1607 = vmax.f32 %v1521, 0.0
        %v1608 = vmax.f32 %v1526, 0.0
        %v1609 = vmax.f32 %v1531, 0.0
        %v1610 = vmax.f32 %v1536, 0.0
        %v1611 = vmax.f32 %v1541, 0.0
        %v1612 = vmax.f32 %v1546, 0.0
        %v1613 = vmax.f32 %v1551, 0.0
        %v1614 = vmax.f32 %v1556, 0.0
        %v1615 = vmax.f32 %v1561, 0.0
        %v1616 = vmax.f32 %v1566, 0.0
        %v1617 = vmax.f32 %v1571, 0.0
        %v1618 = vmax.f32 %v1576, 0.0
        %v1619 = vmax.f32 %v1581, 0.0
        %v1620 = vmax.f32 %v1586, 0.0
        %v1621 = vmax.f32 %v1591, 0.0
        %v1622 = vmax.f32 %v1596, 0.0
        %v1623 = vmax.f32 %v1601, 0.0
        %s1624 = ssub.s32 %s219, 1
        %v1625 = vstv %s1624
        %v1626 = vadd.s32 %v1625, 1
        %v1627 = vadd.s32 %v1625, 2
        %v1628 = vadd.s32 %v1625, 3
        %v1629 = vadd.s32 %v1625, 4
        %v1630 = vadd.s32 %v1625, 5
        %v1631 = vadd.s32 %v1625, 6
        %v1632 = vadd.s32 %v1625, 7
        %v1633 = vadd.s32 %v1625, 8
        %v1634 = vadd.s32 %v1625, 9
        %vm1635 = vcmp.ge.s32.totalorder %v1625, 0
        %vm1636 = vcmp.ge.s32.totalorder %v1626, 0
        %vm1637 = vcmp.ge.s32.totalorder %v1627, 0
        %vm1638 = vcmp.ge.s32.totalorder %v1628, 0
        %vm1639 = vcmp.ge.s32.totalorder %v1629, 0
        %vm1640 = vcmp.ge.s32.totalorder %v1630, 0
        %vm1641 = vcmp.ge.s32.totalorder %v1631, 0
        %vm1642 = vcmp.ge.s32.totalorder %v1632, 0
        %vm1643 = vcmp.ge.s32.totalorder %v1633, 0
        %vm1644 = vcmp.ge.s32.totalorder %v1634, 0
        %vm1645 = vcmp.lt.s32.totalorder %v1625, 16
        %vm1646 = vcmp.lt.s32.totalorder %v1626, 16
        %vm1647 = vcmp.lt.s32.totalorder %v1627, 16
        %vm1648 = vcmp.lt.s32.totalorder %v1628, 16
        %vm1649 = vcmp.lt.s32.totalorder %v1629, 16
        %vm1650 = vcmp.lt.s32.totalorder %v1630, 16
        %vm1651 = vcmp.lt.s32.totalorder %v1631, 16
        %vm1652 = vcmp.lt.s32.totalorder %v1632, 16
        %vm1653 = vcmp.lt.s32.totalorder %v1633, 16
        %vm1654 = vcmp.lt.s32.totalorder %v1634, 16
        %vm1655 = vmand %vm1635, %vm1645
        %vm1656 = vmand %vm1636, %vm1646
        %vm1657 = vmand %vm1637, %vm1647
        %vm1658 = vmand %vm1638, %vm1648
        %vm1659 = vmand %vm1639, %vm1649
        %vm1660 = vmand %vm1640, %vm1650
        %vm1661 = vmand %vm1641, %vm1651
        %vm1662 = vmand %vm1642, %vm1652
        %vm1663 = vmand %vm1643, %vm1653
        %vm1664 = vmand %vm1644, %vm1654
        %v1665 = vsel %vm1655, %v1604, 0.0
        %v1666 = vsel %vm1655, %v1605, 0.0
        %v1667 = vsel %vm1656, %v1606, 0.0
        %v1668 = vsel %vm1656, %v1607, 0.0
        %v1669 = vsel %vm1657, %v1608, 0.0
        %v1670 = vsel %vm1657, %v1609, 0.0
        %v1671 = vsel %vm1658, %v1610, 0.0
        %v1672 = vsel %vm1658, %v1611, 0.0
        %v1673 = vsel %vm1659, %v1612, 0.0
        %v1674 = vsel %vm1659, %v1613, 0.0
        %v1675 = vsel %vm1660, %v1614, 0.0
        %v1676 = vsel %vm1660, %v1615, 0.0
        %v1677 = vsel %vm1661, %v1616, 0.0
        %v1678 = vsel %vm1661, %v1617, 0.0
        %v1679 = vsel %vm1662, %v1618, 0.0
        %v1680 = vsel %vm1662, %v1619, 0.0
        %v1681 = vsel %vm1663, %v1620, 0.0
        %v1682 = vsel %vm1663, %v1621, 0.0
        %v1683 = vsel %vm1664, %v1622, 0.0
        %v1684 = vsel %vm1664, %v1623, 0.0
        %1685 = vst [vmem:[#allocation4] sm:$0x1] 0.0
        %1686 = vst [vmem:[#allocation4 + $0x18] sm:$0x1] 0.0
        %1687 = vst [vmem:[#allocation4 + $0x30] sm:$0x1] 0.0
        %1688 = vst [vmem:[#allocation4 + $0x48] sm:$0x1] 0.0
        %1689 = vst [vmem:[#allocation4 + $0x60] sm:$0x1] 0.0
        %1690 = vst [vmem:[#allocation4 + $0x78] sm:$0x1] 0.0
        %1691 = vst [vmem:[#allocation4 + $0x90] sm:$0x1] 0.0
        %1692 = vst [vmem:[#allocation4 + $0xa8] sm:$0x1] 0.0
        %1693 = vst [vmem:[#allocation4 + $0xc0] sm:$0x1] 0.0
        %1694 = vst [vmem:[#allocation4 + $0xd8] sm:$0x1] 0.0
        %1695 = vst [vmem:[#allocation4 + $0x11] sm:$0x1] 0.0
        %1696 = vst [vmem:[#allocation4 + $0x29] sm:$0x1] 0.0
        %1697 = vst [vmem:[#allocation4 + $0x41] sm:$0x1] 0.0
        %1698 = vst [vmem:[#allocation4 + $0x59] sm:$0x1] 0.0
        %1699 = vst [vmem:[#allocation4 + $0x71] sm:$0x1] 0.0
        %1700 = vst [vmem:[#allocation4 + $0x89] sm:$0x1] 0.0
        %1701 = vst [vmem:[#allocation4 + $0xa1] sm:$0x1] 0.0
        %1702 = vst [vmem:[#allocation4 + $0xb9] sm:$0x1] 0.0
        %1703 = vst [vmem:[#allocation4 + $0xd1] sm:$0x1] 0.0
        %1704 = vst [vmem:[#allocation4 + $0xe9] sm:$0x1] 0.0
        %1705 = vst [vmem:[#allocation4 + $0x1] sm:$0xff] %v1665
        %1706 = vst [vmem:[#allocation4 + $0x9] sm:$0xff] %v1666
        %1707 = vst [vmem:[#allocation4 + $0x19] sm:$0xff] %v1667
        %1708 = vst [vmem:[#allocation4 + $0x21] sm:$0xff] %v1668
        %1709 = vst [vmem:[#allocation4 + $0x31] sm:$0xff] %v1669
        %1710 = vst [vmem:[#allocation4 + $0x39] sm:$0xff] %v1670
        %1711 = vst [vmem:[#allocation4 + $0x49] sm:$0xff] %v1671
        %1712 = vst [vmem:[#allocation4 + $0x51] sm:$0xff] %v1672
        %1713 = vst [vmem:[#allocation4 + $0x61] sm:$0xff] %v1673
        %1714 = vst [vmem:[#allocation4 + $0x69] sm:$0xff] %v1674
        %1715 = vst [vmem:[#allocation4 + $0x79] sm:$0xff] %v1675
        %1716 = vst [vmem:[#allocation4 + $0x81] sm:$0xff] %v1676
        %1717 = vst [vmem:[#allocation4 + $0x91] sm:$0xff] %v1677
        %1718 = vst [vmem:[#allocation4 + $0x99] sm:$0xff] %v1678
        %1719 = vst [vmem:[#allocation4 + $0xa9] sm:$0xff] %v1679
        %1720 = vst [vmem:[#allocation4 + $0xb1] sm:$0xff] %v1680
        %1721 = vst [vmem:[#allocation4 + $0xc1] sm:$0xff] %v1681
        %1722 = vst [vmem:[#allocation4 + $0xc9] sm:$0xff] %v1682
        %1723 = vst [vmem:[#allocation4 + $0xd9] sm:$0xff] %v1683
        %1724 = vst [vmem:[#allocation4 + $0xe1] sm:$0xff] %v1684
        %v1725 = vld [vmem:[#allocation4] sm:$0xff]
        %v1726 = vld [vmem:[#allocation4 + $0x8] sm:$0xff]
        %v1727 = vld [vmem:[#allocation4 + $0x18] sm:$0xff]
        %v1728 = vld [vmem:[#allocation4 + $0x20] sm:$0xff]
        %v1729 = vld [vmem:[#allocation4 + $0x30] sm:$0xff]
        %v1730 = vld [vmem:[#allocation4 + $0x38] sm:$0xff]
        %v1731 = vld [vmem:[#allocation4 + $0x48] sm:$0xff]
        %v1732 = vld [vmem:[#allocation4 + $0x50] sm:$0xff]
        %v1733 = vld [vmem:[#allocation4 + $0x60] sm:$0xff]
        %v1734 = vld [vmem:[#allocation4 + $0x68] sm:$0xff]
        %v1735 = vld [vmem:[#allocation4 + $0x78] sm:$0xff]
        %v1736 = vld [vmem:[#allocation4 + $0x80] sm:$0xff]
        %v1737 = vld [vmem:[#allocation4 + $0x90] sm:$0xff]
        %v1738 = vld [vmem:[#allocation4 + $0x98] sm:$0xff]
        %v1739 = vld [vmem:[#allocation4 + $0xa8] sm:$0xff]
        %v1740 = vld [vmem:[#allocation4 + $0xb0] sm:$0xff]
        %v1741 = vld [vmem:[#allocation4 + $0x1] sm:$0xff]
        %v1742 = vld [vmem:[#allocation4 + $0x9] sm:$0xff]
        %v1743 = vld [vmem:[#allocation4 + $0x19] sm:$0xff]
        %v1744 = vld [vmem:[#allocation4 + $0x21] sm:$0xff]
        %v1745 = vld [vmem:[#allocation4 + $0x31] sm:$0xff]
        %v1746 = vld [vmem:[#allocation4 + $0x39] sm:$0xff]
        %v1747 = vld [vmem:[#allocation4 + $0x49] sm:$0xff]
        %v1748 = vld [vmem:[#allocation4 + $0x51] sm:$0xff]
        %v1749 = vld [vmem:[#allocation4 + $0x61] sm:$0xff]
        %v1750 = vld [vmem:[#allocation4 + $0x69] sm:$0xff]
        %v1751 = vld [vmem:[#allocation4 + $0x79] sm:$0xff]
        %v1752 = vld [vmem:[#allocation4 + $0x81] sm:$0xff]
        %v1753 = vld [vmem:[#allocation4 + $0x91] sm:$0xff]
        %v1754 = vld [vmem:[#allocation4 + $0x99] sm:$0xff]
        %v1755 = vld [vmem:[#allocation4 + $0xa9] sm:$0xff]
        %v1756 = vld [vmem:[#allocation4 + $0xb1] sm:$0xff]
        %v1757 = vld [vmem:[#allocation4 + $0x2] sm:$0xff]
        %v1758 = vld [vmem:[#allocation4 + $0xa] sm:$0xff]
        %v1759 = vld [vmem:[#allocation4 + $0x1a] sm:$0xff]
        %v1760 = vld [vmem:[#allocation4 + $0x22] sm:$0xff]
        %v1761 = vld [vmem:[#allocation4 + $0x32] sm:$0xff]
        %v1762 = vld [vmem:[#allocation4 + $0x3a] sm:$0xff]
        %v1763 = vld [vmem:[#allocation4 + $0x4a] sm:$0xff]
        %v1764 = vld [vmem:[#allocation4 + $0x52] sm:$0xff]
        %v1765 = vld [vmem:[#allocation4 + $0x62] sm:$0xff]
        %v1766 = vld [vmem:[#allocation4 + $0x6a] sm:$0xff]
        %v1767 = vld [vmem:[#allocation4 + $0x7a] sm:$0xff]
        %v1768 = vld [vmem:[#allocation4 + $0x82] sm:$0xff]
        %v1769 = vld [vmem:[#allocation4 + $0x92] sm:$0xff]
        %v1770 = vld [vmem:[#allocation4 + $0x9a] sm:$0xff]
        %v1771 = vld [vmem:[#allocation4 + $0xaa] sm:$0xff]
        %v1772 = vld [vmem:[#allocation4 + $0xb2] sm:$0xff]
        %s1773 = scalar_lea.vmem [#allocation4], 24
        %v1774 = vld [vmem:[%s1773] sm:$0xff]
        %v1775 = vld [vmem:[%s1773 + $0x8] sm:$0xff]
        %v1776 = vld [vmem:[%s1773 + $0x18] sm:$0xff]
        %v1777 = vld [vmem:[%s1773 + $0x20] sm:$0xff]
        %v1778 = vld [vmem:[%s1773 + $0x30] sm:$0xff]
        %v1779 = vld [vmem:[%s1773 + $0x38] sm:$0xff]
        %v1780 = vld [vmem:[%s1773 + $0x48] sm:$0xff]
        %v1781 = vld [vmem:[%s1773 + $0x50] sm:$0xff]
        %v1782 = vld [vmem:[%s1773 + $0x60] sm:$0xff]
        %v1783 = vld [vmem:[%s1773 + $0x68] sm:$0xff]
        %v1784 = vld [vmem:[%s1773 + $0x78] sm:$0xff]
        %v1785 = vld [vmem:[%s1773 + $0x80] sm:$0xff]
        %v1786 = vld [vmem:[%s1773 + $0x90] sm:$0xff]
        %v1787 = vld [vmem:[%s1773 + $0x98] sm:$0xff]
        %v1788 = vld [vmem:[%s1773 + $0xa8] sm:$0xff]
        %v1789 = vld [vmem:[%s1773 + $0xb0] sm:$0xff]
        %v1790 = vld [vmem:[%s1773 + $0x1] sm:$0xff]
        %v1791 = vld [vmem:[%s1773 + $0x9] sm:$0xff]
        %v1792 = vld [vmem:[%s1773 + $0x19] sm:$0xff]
        %v1793 = vld [vmem:[%s1773 + $0x21] sm:$0xff]
        %v1794 = vld [vmem:[%s1773 + $0x31] sm:$0xff]
        %v1795 = vld [vmem:[%s1773 + $0x39] sm:$0xff]
        %v1796 = vld [vmem:[%s1773 + $0x49] sm:$0xff]
        %v1797 = vld [vmem:[%s1773 + $0x51] sm:$0xff]
        %v1798 = vld [vmem:[%s1773 + $0x61] sm:$0xff]
        %v1799 = vld [vmem:[%s1773 + $0x69] sm:$0xff]
        %v1800 = vld [vmem:[%s1773 + $0x79] sm:$0xff]
        %v1801 = vld [vmem:[%s1773 + $0x81] sm:$0xff]
        %v1802 = vld [vmem:[%s1773 + $0x91] sm:$0xff]
        %v1803 = vld [vmem:[%s1773 + $0x99] sm:$0xff]
        %v1804 = vld [vmem:[%s1773 + $0xa9] sm:$0xff]
        %v1805 = vld [vmem:[%s1773 + $0xb1] sm:$0xff]
        %v1806 = vld [vmem:[%s1773 + $0x2] sm:$0xff]
        %v1807 = vld [vmem:[%s1773 + $0xa] sm:$0xff]
        %v1808 = vld [vmem:[%s1773 + $0x1a] sm:$0xff]
        %v1809 = vld [vmem:[%s1773 + $0x22] sm:$0xff]
        %v1810 = vld [vmem:[%s1773 + $0x32] sm:$0xff]
        %v1811 = vld [vmem:[%s1773 + $0x3a] sm:$0xff]
        %v1812 = vld [vmem:[%s1773 + $0x4a] sm:$0xff]
        %v1813 = vld [vmem:[%s1773 + $0x52] sm:$0xff]
        %v1814 = vld [vmem:[%s1773 + $0x62] sm:$0xff]
        %v1815 = vld [vmem:[%s1773 + $0x6a] sm:$0xff]
        %v1816 = vld [vmem:[%s1773 + $0x7a] sm:$0xff]
        %v1817 = vld [vmem:[%s1773 + $0x82] sm:$0xff]
        %v1818 = vld [vmem:[%s1773 + $0x92] sm:$0xff]
        %v1819 = vld [vmem:[%s1773 + $0x9a] sm:$0xff]
        %v1820 = vld [vmem:[%s1773 + $0xaa] sm:$0xff]
        %v1821 = vld [vmem:[%s1773 + $0xb2] sm:$0xff]
        %s1822 = scalar_lea.vmem [#allocation4], 48
        %v1823 = vld [vmem:[%s1822] sm:$0xff]
        %v1824 = vld [vmem:[%s1822 + $0x8] sm:$0xff]
        %v1825 = vld [vmem:[%s1822 + $0x18] sm:$0xff]
        %v1826 = vld [vmem:[%s1822 + $0x20] sm:$0xff]
        %v1827 = vld [vmem:[%s1822 + $0x30] sm:$0xff]
        %v1828 = vld [vmem:[%s1822 + $0x38] sm:$0xff]
        %v1829 = vld [vmem:[%s1822 + $0x48] sm:$0xff]
        %v1830 = vld [vmem:[%s1822 + $0x50] sm:$0xff]
        %v1831 = vld [vmem:[%s1822 + $0x60] sm:$0xff]
        %v1832 = vld [vmem:[%s1822 + $0x68] sm:$0xff]
        %v1833 = vld [vmem:[%s1822 + $0x78] sm:$0xff]
        %v1834 = vld [vmem:[%s1822 + $0x80] sm:$0xff]
        %v1835 = vld [vmem:[%s1822 + $0x90] sm:$0xff]
        %v1836 = vld [vmem:[%s1822 + $0x98] sm:$0xff]
        %v1837 = vld [vmem:[%s1822 + $0xa8] sm:$0xff]
        %v1838 = vld [vmem:[%s1822 + $0xb0] sm:$0xff]
        %v1839 = vld [vmem:[%s1822 + $0x1] sm:$0xff]
        %v1840 = vld [vmem:[%s1822 + $0x9] sm:$0xff]
        %v1841 = vld [vmem:[%s1822 + $0x19] sm:$0xff]
        %v1842 = vld [vmem:[%s1822 + $0x21] sm:$0xff]
        %v1843 = vld [vmem:[%s1822 + $0x31] sm:$0xff]
        %v1844 = vld [vmem:[%s1822 + $0x39] sm:$0xff]
        %v1845 = vld [vmem:[%s1822 + $0x49] sm:$0xff]
        %v1846 = vld [vmem:[%s1822 + $0x51] sm:$0xff]
        %v1847 = vld [vmem:[%s1822 + $0x61] sm:$0xff]
        %v1848 = vld [vmem:[%s1822 + $0x69] sm:$0xff]
        %v1849 = vld [vmem:[%s1822 + $0x79] sm:$0xff]
        %v1850 = vld [vmem:[%s1822 + $0x81] sm:$0xff]
        %v1851 = vld [vmem:[%s1822 + $0x91] sm:$0xff]
        %v1852 = vld [vmem:[%s1822 + $0x99] sm:$0xff]
        %v1853 = vld [vmem:[%s1822 + $0xa9] sm:$0xff]
        %v1854 = vld [vmem:[%s1822 + $0xb1] sm:$0xff]
        %v1855 = vld [vmem:[%s1822 + $0x2] sm:$0xff]
        %v1856 = vld [vmem:[%s1822 + $0xa] sm:$0xff]
        %v1857 = vld [vmem:[%s1822 + $0x1a] sm:$0xff]
        %v1858 = vld [vmem:[%s1822 + $0x22] sm:$0xff]
        %v1859 = vld [vmem:[%s1822 + $0x32] sm:$0xff]
        %v1860 = vld [vmem:[%s1822 + $0x3a] sm:$0xff]
        %v1861 = vld [vmem:[%s1822 + $0x4a] sm:$0xff]
        %v1862 = vld [vmem:[%s1822 + $0x52] sm:$0xff]
        %v1863 = vld [vmem:[%s1822 + $0x62] sm:$0xff]
        %v1864 = vld [vmem:[%s1822 + $0x6a] sm:$0xff]
        %v1865 = vld [vmem:[%s1822 + $0x7a] sm:$0xff]
        %v1866 = vld [vmem:[%s1822 + $0x82] sm:$0xff]
        %v1867 = vld [vmem:[%s1822 + $0x92] sm:$0xff]
        %v1868 = vld [vmem:[%s1822 + $0x9a] sm:$0xff]
        %v1869 = vld [vmem:[%s1822 + $0xaa] sm:$0xff]
        %v1870 = vld [vmem:[%s1822 + $0xb2] sm:$0xff]
        %v1871 = vld [vmem:[#allocation6] sm:$0xff]
        %v1872 = vld [vmem:[#allocation6 + $0x8] sm:$0xff]
        %v1873 = vld [vmem:[#allocation6 + $0x10] sm:$0xff]
        %v1874 = vld [vmem:[#allocation6 + $0x18] sm:$0xff]
        %v1875 = vld [vmem:[#allocation6 + $0x20] sm:$0xff]
        %v1876 = vld [vmem:[#allocation6 + $0x28] sm:$0xff]
        %v1877 = vld [vmem:[#allocation6 + $0x30] sm:$0xff]
        %v1878 = vld [vmem:[#allocation6 + $0x38] sm:$0xff]
        %v1879 = vld [vmem:[#allocation6 + $0x40] sm:$0xff]
        %v1880 = vld [vmem:[#allocation6 + $0x48] sm:$0xff]
        %v1881 = vld [vmem:[#allocation6 + $0x50] sm:$0xff]
        %v1882 = vld [vmem:[#allocation6 + $0x58] sm:$0xff]
        %v1883 = vld [vmem:[#allocation6 + $0x60] sm:$0xff]
        %v1884 = vld [vmem:[#allocation6 + $0x68] sm:$0xff]
        %v1885 = vld [vmem:[#allocation6 + $0x70] sm:$0xff]
        %v1886 = vld [vmem:[#allocation6 + $0x78] sm:$0xff]
        %v1887 = vld [vmem:[#allocation6 + $0x80] sm:$0xff]
        %v1888 = vld [vmem:[#allocation6 + $0x88] sm:$0xff]
        %v1889 = vld [vmem:[#allocation6 + $0x90] sm:$0xff]
        %v1890 = vld [vmem:[#allocation6 + $0x98] sm:$0xff]
        %v1891 = vld [vmem:[#allocation6 + $0xa0] sm:$0xff]
        %v1892 = vld [vmem:[#allocation6 + $0xa8] sm:$0xff]
        %v1893 = vld [vmem:[#allocation6 + $0xb0] sm:$0xff]
        %v1894 = vld [vmem:[#allocation6 + $0xb8] sm:$0xff]
        %v1895 = vld [vmem:[#allocation6 + $0xc0] sm:$0xff]
        %v1896 = vld [vmem:[#allocation6 + $0xc8] sm:$0xff]
        %v1897 = vld [vmem:[#allocation6 + $0xd0] sm:$0xff]
        %v1898 = vld [vmem:[#allocation6 + $0xd8] sm:$0xff]
        %v1899 = vld [vmem:[#allocation6 + $0xe0] sm:$0xff]
        %v1900 = vld [vmem:[#allocation6 + $0xe8] sm:$0xff]
        %v1901 = vld [vmem:[#allocation6 + $0xf0] sm:$0xff]
        %v1902 = vld [vmem:[#allocation6 + $0xf8] sm:$0xff]
        %v1903 = vld [vmem:[#allocation6 + $0x100] sm:$0xff]
        %v1904 = vld [vmem:[#allocation6 + $0x108] sm:$0xff]
        %v1905 = vld [vmem:[#allocation6 + $0x110] sm:$0xff]
        %v1906 = vld [vmem:[#allocation6 + $0x118] sm:$0xff]
        %v1907 = vld [vmem:[#allocation6 + $0x120] sm:$0xff]
        %v1908 = vld [vmem:[#allocation6 + $0x128] sm:$0xff]
        %v1909 = vld [vmem:[#allocation6 + $0x130] sm:$0xff]
        %v1910 = vld [vmem:[#allocation6 + $0x138] sm:$0xff]
        %v1911 = vld [vmem:[#allocation6 + $0x140] sm:$0xff]
        %v1912 = vld [vmem:[#allocation6 + $0x148] sm:$0xff]
        %v1913 = vld [vmem:[#allocation6 + $0x150] sm:$0xff]
        %v1914 = vld [vmem:[#allocation6 + $0x158] sm:$0xff]
        %v1915 = vld [vmem:[#allocation6 + $0x160] sm:$0xff]
        %v1916 = vld [vmem:[#allocation6 + $0x168] sm:$0xff]
        %v1917 = vld [vmem:[#allocation6 + $0x170] sm:$0xff]
        %v1918 = vld [vmem:[#allocation6 + $0x178] sm:$0xff]
        %v1919 = vld [vmem:[#allocation6 + $0x180] sm:$0xff]
        %v1920 = vld [vmem:[#allocation6 + $0x188] sm:$0xff]
        %v1921 = vld [vmem:[#allocation6 + $0x190] sm:$0xff]
        %v1922 = vld [vmem:[#allocation6 + $0x198] sm:$0xff]
        %v1923 = vld [vmem:[#allocation6 + $0x1a0] sm:$0xff]
        %v1924 = vld [vmem:[#allocation6 + $0x1a8] sm:$0xff]
        %v1925 = vld [vmem:[#allocation6 + $0x1b0] sm:$0xff]
        %v1926 = vld [vmem:[#allocation6 + $0x1b8] sm:$0xff]
        %v1927 = vld [vmem:[#allocation6 + $0x1c0] sm:$0xff]
        %v1928 = vld [vmem:[#allocation6 + $0x1c8] sm:$0xff]
        %v1929 = vld [vmem:[#allocation6 + $0x1d0] sm:$0xff]
        %v1930 = vld [vmem:[#allocation6 + $0x1d8] sm:$0xff]
        %v1931 = vld [vmem:[#allocation6 + $0x1e0] sm:$0xff]
        %v1932 = vld [vmem:[#allocation6 + $0x1e8] sm:$0xff]
        %v1933 = vld [vmem:[#allocation6 + $0x1f0] sm:$0xff]
        %v1934 = vld [vmem:[#allocation6 + $0x1f8] sm:$0xff]
        %v1935 = vld [vmem:[#allocation6 + $0x200] sm:$0xff]
        %v1936 = vld [vmem:[#allocation6 + $0x208] sm:$0xff]
        %v1937 = vld [vmem:[#allocation6 + $0x210] sm:$0xff]
        %v1938 = vld [vmem:[#allocation6 + $0x218] sm:$0xff]
        %v1939 = vld [vmem:[#allocation6 + $0x220] sm:$0xff]
        %v1940 = vld [vmem:[#allocation6 + $0x228] sm:$0xff]
        %v1941 = vld [vmem:[#allocation6 + $0x230] sm:$0xff]
        %v1942 = vld [vmem:[#allocation6 + $0x238] sm:$0xff]
        %v1943 = vld [vmem:[#allocation6 + $0x240] sm:$0xff]
        %v1944 = vld [vmem:[#allocation6 + $0x248] sm:$0xff]
        %v1945 = vld [vmem:[#allocation6 + $0x250] sm:$0xff]
        %v1946 = vld [vmem:[#allocation6 + $0x258] sm:$0xff]
        %v1947 = vld [vmem:[#allocation6 + $0x260] sm:$0xff]
        %v1948 = vld [vmem:[#allocation6 + $0x268] sm:$0xff]
        %v1949 = vld [vmem:[#allocation6 + $0x270] sm:$0xff]
        %v1950 = vld [vmem:[#allocation6 + $0x278] sm:$0xff]
        %v1951 = vld [vmem:[#allocation6 + $0x280] sm:$0xff]
        %v1952 = vld [vmem:[#allocation6 + $0x288] sm:$0xff]
        %v1953 = vld [vmem:[#allocation6 + $0x290] sm:$0xff]
        %v1954 = vld [vmem:[#allocation6 + $0x298] sm:$0xff]
        %v1955 = vld [vmem:[#allocation6 + $0x2a0] sm:$0xff]
        %v1956 = vld [vmem:[#allocation6 + $0x2a8] sm:$0xff]
        %v1957 = vld [vmem:[#allocation6 + $0x2b0] sm:$0xff]
        %v1958 = vld [vmem:[#allocation6 + $0x2b8] sm:$0xff]
        %v1959 = vld [vmem:[#allocation6 + $0x2c0] sm:$0xff]
        %v1960 = vld [vmem:[#allocation6 + $0x2c8] sm:$0xff]
        %v1961 = vld [vmem:[#allocation6 + $0x2d0] sm:$0xff]
        %v1962 = vld [vmem:[#allocation6 + $0x2d8] sm:$0xff]
        %v1963 = vld [vmem:[#allocation6 + $0x2e0] sm:$0xff]
        %v1964 = vld [vmem:[#allocation6 + $0x2e8] sm:$0xff]
        %v1965 = vld [vmem:[#allocation6 + $0x2f0] sm:$0xff]
        %v1966 = vld [vmem:[#allocation6 + $0x2f8] sm:$0xff]
        %v1967 = vld [vmem:[#allocation6 + $0x300] sm:$0xff]
        %v1968 = vld [vmem:[#allocation6 + $0x308] sm:$0xff]
        %v1969 = vld [vmem:[#allocation6 + $0x310] sm:$0xff]
        %v1970 = vld [vmem:[#allocation6 + $0x318] sm:$0xff]
        %v1971 = vld [vmem:[#allocation6 + $0x320] sm:$0xff]
        %v1972 = vld [vmem:[#allocation6 + $0x328] sm:$0xff]
        %v1973 = vld [vmem:[#allocation6 + $0x330] sm:$0xff]
        %v1974 = vld [vmem:[#allocation6 + $0x338] sm:$0xff]
        %v1975 = vld [vmem:[#allocation6 + $0x340] sm:$0xff]
        %v1976 = vld [vmem:[#allocation6 + $0x348] sm:$0xff]
        %v1977 = vld [vmem:[#allocation6 + $0x350] sm:$0xff]
        %v1978 = vld [vmem:[#allocation6 + $0x358] sm:$0xff]
        %v1979 = vld [vmem:[#allocation6 + $0x360] sm:$0xff]
        %v1980 = vld [vmem:[#allocation6 + $0x368] sm:$0xff]
        %v1981 = vld [vmem:[#allocation6 + $0x370] sm:$0xff]
        %v1982 = vld [vmem:[#allocation6 + $0x378] sm:$0xff]
        %v1983 = vld [vmem:[#allocation6 + $0x380] sm:$0xff]
        %v1984 = vld [vmem:[#allocation6 + $0x388] sm:$0xff]
        %v1985 = vld [vmem:[#allocation6 + $0x390] sm:$0xff]
        %v1986 = vld [vmem:[#allocation6 + $0x398] sm:$0xff]
        %v1987 = vld [vmem:[#allocation6 + $0x3a0] sm:$0xff]
        %v1988 = vld [vmem:[#allocation6 + $0x3a8] sm:$0xff]
        %v1989 = vld [vmem:[#allocation6 + $0x3b0] sm:$0xff]
        %v1990 = vld [vmem:[#allocation6 + $0x3b8] sm:$0xff]
        %v1991 = vld [vmem:[#allocation6 + $0x3c0] sm:$0xff]
        %v1992 = vld [vmem:[#allocation6 + $0x3c8] sm:$0xff]
        %v1993 = vld [vmem:[#allocation6 + $0x3d0] sm:$0xff]
        %v1994 = vld [vmem:[#allocation6 + $0x3d8] sm:$0xff]
        %v1995 = vld [vmem:[#allocation6 + $0x3e0] sm:$0xff]
        %v1996 = vld [vmem:[#allocation6 + $0x3e8] sm:$0xff]
        %v1997 = vld [vmem:[#allocation6 + $0x3f0] sm:$0xff]
        %v1998 = vld [vmem:[#allocation6 + $0x3f8] sm:$0xff]
        %v1999 = vld [vmem:[#allocation6 + $0x400] sm:$0xff]
        %v2000 = vld [vmem:[#allocation6 + $0x408] sm:$0xff]
        %v2001 = vld [vmem:[#allocation6 + $0x410] sm:$0xff]
        %v2002 = vld [vmem:[#allocation6 + $0x418] sm:$0xff]
        %v2003 = vld [vmem:[#allocation6 + $0x420] sm:$0xff]
        %v2004 = vld [vmem:[#allocation6 + $0x428] sm:$0xff]
        %v2005 = vld [vmem:[#allocation6 + $0x430] sm:$0xff]
        %v2006 = vld [vmem:[#allocation6 + $0x438] sm:$0xff]
        %v2007 = vld [vmem:[#allocation6 + $0x440] sm:$0xff]
        %v2008 = vld [vmem:[#allocation6 + $0x448] sm:$0xff]
        %v2009 = vld [vmem:[#allocation6 + $0x450] sm:$0xff]
        %v2010 = vld [vmem:[#allocation6 + $0x458] sm:$0xff]
        %v2011 = vld [vmem:[#allocation6 + $0x460] sm:$0xff]
        %v2012 = vld [vmem:[#allocation6 + $0x468] sm:$0xff]
        %v2013 = vld [vmem:[#allocation6 + $0x470] sm:$0xff]
        %v2014 = vld [vmem:[#allocation6 + $0x478] sm:$0xff]
        %v2015 = vld [vmem:[%s4] sm:$0x1]
        %v2017 = vlaneseq
        %v2018 = vshrl.u32 %v2017, 7
        %v2019 = vsub.s32 0, %v2018
        %v2020 = vrot.slane %v2015, %v2019
        %2022 = vmatprep.subr.mxu0 0.0
        %2023 = vmatpush1.msra.mxu0 %v1886
        %2024 = vmatprep.subr.mxu0 0.0
        %2025 = vmatpush1.msra.mxu0 %v1885
        %2026 = vmatprep.subr.mxu0 0.0
        %2027 = vmatpush1.msra.mxu0 %v1884
        %2028 = vmatprep.subr.mxu0 0.0
        %2029 = vmatpush1.msra.mxu0 %v1883
        %2030 = vmatprep.subr.mxu0 0.0
        %2031 = vmatpush1.msra.mxu0 %v1882
        %2032 = vmatprep.subr.mxu0 0.0
        %2033 = vmatpush1.msra.mxu0 %v1881
        %2034 = vmatprep.subr.mxu0 0.0
        %2035 = vmatpush1.msra.mxu0 %v1880
        %2036 = vmatprep.subr.mxu0 0.0
        %2037 = vmatpush1.msra.mxu0 %v1879
        %2038 = vmatprep.subr.mxu0 0.0
        %2039 = vmatpush1.msra.mxu0 %v1878
        %2040 = vmatprep.subr.mxu0 0.0
        %2041 = vmatpush1.msra.mxu0 %v1877
        %2042 = vmatprep.subr.mxu0 0.0
        %2043 = vmatpush1.msra.mxu0 %v1876
        %2044 = vmatprep.subr.mxu0 0.0
        %2045 = vmatpush1.msra.mxu0 %v1875
        %2046 = vmatprep.subr.mxu0 0.0
        %2047 = vmatpush1.msra.mxu0 %v1874
        %2048 = vmatprep.subr.mxu0 0.0
        %2049 = vmatpush1.msra.mxu0 %v1873
        %2050 = vmatprep.subr.mxu0 0.0
        %2051 = vmatpush1.msra.mxu0 %v1872
        %2052 = vmatprep.subr.mxu0 0.0
        %2053 = vmatpush1.msra.mxu0 %v1871
        %2054 = vmatprep.subr.mxu0 0.0
        %2055 = vmatpush2.msra.mxu0 %v1902
        %2056 = vmatprep.subr.mxu0 0.0
        %2057 = vmatpush2.msra.mxu0 %v1901
        %2058 = vmatprep.subr.mxu0 0.0
        %2059 = vmatpush2.msra.mxu0 %v1900
        %2060 = vmatprep.subr.mxu0 0.0
        %2061 = vmatpush2.msra.mxu0 %v1899
        %2062 = vmatprep.subr.mxu0 0.0
        %2063 = vmatpush2.msra.mxu0 %v1898
        %2064 = vmatprep.subr.mxu0 0.0
        %2065 = vmatpush2.msra.mxu0 %v1897
        %2066 = vmatprep.subr.mxu0 0.0
        %2067 = vmatpush2.msra.mxu0 %v1896
        %2068 = vmatprep.subr.mxu0 0.0
        %2069 = vmatpush2.msra.mxu0 %v1895
        %2070 = vmatprep.subr.mxu0 0.0
        %2071 = vmatpush2.msra.mxu0 %v1894
        %2072 = vmatprep.subr.mxu0 0.0
        %2073 = vmatpush2.msra.mxu0 %v1893
        %2074 = vmatprep.subr.mxu0 0.0
        %2075 = vmatpush2.msra.mxu0 %v1892
        %2076 = vmatprep.subr.mxu0 0.0
        %2077 = vmatpush2.msra.mxu0 %v1891
        %2078 = vmatprep.subr.mxu0 0.0
        %2079 = vmatpush2.msra.mxu0 %v1890
        %2080 = vmatprep.subr.mxu0 0.0
        %2081 = vmatpush2.msra.mxu0 %v1889
        %2082 = vmatprep.subr.mxu0 0.0
        %2083 = vmatpush2.msra.mxu0 %v1888
        %2084 = vmatprep.subr.mxu0 0.0
        %2085 = vmatpush2.msra.mxu0 %v1887
        %2086 = vmatprep.mubr.f32.mxu0 %v1741
        %2087 = vmatmul.mubr.f32.gmra.mxu0 %v1725
        %v2088 = vpop.f32.mrf.mxu0
        %v2089 = vadd.f32 %v2020, %v2088
        %v2090 = vpop.f32.mrf.mxu0
        %2091 = vmatprep.mubr.f32.mxu0 %v1742
        %2092 = vmatmul.mubr.f32.gmra.mxu0 %v1726
        %v2093 = vpop.f32.mrf.mxu0
        %v2094 = vadd.f32 %v2020, %v2093
        %v2095 = vpop.f32.mrf.mxu0
        %2096 = vmatprep.mubr.f32.mxu0 %v1743
        %2097 = vmatmul.mubr.f32.gmra.mxu0 %v1727
        %v2098 = vpop.f32.mrf.mxu0
        %v2099 = vadd.f32 %v2020, %v2098
        %v2100 = vpop.f32.mrf.mxu0
        %2101 = vmatprep.mubr.f32.mxu0 %v1744
        %2102 = vmatmul.mubr.f32.gmra.mxu0 %v1728
        %v2103 = vpop.f32.mrf.mxu0
        %v2104 = vadd.f32 %v2020, %v2103
        %v2105 = vpop.f32.mrf.mxu0
        %2106 = vmatprep.mubr.f32.mxu0 %v1745
        %2107 = vmatmul.mubr.f32.gmra.mxu0 %v1729
        %v2108 = vpop.f32.mrf.mxu0
        %v2109 = vadd.f32 %v2020, %v2108
        %v2110 = vpop.f32.mrf.mxu0
        %2111 = vmatprep.mubr.f32.mxu0 %v1746
        %2112 = vmatmul.mubr.f32.gmra.mxu0 %v1730
        %v2113 = vpop.f32.mrf.mxu0
        %v2114 = vadd.f32 %v2020, %v2113
        %v2115 = vpop.f32.mrf.mxu0
        %2116 = vmatprep.mubr.f32.mxu0 %v1747
        %2117 = vmatmul.mubr.f32.gmra.mxu0 %v1731
        %v2118 = vpop.f32.mrf.mxu0
        %v2119 = vadd.f32 %v2020, %v2118
        %v2120 = vpop.f32.mrf.mxu0
        %2121 = vmatprep.mubr.f32.mxu0 %v1748
        %2122 = vmatmul.mubr.f32.gmra.mxu0 %v1732
        %v2123 = vpop.f32.mrf.mxu0
        %v2124 = vadd.f32 %v2020, %v2123
        %v2125 = vpop.f32.mrf.mxu0
        %2126 = vmatprep.mubr.f32.mxu0 %v1749
        %2127 = vmatmul.mubr.f32.gmra.mxu0 %v1733
        %v2128 = vpop.f32.mrf.mxu0
        %v2129 = vadd.f32 %v2020, %v2128
        %v2130 = vpop.f32.mrf.mxu0
        %2131 = vmatprep.mubr.f32.mxu0 %v1750
        %2132 = vmatmul.mubr.f32.gmra.mxu0 %v1734
        %v2133 = vpop.f32.mrf.mxu0
        %v2134 = vadd.f32 %v2020, %v2133
        %v2135 = vpop.f32.mrf.mxu0
        %2136 = vmatprep.mubr.f32.mxu0 %v1751
        %2137 = vmatmul.mubr.f32.gmra.mxu0 %v1735
        %v2138 = vpop.f32.mrf.mxu0
        %v2139 = vadd.f32 %v2020, %v2138
        %v2140 = vpop.f32.mrf.mxu0
        %2141 = vmatprep.mubr.f32.mxu0 %v1752
        %2142 = vmatmul.mubr.f32.gmra.mxu0 %v1736
        %v2143 = vpop.f32.mrf.mxu0
        %v2144 = vadd.f32 %v2020, %v2143
        %v2145 = vpop.f32.mrf.mxu0
        %2146 = vmatprep.mubr.f32.mxu0 %v1753
        %2147 = vmatmul.mubr.f32.gmra.mxu0 %v1737
        %v2148 = vpop.f32.mrf.mxu0
        %v2149 = vadd.f32 %v2020, %v2148
        %v2150 = vpop.f32.mrf.mxu0
        %2151 = vmatprep.mubr.f32.mxu0 %v1754
        %2152 = vmatmul.mubr.f32.gmra.mxu0 %v1738
        %v2153 = vpop.f32.mrf.mxu0
        %v2154 = vadd.f32 %v2020, %v2153
        %v2155 = vpop.f32.mrf.mxu0
        %2156 = vmatprep.mubr.f32.mxu0 %v1755
        %2157 = vmatmul.mubr.f32.gmra.mxu0 %v1739
        %v2158 = vpop.f32.mrf.mxu0
        %v2159 = vadd.f32 %v2020, %v2158
        %v2160 = vpop.f32.mrf.mxu0
        %2161 = vmatprep.mubr.f32.mxu0 %v1756
        %2162 = vmatmul.mubr.f32.gmra.mxu0 %v1740
        %v2163 = vpop.f32.mrf.mxu0
        %v2164 = vadd.f32 %v2020, %v2163
        %v2165 = vpop.f32.mrf.mxu0
        %2166 = vdwg.mxu0
        %2167 = vmatprep.subr.mxu0 0.0
        %2168 = vmatpush1.msra.mxu0 %v1918
        %2169 = vmatprep.subr.mxu0 0.0
        %2170 = vmatpush1.msra.mxu0 %v1917
        %2171 = vmatprep.subr.mxu0 0.0
        %2172 = vmatpush1.msra.mxu0 %v1916
        %2173 = vmatprep.subr.mxu0 0.0
        %2174 = vmatpush1.msra.mxu0 %v1915
        %2175 = vmatprep.subr.mxu0 0.0
        %2176 = vmatpush1.msra.mxu0 %v1914
        %2177 = vmatprep.subr.mxu0 0.0
        %2178 = vmatpush1.msra.mxu0 %v1913
        %2179 = vmatprep.subr.mxu0 0.0
        %2180 = vmatpush1.msra.mxu0 %v1912
        %2181 = vmatprep.subr.mxu0 0.0
        %2182 = vmatpush1.msra.mxu0 %v1911
        %2183 = vmatprep.subr.mxu0 0.0
        %2184 = vmatpush1.msra.mxu0 %v1910
        %2185 = vmatprep.subr.mxu0 0.0
        %2186 = vmatpush1.msra.mxu0 %v1909
        %2187 = vmatprep.subr.mxu0 0.0
        %2188 = vmatpush1.msra.mxu0 %v1908
        %2189 = vmatprep.subr.mxu0 0.0
        %2190 = vmatpush1.msra.mxu0 %v1907
        %2191 = vmatprep.subr.mxu0 0.0
        %2192 = vmatpush1.msra.mxu0 %v1906
        %2193 = vmatprep.subr.mxu0 0.0
        %2194 = vmatpush1.msra.mxu0 %v1905
        %2195 = vmatprep.subr.mxu0 0.0
        %2196 = vmatpush1.msra.mxu0 %v1904
        %2197 = vmatprep.subr.mxu0 0.0
        %2198 = vmatpush1.msra.mxu0 %v1903
        %2199 = vmatprep.subr.mxu0 0.0
        %2200 = vmatpush2.msra.mxu0 %v1934
        %2201 = vmatprep.subr.mxu0 0.0
        %2202 = vmatpush2.msra.mxu0 %v1933
        %2203 = vmatprep.subr.mxu0 0.0
        %2204 = vmatpush2.msra.mxu0 %v1932
        %2205 = vmatprep.subr.mxu0 0.0
        %2206 = vmatpush2.msra.mxu0 %v1931
        %2207 = vmatprep.subr.mxu0 0.0
        %2208 = vmatpush2.msra.mxu0 %v1930
        %2209 = vmatprep.subr.mxu0 0.0
        %2210 = vmatpush2.msra.mxu0 %v1929
        %2211 = vmatprep.subr.mxu0 0.0
        %2212 = vmatpush2.msra.mxu0 %v1928
        %2213 = vmatprep.subr.mxu0 0.0
        %2214 = vmatpush2.msra.mxu0 %v1927
        %2215 = vmatprep.subr.mxu0 0.0
        %2216 = vmatpush2.msra.mxu0 %v1926
        %2217 = vmatprep.subr.mxu0 0.0
        %2218 = vmatpush2.msra.mxu0 %v1925
        %2219 = vmatprep.subr.mxu0 0.0
        %2220 = vmatpush2.msra.mxu0 %v1924
        %2221 = vmatprep.subr.mxu0 0.0
        %2222 = vmatpush2.msra.mxu0 %v1923
        %2223 = vmatprep.subr.mxu0 0.0
        %2224 = vmatpush2.msra.mxu0 %v1922
        %2225 = vmatprep.subr.mxu0 0.0
        %2226 = vmatpush2.msra.mxu0 %v1921
        %2227 = vmatprep.subr.mxu0 0.0
        %2228 = vmatpush2.msra.mxu0 %v1920
        %2229 = vmatprep.subr.mxu0 0.0
        %2230 = vmatpush2.msra.mxu0 %v1919
        %2231 = vmatprep.mubr.f32.mxu0 %v1774
        %2232 = vmatmul.mubr.f32.gmra.mxu0 %v1757
        %v2233 = vpop.f32.mrf.mxu0
        %v2234 = vadd.f32 %v2089, %v2233
        %v2235 = vpop.f32.mrf.mxu0
        %2236 = vmatprep.mubr.f32.mxu0 %v1775
        %2237 = vmatmul.mubr.f32.gmra.mxu0 %v1758
        %v2238 = vpop.f32.mrf.mxu0
        %v2239 = vadd.f32 %v2094, %v2238
        %v2240 = vpop.f32.mrf.mxu0
        %2241 = vmatprep.mubr.f32.mxu0 %v1776
        %2242 = vmatmul.mubr.f32.gmra.mxu0 %v1759
        %v2243 = vpop.f32.mrf.mxu0
        %v2244 = vadd.f32 %v2099, %v2243
        %v2245 = vpop.f32.mrf.mxu0
        %2246 = vmatprep.mubr.f32.mxu0 %v1777
        %2247 = vmatmul.mubr.f32.gmra.mxu0 %v1760
        %v2248 = vpop.f32.mrf.mxu0
        %v2249 = vadd.f32 %v2104, %v2248
        %v2250 = vpop.f32.mrf.mxu0
        %2251 = vmatprep.mubr.f32.mxu0 %v1778
        %2252 = vmatmul.mubr.f32.gmra.mxu0 %v1761
        %v2253 = vpop.f32.mrf.mxu0
        %v2254 = vadd.f32 %v2109, %v2253
        %v2255 = vpop.f32.mrf.mxu0
        %2256 = vmatprep.mubr.f32.mxu0 %v1779
        %2257 = vmatmul.mubr.f32.gmra.mxu0 %v1762
        %v2258 = vpop.f32.mrf.mxu0
        %v2259 = vadd.f32 %v2114, %v2258
        %v2260 = vpop.f32.mrf.mxu0
        %2261 = vmatprep.mubr.f32.mxu0 %v1780
        %2262 = vmatmul.mubr.f32.gmra.mxu0 %v1763
        %v2263 = vpop.f32.mrf.mxu0
        %v2264 = vadd.f32 %v2119, %v2263
        %v2265 = vpop.f32.mrf.mxu0
        %2266 = vmatprep.mubr.f32.mxu0 %v1781
        %2267 = vmatmul.mubr.f32.gmra.mxu0 %v1764
        %v2268 = vpop.f32.mrf.mxu0
        %v2269 = vadd.f32 %v2124, %v2268
        %v2270 = vpop.f32.mrf.mxu0
        %2271 = vmatprep.mubr.f32.mxu0 %v1782
        %2272 = vmatmul.mubr.f32.gmra.mxu0 %v1765
        %v2273 = vpop.f32.mrf.mxu0
        %v2274 = vadd.f32 %v2129, %v2273
        %v2275 = vpop.f32.mrf.mxu0
        %2276 = vmatprep.mubr.f32.mxu0 %v1783
        %2277 = vmatmul.mubr.f32.gmra.mxu0 %v1766
        %v2278 = vpop.f32.mrf.mxu0
        %v2279 = vadd.f32 %v2134, %v2278
        %v2280 = vpop.f32.mrf.mxu0
        %2281 = vmatprep.mubr.f32.mxu0 %v1784
        %2282 = vmatmul.mubr.f32.gmra.mxu0 %v1767
        %v2283 = vpop.f32.mrf.mxu0
        %v2284 = vadd.f32 %v2139, %v2283
        %v2285 = vpop.f32.mrf.mxu0
        %2286 = vmatprep.mubr.f32.mxu0 %v1785
        %2287 = vmatmul.mubr.f32.gmra.mxu0 %v1768
        %v2288 = vpop.f32.mrf.mxu0
        %v2289 = vadd.f32 %v2144, %v2288
        %v2290 = vpop.f32.mrf.mxu0
        %2291 = vmatprep.mubr.f32.mxu0 %v1786
        %2292 = vmatmul.mubr.f32.gmra.mxu0 %v1769
        %v2293 = vpop.f32.mrf.mxu0
        %v2294 = vadd.f32 %v2149, %v2293
        %v2295 = vpop.f32.mrf.mxu0
        %2296 = vmatprep.mubr.f32.mxu0 %v1787
        %2297 = vmatmul.mubr.f32.gmra.mxu0 %v1770
        %v2298 = vpop.f32.mrf.mxu0
        %v2299 = vadd.f32 %v2154, %v2298
        %v2300 = vpop.f32.mrf.mxu0
        %2301 = vmatprep.mubr.f32.mxu0 %v1788
        %2302 = vmatmul.mubr.f32.gmra.mxu0 %v1771
        %v2303 = vpop.f32.mrf.mxu0
        %v2304 = vadd.f32 %v2159, %v2303
        %v2305 = vpop.f32.mrf.mxu0
        %2306 = vmatprep.mubr.f32.mxu0 %v1789
        %2307 = vmatmul.mubr.f32.gmra.mxu0 %v1772
        %v2308 = vpop.f32.mrf.mxu0
        %v2309 = vadd.f32 %v2164, %v2308
        %v2310 = vpop.f32.mrf.mxu0
        %2311 = vdwg.mxu0
        %2312 = vmatprep.subr.mxu0 0.0
        %2313 = vmatpush1.msra.mxu0 %v1950
        %2314 = vmatprep.subr.mxu0 0.0
        %2315 = vmatpush1.msra.mxu0 %v1949
        %2316 = vmatprep.subr.mxu0 0.0
        %2317 = vmatpush1.msra.mxu0 %v1948
        %2318 = vmatprep.subr.mxu0 0.0
        %2319 = vmatpush1.msra.mxu0 %v1947
        %2320 = vmatprep.subr.mxu0 0.0
        %2321 = vmatpush1.msra.mxu0 %v1946
        %2322 = vmatprep.subr.mxu0 0.0
        %2323 = vmatpush1.msra.mxu0 %v1945
        %2324 = vmatprep.subr.mxu0 0.0
        %2325 = vmatpush1.msra.mxu0 %v1944
        %2326 = vmatprep.subr.mxu0 0.0
        %2327 = vmatpush1.msra.mxu0 %v1943
        %2328 = vmatprep.subr.mxu0 0.0
        %2329 = vmatpush1.msra.mxu0 %v1942
        %2330 = vmatprep.subr.mxu0 0.0
        %2331 = vmatpush1.msra.mxu0 %v1941
        %2332 = vmatprep.subr.mxu0 0.0
        %2333 = vmatpush1.msra.mxu0 %v1940
        %2334 = vmatprep.subr.mxu0 0.0
        %2335 = vmatpush1.msra.mxu0 %v1939
        %2336 = vmatprep.subr.mxu0 0.0
        %2337 = vmatpush1.msra.mxu0 %v1938
        %2338 = vmatprep.subr.mxu0 0.0
        %2339 = vmatpush1.msra.mxu0 %v1937
        %2340 = vmatprep.subr.mxu0 0.0
        %2341 = vmatpush1.msra.mxu0 %v1936
        %2342 = vmatprep.subr.mxu0 0.0
        %2343 = vmatpush1.msra.mxu0 %v1935
        %2344 = vmatprep.subr.mxu0 0.0
        %2345 = vmatpush2.msra.mxu0 %v1966
        %2346 = vmatprep.subr.mxu0 0.0
        %2347 = vmatpush2.msra.mxu0 %v1965
        %2348 = vmatprep.subr.mxu0 0.0
        %2349 = vmatpush2.msra.mxu0 %v1964
        %2350 = vmatprep.subr.mxu0 0.0
        %2351 = vmatpush2.msra.mxu0 %v1963
        %2352 = vmatprep.subr.mxu0 0.0
        %2353 = vmatpush2.msra.mxu0 %v1962
        %2354 = vmatprep.subr.mxu0 0.0
        %2355 = vmatpush2.msra.mxu0 %v1961
        %2356 = vmatprep.subr.mxu0 0.0
        %2357 = vmatpush2.msra.mxu0 %v1960
        %2358 = vmatprep.subr.mxu0 0.0
        %2359 = vmatpush2.msra.mxu0 %v1959
        %2360 = vmatprep.subr.mxu0 0.0
        %2361 = vmatpush2.msra.mxu0 %v1958
        %2362 = vmatprep.subr.mxu0 0.0
        %2363 = vmatpush2.msra.mxu0 %v1957
        %2364 = vmatprep.subr.mxu0 0.0
        %2365 = vmatpush2.msra.mxu0 %v1956
        %2366 = vmatprep.subr.mxu0 0.0
        %2367 = vmatpush2.msra.mxu0 %v1955
        %2368 = vmatprep.subr.mxu0 0.0
        %2369 = vmatpush2.msra.mxu0 %v1954
        %2370 = vmatprep.subr.mxu0 0.0
        %2371 = vmatpush2.msra.mxu0 %v1953
        %2372 = vmatprep.subr.mxu0 0.0
        %2373 = vmatpush2.msra.mxu0 %v1952
        %2374 = vmatprep.subr.mxu0 0.0
        %2375 = vmatpush2.msra.mxu0 %v1951
        %2376 = vmatprep.mubr.f32.mxu0 %v1806
        %2377 = vmatmul.mubr.f32.gmra.mxu0 %v1790
        %v2378 = vpop.f32.mrf.mxu0
        %v2379 = vadd.f32 %v2234, %v2378
        %v2380 = vpop.f32.mrf.mxu0
        %2381 = vmatprep.mubr.f32.mxu0 %v1807
        %2382 = vmatmul.mubr.f32.gmra.mxu0 %v1791
        %v2383 = vpop.f32.mrf.mxu0
        %v2384 = vadd.f32 %v2239, %v2383
        %v2385 = vpop.f32.mrf.mxu0
        %2386 = vmatprep.mubr.f32.mxu0 %v1808
        %2387 = vmatmul.mubr.f32.gmra.mxu0 %v1792
        %v2388 = vpop.f32.mrf.mxu0
        %v2389 = vadd.f32 %v2244, %v2388
        %v2390 = vpop.f32.mrf.mxu0
        %2391 = vmatprep.mubr.f32.mxu0 %v1809
        %2392 = vmatmul.mubr.f32.gmra.mxu0 %v1793
        %v2393 = vpop.f32.mrf.mxu0
        %v2394 = vadd.f32 %v2249, %v2393
        %v2395 = vpop.f32.mrf.mxu0
        %2396 = vmatprep.mubr.f32.mxu0 %v1810
        %2397 = vmatmul.mubr.f32.gmra.mxu0 %v1794
        %v2398 = vpop.f32.mrf.mxu0
        %v2399 = vadd.f32 %v2254, %v2398
        %v2400 = vpop.f32.mrf.mxu0
        %2401 = vmatprep.mubr.f32.mxu0 %v1811
        %2402 = vmatmul.mubr.f32.gmra.mxu0 %v1795
        %v2403 = vpop.f32.mrf.mxu0
        %v2404 = vadd.f32 %v2259, %v2403
        %v2405 = vpop.f32.mrf.mxu0
        %2406 = vmatprep.mubr.f32.mxu0 %v1812
        %2407 = vmatmul.mubr.f32.gmra.mxu0 %v1796
        %v2408 = vpop.f32.mrf.mxu0
        %v2409 = vadd.f32 %v2264, %v2408
        %v2410 = vpop.f32.mrf.mxu0
        %2411 = vmatprep.mubr.f32.mxu0 %v1813
        %2412 = vmatmul.mubr.f32.gmra.mxu0 %v1797
        %v2413 = vpop.f32.mrf.mxu0
        %v2414 = vadd.f32 %v2269, %v2413
        %v2415 = vpop.f32.mrf.mxu0
        %2416 = vmatprep.mubr.f32.mxu0 %v1814
        %2417 = vmatmul.mubr.f32.gmra.mxu0 %v1798
        %v2418 = vpop.f32.mrf.mxu0
        %v2419 = vadd.f32 %v2274, %v2418
        %v2420 = vpop.f32.mrf.mxu0
        %2421 = vmatprep.mubr.f32.mxu0 %v1815
        %2422 = vmatmul.mubr.f32.gmra.mxu0 %v1799
        %v2423 = vpop.f32.mrf.mxu0
        %v2424 = vadd.f32 %v2279, %v2423
        %v2425 = vpop.f32.mrf.mxu0
        %2426 = vmatprep.mubr.f32.mxu0 %v1816
        %2427 = vmatmul.mubr.f32.gmra.mxu0 %v1800
        %v2428 = vpop.f32.mrf.mxu0
        %v2429 = vadd.f32 %v2284, %v2428
        %v2430 = vpop.f32.mrf.mxu0
        %2431 = vmatprep.mubr.f32.mxu0 %v1817
        %2432 = vmatmul.mubr.f32.gmra.mxu0 %v1801
        %v2433 = vpop.f32.mrf.mxu0
        %v2434 = vadd.f32 %v2289, %v2433
        %v2435 = vpop.f32.mrf.mxu0
        %2436 = vmatprep.mubr.f32.mxu0 %v1818
        %2437 = vmatmul.mubr.f32.gmra.mxu0 %v1802
        %v2438 = vpop.f32.mrf.mxu0
        %v2439 = vadd.f32 %v2294, %v2438
        %v2440 = vpop.f32.mrf.mxu0
        %2441 = vmatprep.mubr.f32.mxu0 %v1819
        %2442 = vmatmul.mubr.f32.gmra.mxu0 %v1803
        %v2443 = vpop.f32.mrf.mxu0
        %v2444 = vadd.f32 %v2299, %v2443
        %v2445 = vpop.f32.mrf.mxu0
        %2446 = vmatprep.mubr.f32.mxu0 %v1820
        %2447 = vmatmul.mubr.f32.gmra.mxu0 %v1804
        %v2448 = vpop.f32.mrf.mxu0
        %v2449 = vadd.f32 %v2304, %v2448
        %v2450 = vpop.f32.mrf.mxu0
        %2451 = vmatprep.mubr.f32.mxu0 %v1821
        %2452 = vmatmul.mubr.f32.gmra.mxu0 %v1805
        %v2453 = vpop.f32.mrf.mxu0
        %v2454 = vadd.f32 %v2309, %v2453
        %v2455 = vpop.f32.mrf.mxu0
        %2456 = vdwg.mxu0
        %2457 = vmatprep.subr.mxu0 0.0
        %2458 = vmatpush1.msra.mxu0 %v1982
        %2459 = vmatprep.subr.mxu0 0.0
        %2460 = vmatpush1.msra.mxu0 %v1981
        %2461 = vmatprep.subr.mxu0 0.0
        %2462 = vmatpush1.msra.mxu0 %v1980
        %2463 = vmatprep.subr.mxu0 0.0
        %2464 = vmatpush1.msra.mxu0 %v1979
        %2465 = vmatprep.subr.mxu0 0.0
        %2466 = vmatpush1.msra.mxu0 %v1978
        %2467 = vmatprep.subr.mxu0 0.0
        %2468 = vmatpush1.msra.mxu0 %v1977
        %2469 = vmatprep.subr.mxu0 0.0
        %2470 = vmatpush1.msra.mxu0 %v1976
        %2471 = vmatprep.subr.mxu0 0.0
        %2472 = vmatpush1.msra.mxu0 %v1975
        %2473 = vmatprep.subr.mxu0 0.0
        %2474 = vmatpush1.msra.mxu0 %v1974
        %2475 = vmatprep.subr.mxu0 0.0
        %2476 = vmatpush1.msra.mxu0 %v1973
        %2477 = vmatprep.subr.mxu0 0.0
        %2478 = vmatpush1.msra.mxu0 %v1972
        %2479 = vmatprep.subr.mxu0 0.0
        %2480 = vmatpush1.msra.mxu0 %v1971
        %2481 = vmatprep.subr.mxu0 0.0
        %2482 = vmatpush1.msra.mxu0 %v1970
        %2483 = vmatprep.subr.mxu0 0.0
        %2484 = vmatpush1.msra.mxu0 %v1969
        %2485 = vmatprep.subr.mxu0 0.0
        %2486 = vmatpush1.msra.mxu0 %v1968
        %2487 = vmatprep.subr.mxu0 0.0
        %2488 = vmatpush1.msra.mxu0 %v1967
        %2489 = vmatprep.subr.mxu0 0.0
        %2490 = vmatpush2.msra.mxu0 %v1998
        %2491 = vmatprep.subr.mxu0 0.0
        %2492 = vmatpush2.msra.mxu0 %v1997
        %2493 = vmatprep.subr.mxu0 0.0
        %2494 = vmatpush2.msra.mxu0 %v1996
        %2495 = vmatprep.subr.mxu0 0.0
        %2496 = vmatpush2.msra.mxu0 %v1995
        %2497 = vmatprep.subr.mxu0 0.0
        %2498 = vmatpush2.msra.mxu0 %v1994
        %2499 = vmatprep.subr.mxu0 0.0
        %2500 = vmatpush2.msra.mxu0 %v1993
        %2501 = vmatprep.subr.mxu0 0.0
        %2502 = vmatpush2.msra.mxu0 %v1992
        %2503 = vmatprep.subr.mxu0 0.0
        %2504 = vmatpush2.msra.mxu0 %v1991
        %2505 = vmatprep.subr.mxu0 0.0
        %2506 = vmatpush2.msra.mxu0 %v1990
        %2507 = vmatprep.subr.mxu0 0.0
        %2508 = vmatpush2.msra.mxu0 %v1989
        %2509 = vmatprep.subr.mxu0 0.0
        %2510 = vmatpush2.msra.mxu0 %v1988
        %2511 = vmatprep.subr.mxu0 0.0
        %2512 = vmatpush2.msra.mxu0 %v1987
        %2513 = vmatprep.subr.mxu0 0.0
        %2514 = vmatpush2.msra.mxu0 %v1986
        %2515 = vmatprep.subr.mxu0 0.0
        %2516 = vmatpush2.msra.mxu0 %v1985
        %2517 = vmatprep.subr.mxu0 0.0
        %2518 = vmatpush2.msra.mxu0 %v1984
        %2519 = vmatprep.subr.mxu0 0.0
        %2520 = vmatpush2.msra.mxu0 %v1983
        %2521 = vmatprep.mubr.f32.mxu0 %v1839
        %2522 = vmatmul.mubr.f32.gmra.mxu0 %v1823
        %v2523 = vpop.f32.mrf.mxu0
        %v2524 = vadd.f32 %v2379, %v2523
        %v2525 = vpop.f32.mrf.mxu0
        %2526 = vmatprep.mubr.f32.mxu0 %v1840
        %2527 = vmatmul.mubr.f32.gmra.mxu0 %v1824
        %v2528 = vpop.f32.mrf.mxu0
        %v2529 = vadd.f32 %v2384, %v2528
        %v2530 = vpop.f32.mrf.mxu0
        %2531 = vmatprep.mubr.f32.mxu0 %v1841
        %2532 = vmatmul.mubr.f32.gmra.mxu0 %v1825
        %v2533 = vpop.f32.mrf.mxu0
        %v2534 = vadd.f32 %v2389, %v2533
        %v2535 = vpop.f32.mrf.mxu0
        %2536 = vmatprep.mubr.f32.mxu0 %v1842
        %2537 = vmatmul.mubr.f32.gmra.mxu0 %v1826
        %v2538 = vpop.f32.mrf.mxu0
        %v2539 = vadd.f32 %v2394, %v2538
        %v2540 = vpop.f32.mrf.mxu0
        %2541 = vmatprep.mubr.f32.mxu0 %v1843
        %2542 = vmatmul.mubr.f32.gmra.mxu0 %v1827
        %v2543 = vpop.f32.mrf.mxu0
        %v2544 = vadd.f32 %v2399, %v2543
        %v2545 = vpop.f32.mrf.mxu0
        %2546 = vmatprep.mubr.f32.mxu0 %v1844
        %2547 = vmatmul.mubr.f32.gmra.mxu0 %v1828
        %v2548 = vpop.f32.mrf.mxu0
        %v2549 = vadd.f32 %v2404, %v2548
        %v2550 = vpop.f32.mrf.mxu0
        %2551 = vmatprep.mubr.f32.mxu0 %v1845
        %2552 = vmatmul.mubr.f32.gmra.mxu0 %v1829
        %v2553 = vpop.f32.mrf.mxu0
        %v2554 = vadd.f32 %v2409, %v2553
        %v2555 = vpop.f32.mrf.mxu0
        %2556 = vmatprep.mubr.f32.mxu0 %v1846
        %2557 = vmatmul.mubr.f32.gmra.mxu0 %v1830
        %v2558 = vpop.f32.mrf.mxu0
        %v2559 = vadd.f32 %v2414, %v2558
        %v2560 = vpop.f32.mrf.mxu0
        %2561 = vmatprep.mubr.f32.mxu0 %v1847
        %2562 = vmatmul.mubr.f32.gmra.mxu0 %v1831
        %v2563 = vpop.f32.mrf.mxu0
        %v2564 = vadd.f32 %v2419, %v2563
        %v2565 = vpop.f32.mrf.mxu0
        %2566 = vmatprep.mubr.f32.mxu0 %v1848
        %2567 = vmatmul.mubr.f32.gmra.mxu0 %v1832
        %v2568 = vpop.f32.mrf.mxu0
        %v2569 = vadd.f32 %v2424, %v2568
        %v2570 = vpop.f32.mrf.mxu0
        %2571 = vmatprep.mubr.f32.mxu0 %v1849
        %2572 = vmatmul.mubr.f32.gmra.mxu0 %v1833
        %v2573 = vpop.f32.mrf.mxu0
        %v2574 = vadd.f32 %v2429, %v2573
        %v2575 = vpop.f32.mrf.mxu0
        %2576 = vmatprep.mubr.f32.mxu0 %v1850
        %2577 = vmatmul.mubr.f32.gmra.mxu0 %v1834
        %v2578 = vpop.f32.mrf.mxu0
        %v2579 = vadd.f32 %v2434, %v2578
        %v2580 = vpop.f32.mrf.mxu0
        %2581 = vmatprep.mubr.f32.mxu0 %v1851
        %2582 = vmatmul.mubr.f32.gmra.mxu0 %v1835
        %v2583 = vpop.f32.mrf.mxu0
        %v2584 = vadd.f32 %v2439, %v2583
        %v2585 = vpop.f32.mrf.mxu0
        %2586 = vmatprep.mubr.f32.mxu0 %v1852
        %2587 = vmatmul.mubr.f32.gmra.mxu0 %v1836
        %v2588 = vpop.f32.mrf.mxu0
        %v2589 = vadd.f32 %v2444, %v2588
        %v2590 = vpop.f32.mrf.mxu0
        %2591 = vmatprep.mubr.f32.mxu0 %v1853
        %2592 = vmatmul.mubr.f32.gmra.mxu0 %v1837
        %v2593 = vpop.f32.mrf.mxu0
        %v2594 = vadd.f32 %v2449, %v2593
        %v2595 = vpop.f32.mrf.mxu0
        %2596 = vmatprep.mubr.f32.mxu0 %v1854
        %2597 = vmatmul.mubr.f32.gmra.mxu0 %v1838
        %v2598 = vpop.f32.mrf.mxu0
        %v2599 = vadd.f32 %v2454, %v2598
        %v2600 = vpop.f32.mrf.mxu0
        %2601 = vdwg.mxu0
        %2602 = vmatprep.subr.mxu0 0.0
        %2603 = vmatpush1.msra.mxu0 %v2014
        %2604 = vmatprep.subr.mxu0 0.0
        %2605 = vmatpush1.msra.mxu0 %v2013
        %2606 = vmatprep.subr.mxu0 0.0
        %2607 = vmatpush1.msra.mxu0 %v2012
        %2608 = vmatprep.subr.mxu0 0.0
        %2609 = vmatpush1.msra.mxu0 %v2011
        %2610 = vmatprep.subr.mxu0 0.0
        %2611 = vmatpush1.msra.mxu0 %v2010
        %2612 = vmatprep.subr.mxu0 0.0
        %2613 = vmatpush1.msra.mxu0 %v2009
        %2614 = vmatprep.subr.mxu0 0.0
        %2615 = vmatpush1.msra.mxu0 %v2008
        %2616 = vmatprep.subr.mxu0 0.0
        %2617 = vmatpush1.msra.mxu0 %v2007
        %2618 = vmatprep.subr.mxu0 0.0
        %2619 = vmatpush1.msra.mxu0 %v2006
        %2620 = vmatprep.subr.mxu0 0.0
        %2621 = vmatpush1.msra.mxu0 %v2005
        %2622 = vmatprep.subr.mxu0 0.0
        %2623 = vmatpush1.msra.mxu0 %v2004
        %2624 = vmatprep.subr.mxu0 0.0
        %2625 = vmatpush1.msra.mxu0 %v2003
        %2626 = vmatprep.subr.mxu0 0.0
        %2627 = vmatpush1.msra.mxu0 %v2002
        %2628 = vmatprep.subr.mxu0 0.0
        %2629 = vmatpush1.msra.mxu0 %v2001
        %2630 = vmatprep.subr.mxu0 0.0
        %2631 = vmatpush1.msra.mxu0 %v2000
        %2632 = vmatprep.subr.mxu0 0.0
        %2633 = vmatpush1.msra.mxu0 %v1999
        %2634 = vmatprep.subr.mxu0 0.0
        %2635 = vmatpush2.msra.mxu0 0.0
        %2636 = vmatprep.subr.mxu0 0.0
        %2637 = vmatpush2.msra.mxu0 0.0
        %2638 = vmatprep.subr.mxu0 0.0
        %2639 = vmatpush2.msra.mxu0 0.0
        %2640 = vmatprep.subr.mxu0 0.0
        %2641 = vmatpush2.msra.mxu0 0.0
        %2642 = vmatprep.subr.mxu0 0.0
        %2643 = vmatpush2.msra.mxu0 0.0
        %2644 = vmatprep.subr.mxu0 0.0
        %2645 = vmatpush2.msra.mxu0 0.0
        %2646 = vmatprep.subr.mxu0 0.0
        %2647 = vmatpush2.msra.mxu0 0.0
        %2648 = vmatprep.subr.mxu0 0.0
        %2649 = vmatpush2.msra.mxu0 0.0
        %2650 = vmatprep.subr.mxu0 0.0
        %2651 = vmatpush2.msra.mxu0 0.0
        %2652 = vmatprep.subr.mxu0 0.0
        %2653 = vmatpush2.msra.mxu0 0.0
        %2654 = vmatprep.subr.mxu0 0.0
        %2655 = vmatpush2.msra.mxu0 0.0
        %2656 = vmatprep.subr.mxu0 0.0
        %2657 = vmatpush2.msra.mxu0 0.0
        %2658 = vmatprep.subr.mxu0 0.0
        %2659 = vmatpush2.msra.mxu0 0.0
        %2660 = vmatprep.subr.mxu0 0.0
        %2661 = vmatpush2.msra.mxu0 0.0
        %2662 = vmatprep.subr.mxu0 0.0
        %2663 = vmatpush2.msra.mxu0 0.0
        %2664 = vmatprep.subr.mxu0 0.0
        %2665 = vmatpush2.msra.mxu0 0.0
        %2666 = vmatprep.mubr.f32.mxu0 0.0
        %2667 = vmatmul.mubr.f32.gmra.mxu0 %v1855
        %v2668 = vpop.f32.mrf.mxu0
        %v2669 = vadd.f32 %v2524, %v2668
        %v2670 = vpop.f32.mrf.mxu0
        %2671 = vmatprep.mubr.f32.mxu0 0.0
        %2672 = vmatmul.mubr.f32.gmra.mxu0 %v1856
        %v2673 = vpop.f32.mrf.mxu0
        %v2674 = vadd.f32 %v2529, %v2673
        %v2675 = vpop.f32.mrf.mxu0
        %2676 = vmatprep.mubr.f32.mxu0 0.0
        %2677 = vmatmul.mubr.f32.gmra.mxu0 %v1857
        %v2678 = vpop.f32.mrf.mxu0
        %v2679 = vadd.f32 %v2534, %v2678
        %v2680 = vpop.f32.mrf.mxu0
        %2681 = vmatprep.mubr.f32.mxu0 0.0
        %2682 = vmatmul.mubr.f32.gmra.mxu0 %v1858
        %v2683 = vpop.f32.mrf.mxu0
        %v2684 = vadd.f32 %v2539, %v2683
        %v2685 = vpop.f32.mrf.mxu0
        %2686 = vmatprep.mubr.f32.mxu0 0.0
        %2687 = vmatmul.mubr.f32.gmra.mxu0 %v1859
        %v2688 = vpop.f32.mrf.mxu0
        %v2689 = vadd.f32 %v2544, %v2688
        %v2690 = vpop.f32.mrf.mxu0
        %2691 = vmatprep.mubr.f32.mxu0 0.0
        %2692 = vmatmul.mubr.f32.gmra.mxu0 %v1860
        %v2693 = vpop.f32.mrf.mxu0
        %v2694 = vadd.f32 %v2549, %v2693
        %v2695 = vpop.f32.mrf.mxu0
        %2696 = vmatprep.mubr.f32.mxu0 0.0
        %2697 = vmatmul.mubr.f32.gmra.mxu0 %v1861
        %v2698 = vpop.f32.mrf.mxu0
        %v2699 = vadd.f32 %v2554, %v2698
        %v2700 = vpop.f32.mrf.mxu0
        %2701 = vmatprep.mubr.f32.mxu0 0.0
        %2702 = vmatmul.mubr.f32.gmra.mxu0 %v1862
        %v2703 = vpop.f32.mrf.mxu0
        %v2704 = vadd.f32 %v2559, %v2703
        %v2705 = vpop.f32.mrf.mxu0
        %2706 = vmatprep.mubr.f32.mxu0 0.0
        %2707 = vmatmul.mubr.f32.gmra.mxu0 %v1863
        %v2708 = vpop.f32.mrf.mxu0
        %v2709 = vadd.f32 %v2564, %v2708
        %v2710 = vpop.f32.mrf.mxu0
        %2711 = vmatprep.mubr.f32.mxu0 0.0
        %2712 = vmatmul.mubr.f32.gmra.mxu0 %v1864
        %v2713 = vpop.f32.mrf.mxu0
        %v2714 = vadd.f32 %v2569, %v2713
        %v2715 = vpop.f32.mrf.mxu0
        %2716 = vmatprep.mubr.f32.mxu0 0.0
        %2717 = vmatmul.mubr.f32.gmra.mxu0 %v1865
        %v2718 = vpop.f32.mrf.mxu0
        %v2719 = vadd.f32 %v2574, %v2718
        %v2720 = vpop.f32.mrf.mxu0
        %2721 = vmatprep.mubr.f32.mxu0 0.0
        %2722 = vmatmul.mubr.f32.gmra.mxu0 %v1866
        %v2723 = vpop.f32.mrf.mxu0
        %v2724 = vadd.f32 %v2579, %v2723
        %v2725 = vpop.f32.mrf.mxu0
        %2726 = vmatprep.mubr.f32.mxu0 0.0
        %2727 = vmatmul.mubr.f32.gmra.mxu0 %v1867
        %v2728 = vpop.f32.mrf.mxu0
        %v2729 = vadd.f32 %v2584, %v2728
        %v2730 = vpop.f32.mrf.mxu0
        %2731 = vmatprep.mubr.f32.mxu0 0.0
        %2732 = vmatmul.mubr.f32.gmra.mxu0 %v1868
        %v2733 = vpop.f32.mrf.mxu0
        %v2734 = vadd.f32 %v2589, %v2733
        %v2735 = vpop.f32.mrf.mxu0
        %2736 = vmatprep.mubr.f32.mxu0 0.0
        %2737 = vmatmul.mubr.f32.gmra.mxu0 %v1869
        %v2738 = vpop.f32.mrf.mxu0
        %v2739 = vadd.f32 %v2594, %v2738
        %v2740 = vpop.f32.mrf.mxu0
        %2741 = vmatprep.mubr.f32.mxu0 0.0
        %2742 = vmatmul.mubr.f32.gmra.mxu0 %v1870
        %v2743 = vpop.f32.mrf.mxu0
        %v2744 = vadd.f32 %v2599, %v2743
        %v2745 = vpop.f32.mrf.mxu0
        %2746 = vdwg.mxu0
        %s2747 = scalar_lea.vmem [#allocation2], 48
        %v2748 = vld [vmem:[%s2747 + $0x1] sm:$0xff]
        %v2749 = vld [vmem:[%s2747 + $0x9] sm:$0xff]
        %v2750 = vld [vmem:[%s2747 + $0x19] sm:$0xff]
        %v2751 = vld [vmem:[%s2747 + $0x21] sm:$0xff]
        %v2752 = vld [vmem:[%s2747 + $0x31] sm:$0xff]
        %v2753 = vld [vmem:[%s2747 + $0x39] sm:$0xff]
        %v2754 = vld [vmem:[%s2747 + $0x49] sm:$0xff]
        %v2755 = vld [vmem:[%s2747 + $0x51] sm:$0xff]
        %v2756 = vld [vmem:[%s2747 + $0x61] sm:$0xff]
        %v2757 = vld [vmem:[%s2747 + $0x69] sm:$0xff]
        %v2758 = vld [vmem:[%s2747 + $0x79] sm:$0xff]
        %v2759 = vld [vmem:[%s2747 + $0x81] sm:$0xff]
        %v2760 = vld [vmem:[%s2747 + $0x91] sm:$0xff]
        %v2761 = vld [vmem:[%s2747 + $0x99] sm:$0xff]
        %v2762 = vld [vmem:[%s2747 + $0xa9] sm:$0xff]
        %v2763 = vld [vmem:[%s2747 + $0xb1] sm:$0xff]
        %v2764 = vadd.f32 %v2748, %v2669
        %v2765 = vadd.f32 %v2749, %v2674
        %v2766 = vadd.f32 %v2750, %v2679
        %v2767 = vadd.f32 %v2751, %v2684
        %v2768 = vadd.f32 %v2752, %v2689
        %v2769 = vadd.f32 %v2753, %v2694
        %v2770 = vadd.f32 %v2754, %v2699
        %v2771 = vadd.f32 %v2755, %v2704
        %v2772 = vadd.f32 %v2756, %v2709
        %v2773 = vadd.f32 %v2757, %v2714
        %v2774 = vadd.f32 %v2758, %v2719
        %v2775 = vadd.f32 %v2759, %v2724
        %v2776 = vadd.f32 %v2760, %v2729
        %v2777 = vadd.f32 %v2761, %v2734
        %v2778 = vadd.f32 %v2762, %v2739
        %v2779 = vadd.f32 %v2763, %v2744
        %v2780 = vmax.f32 %v2764, 0.0
        %v2781 = vmax.f32 %v2765, 0.0
        %v2782 = vmax.f32 %v2766, 0.0
        %v2783 = vmax.f32 %v2767, 0.0
        %v2784 = vmax.f32 %v2768, 0.0
        %v2785 = vmax.f32 %v2769, 0.0
        %v2786 = vmax.f32 %v2770, 0.0
        %v2787 = vmax.f32 %v2771, 0.0
        %v2788 = vmax.f32 %v2772, 0.0
        %v2789 = vmax.f32 %v2773, 0.0
        %v2790 = vmax.f32 %v2774, 0.0
        %v2791 = vmax.f32 %v2775, 0.0
        %v2792 = vmax.f32 %v2776, 0.0
        %v2793 = vmax.f32 %v2777, 0.0
        %v2794 = vmax.f32 %v2778, 0.0
        %v2795 = vmax.f32 %v2779, 0.0
        %2796 = vst [vmem:[%s217] sm:$0xff] %v2780
        %2797 = vst [vmem:[%s217 + $0x8] sm:$0xff] %v2781
        %2798 = vst [vmem:[%s217 + $0x10] sm:$0xff] %v2782
        %2799 = vst [vmem:[%s217 + $0x18] sm:$0xff] %v2783
        %2800 = vst [vmem:[%s217 + $0x20] sm:$0xff] %v2784
        %2801 = vst [vmem:[%s217 + $0x28] sm:$0xff] %v2785
        %2802 = vst [vmem:[%s217 + $0x30] sm:$0xff] %v2786
        %2803 = vst [vmem:[%s217 + $0x38] sm:$0xff] %v2787
        %2804 = vst [vmem:[%s217 + $0x40] sm:$0xff] %v2788
        %2805 = vst [vmem:[%s217 + $0x48] sm:$0xff] %v2789
        %2806 = vst [vmem:[%s217 + $0x50] sm:$0xff] %v2790
        %2807 = vst [vmem:[%s217 + $0x58] sm:$0xff] %v2791
        %2808 = vst [vmem:[%s217 + $0x60] sm:$0xff] %v2792
        %2809 = vst [vmem:[%s217 + $0x68] sm:$0xff] %v2793
        %2810 = vst [vmem:[%s217 + $0x70] sm:$0xff] %v2794
        %2811 = vst [vmem:[%s217 + $0x78] sm:$0xff] %v2795
        %s2812 = smul.u32 8, %s22
        %p2813 = scmp.lt.s32.totalorder %s21, 1
        %s2814 = scalar_select %p2813, %s21, 1
        %p2815 = scmp.lt.s32.totalorder %s2812, 15
        %s2816 = scalar_select %p2815, %s2812, 15
        %s2817 = smul.addr %s2816, 2
        %s2818 = smul.addr %s2814, 32
        %s2819 = sadd.s32 %s2817, %s2818
        %s2820 = smul.addr %s2819, 8
        %s2821 = scalar_lea.vmem %s5, %s2820
        // Predicated region
        $region78: #{residual_block_nchw.1} parent=35 // pred_check
          %p2822 = pneg %p133
        $region79: #{residual_block_nchw.1} parent=35 // pred_check_branch
          %2824 = sbr.rel (%p2822) target = $region81
        $region80: #{residual_block_nchw.1} parent=35 // pred_region
          %s2825 = smul.u32 8, %s22
        $region81: #{residual_block_nchw.1} parent=35 // pred_fallthru
          _
      $region36: #{residual_block_nchw.1} parent=5 // pred_fallthru
        _
      %p2826 = scmp.le.s32.totalorder 2, %s12
      // Predicated region
      $region82: #{residual_block_nchw.1} parent=5 // pred_check
        %p2827 = pneg %p2826
      $region83: #{residual_block_nchw.1} parent=5 // pred_check_branch
        %2829 = sbr.rel (%p2827) target = $region85
      $region84: #{residual_block_nchw.1} parent=5 // pred_region
        %s2830 = ssub.s32 %s12, 2
        // Predicated region
        $region86: #{residual_block_nchw.1} parent=84 // pred_check
          %p2831 = pneg %p139
        $region87: #{residual_block_nchw.1} parent=84 // pred_check_branch
          %2833 = sbr.rel (%p2831) target = $region89
        $region88: #{residual_block_nchw.1} parent=84 // pred_region
          %s2834 = smul.u32 8, %s24
          %p2835 = scmp.lt.s32.totalorder %s23, 1
          %s2836 = scalar_select %p2835, %s23, 1
          %p2837 = scmp.lt.s32.totalorder %s2834, 15
          %s2838 = scalar_select %p2837, %s2834, 15
          %s2839 = smul.addr %s2838, 2
          %s2840 = smul.addr %s2836, 32
          %s2841 = sadd.s32 %s2839, %s2840
          %s2842 = smul.addr %s2841, 8
          %s2843 = scalar_lea.vmem %s5, %s2842
        $region89: #{residual_block_nchw.1} parent=84 // pred_fallthru
          _
      $region85: #{residual_block_nchw.1} parent=5 // pred_fallthru
        _
    $region6: #{residual_block_nchw.1} parent=1 // loop_footer
      %s16 = sadd.s32 1, %s12
    $region7: #{residual_block_nchw.1} parent=1 // loop_footer_branch
      %11 = sbr.rel target = $region3
    $region8: #{residual_block_nchw.1} parent=1 // loop_exit
      _
    %2844 = vsyncpa [#allocation7], 1
    %s2845 = scalar_lea.sflag [#allocation7], 1
    %2846 = vsyncpa %s2845, 1
  %2847 = vsyncmov [#allocation5]
  %s2848 = vpop.sfrf %2847
  %p2849 = scmp.eq.s32.totalorder %s2848, 0
  %p2850 = pneg %p2849
  %2852 = shalt.err (%p2850)

</llo_original>
